<compile_context>
chip_gen: v5e
topology: v5e:2x2
jax: 0.10.0
libtpu: 0.0.40
codegen_flags: <defaults>
</compile_context>

<pallas_src>
import functools

import jax
import jax.numpy as jnp
from jax.experimental import pallas as pl
from jax.experimental.pallas import tpu as pltpu

BN_EPS = 1e-5


# ---------------------------------------------------------------------------
# Pass 1 kernels: per-feature sum / sum-of-squares of h = x @ W1, accumulated
# over the per-split tile axis (program_id(1)); optionally also cache h.
# ---------------------------------------------------------------------------
def bn_stats_kernel(x_ref, w1_ref, sum_ref, sumsq_ref):
    @pl.when(pl.program_id(1) == 0)
    def _():
        sum_ref[...] = jnp.zeros_like(sum_ref)
        sumsq_ref[...] = jnp.zeros_like(sumsq_ref)

    # In-kernel bf16 cast of x rides under MXU slack; f32 accumulation on MXU.
    h = jnp.dot(x_ref[...].astype(jnp.bfloat16), w1_ref[...],
                preferred_element_type=jnp.float32)
    sum_ref[...] += jnp.sum(h, axis=0, keepdims=True)[None]
    sumsq_ref[...] += jnp.sum(h * h, axis=0, keepdims=True)[None]


def bn_stats_cache_kernel(x_ref, w1_ref, h_ref, sum_ref, sumsq_ref):
    @pl.when(pl.program_id(1) == 0)
    def _():
        sum_ref[...] = jnp.zeros_like(sum_ref)
        sumsq_ref[...] = jnp.zeros_like(sumsq_ref)

    h = jnp.dot(x_ref[...].astype(jnp.bfloat16), w1_ref[...],
                preferred_element_type=jnp.float32)
    h_ref[...] = h                       # cache h (f32) for pass 2
    sum_ref[...] += jnp.sum(h, axis=0, keepdims=True)[None]
    sumsq_ref[...] += jnp.sum(h * h, axis=0, keepdims=True)[None]


# ---------------------------------------------------------------------------
# Pass 2 kernels: folded BN (scale/shift) + ReLU + second Linear (+ bias).
# ---------------------------------------------------------------------------
def mlp_apply_recompute_kernel(x_ref, w1_ref, scale_ref, shift_ref, w2_ref,
                               b2_ref, o_ref):
    h = jnp.dot(x_ref[...].astype(jnp.bfloat16), w1_ref[...],
                preferred_element_type=jnp.float32)
    a = jnp.maximum(h * scale_ref[...] + shift_ref[...], 0.0)
    y = jnp.dot(a.astype(w2_ref.dtype), w2_ref[...],
                preferred_element_type=jnp.float32)
    o_ref[...] = (y + b2_ref[...]).astype(o_ref.dtype)


def mlp_apply_cached_kernel(h_ref, scale_ref, shift_ref, w2_ref, b2_ref, o_ref):
    a = jnp.maximum(h_ref[...] * scale_ref[...] + shift_ref[...], 0.0)
    y = jnp.dot(a.astype(w2_ref.dtype), w2_ref[...],
                preferred_element_type=jnp.float32)
    o_ref[...] = (y + b2_ref[...]).astype(o_ref.dtype)


# ---------------------------------------------------------------------------
# Tiling / VMEM budgeting helpers (per TPU generation).
# ---------------------------------------------------------------------------
def _tpu_vmem_budget():
    """~75% of physical VMEM (96 MiB on v5e/v6e, 48 MiB on v7x); fallback 48 MiB."""
    try:
        cap = int(pltpu.get_tpu_info().vmem_capacity_bytes)
    except Exception:
        cap = 64 << 20
    return int(cap * 0.75)


def _estimate_vmem_bytes(tm, in_dim, hidden, out_dim, cache_h, resident_copies):
    """Static footprint: resident weights + double-buffered streaming tiles +
    f32 intermediates, with 25% margin for compiler scratch."""
    w_res = resident_copies * 2 * (in_dim * hidden + hidden * out_dim)   # bf16
    vectors = 8 * 4 * (hidden + out_dim)                                 # scale/shift/b2/stats
    # pass 1: x tiles (f32, 2x) + bf16 cast + f32 h (+ 2x f32 h-out if cached)
    p1 = 2 * tm * in_dim * 4 + tm * in_dim * 2 + tm * hidden * 4
    if cache_h:
        p1 += 2 * tm * hidden * 4
    # pass 2
    if cache_h:
        p2 = 2 * tm * hidden * 4 + tm * hidden * 2 + 2 * tm * out_dim * 4
    else:
        p2 = (2 * tm * in_dim * 4 + tm * in_dim * 2 + tm * hidden * 4
              + tm * hidden * 2 + 2 * tm * out_dim * 4)
    return int(1.25 * (w_res + vectors + max(p1, p2)))


def _choose_tm(B, in_dim, hidden, out_dim, cache_h, resident_copies, budget):
    cands = [t for t in (1024, 512, 256, 128, 64, 32, 16, 8) if B % t == 0]
    if not cands:
        cands = [B]                       # full-batch block (full-dim is always legal)
    for t in cands:
        if _estimate_vmem_bytes(t, in_dim, hidden, out_dim, cache_h,
                                resident_copies) <= budget:
            return t
    return cands[-1]


# ---------------------------------------------------------------------------
# Wrapper.
# ---------------------------------------------------------------------------
@functools.partial(jax.jit,
                   static_argnames=("tm", "single_buffer_weights", "cache_h"))
def prediction_mlp(x, w1_t, gamma, beta, w2_t, b2, *, tm=None,
                   single_buffer_weights=True, cache_h=None):
    """x: (B, in) f32; w1_t: (in, hidden); gamma/beta: (1, hidden);
    w2_t: (hidden, out); b2: (1, out)  ->  (B, out) f32."""
    B, in_dim = x.shape
    hidden = w1_t.shape[1]
    out_dim = w2_t.shape[1]

    if cache_h is None:
        # Caching h is a net MXU + HBM-bandwidth win when in_dim >= 2*hidden.
        cache_h = in_dim >= 2 * hidden

    budget = _tpu_vmem_budget()
    resident_copies = 1 if single_buffer_weights else 2
    if tm is None:
        tm = _choose_tm(B, in_dim, hidden, out_dim, cache_h, resident_copies,
                        budget)
    assert B % tm == 0, (B, tm)
    n_tiles = B // tm
    # Split the stats pass across 2 "parallel" slices so v7x can use both TCs.
    n_splits = 2 if (n_tiles >= 2 and n_tiles % 2 == 0) else 1
    tiles_per_split = n_tiles // n_splits

    # bf16 weights for the MXU (cast once in the wrapper; they are tiny and
    # stay resident across all grid steps).
    w1_bf = w1_t.astype(jnp.bfloat16)
    w2_bf = w2_t.astype(jnp.bfloat16)

    def _resident(a):
        """Constant-index BlockSpec: operand stays resident in VMEM; single
        buffer (no useless double-buffer) when supported."""
        zeros = (0,) * a.ndim
        if single_buffer_weights:
            return pl.BlockSpec(a.shape, lambda *_: zeros,
                                pipeline_mode=pl.Buffered(1))
        return pl.BlockSpec(a.shape, lambda *_: zeros)

    # ---- Pass 1: full-batch BN statistics (+ optional h cache) -------------
    x_spec_p1 = pl.BlockSpec((tm, in_dim),
                             lambda c, i: (c * tiles_per_split + i, 0))
    stats_spec = pl.BlockSpec((1, 1, hidden), lambda c, i: (c, 0, 0))
    stats_shape = jax.ShapeDtypeStruct((n_splits, 1, hidden), jnp.float32)

    p1_flops = int(2 * B * in_dim * hidden + 4 * B * hidden)
    p1_bytes = int(B * in_dim * 4 + in_dim * hidden * 2
                   + 2 * n_splits * hidden * 4
                   + (B * hidden * 4 if cache_h else 0))
    p1_params = pltpu.CompilerParams(
        dimension_semantics=("parallel", "arbitrary"),
        vmem_limit_bytes=budget)
    p1_cost = pl.CostEstimate(flops=p1_flops, transcendentals=0,
                              bytes_accessed=p1_bytes)

    if cache_h:
        h_cache, sum_parts, sumsq_parts = pl.pallas_call(
            bn_stats_cache_kernel,
            out_shape=(jax.ShapeDtypeStruct((B, hidden), jnp.float32),
                       stats_shape, stats_shape),
            grid=(n_splits, tiles_per_split),
            in_specs=[x_spec_p1, _resident(w1_bf)],
            out_specs=(pl.BlockSpec((tm, hidden),
                                    lambda c, i: (c * tiles_per_split + i, 0)),
                       stats_spec, stats_spec),
            compiler_params=p1_params, cost_estimate=p1_cost,
        )(x, w1_bf)
    else:
        h_cache = None
        sum_parts, sumsq_parts = pl.pallas_call(
            bn_stats_kernel,
            out_shape=(stats_shape, stats_shape),
            grid=(n_splits, tiles_per_split),
            in_specs=[x_spec_p1, _resident(w1_bf)],
            out_specs=(stats_spec, stats_spec),
            compiler_params=p1_params, cost_estimate=p1_cost,
        )(x, w1_bf)

    # Reduce per-split partials and fold BatchNorm into one scale/shift
    # (tiny (1, hidden) f32 math; biased variance == PyTorch train mode).
    h_sum = jnp.sum(sum_parts, axis=0)            # (1, hidden)
    h_sumsq = jnp.sum(sumsq_parts, axis=0)        # (1, hidden)
    mean = h_sum / B
    var = jnp.maximum(h_sumsq / B - mean * mean, 0.0)   # guard cancellation
    scale = gamma * jax.lax.rsqrt(var + BN_EPS)
    shift = beta - mean * scale

    # ---- Pass 2: folded BN + ReLU + second Linear ---------------------------
    p2_flops = int(2 * B * hidden * out_dim + 4 * B * hidden
                   + (0 if cache_h else 2 * B * in_dim * hidden))
    p2_bytes = int((B * hidden * 4 if cache_h
                    else B * in_dim * 4 + in_dim * hidden * 2)
                   + hidden * out_dim * 2 + (2 * hidden + out_dim) * 4
                   + B * out_dim * 4)
    p2_params = pltpu.CompilerParams(
        dimension_semantics=("parallel",),        # shard batch tiles across TCs
        vmem_limit_bytes=budget)
    p2_cost = pl.CostEstimate(flops=p2_flops, transcendentals=0,
                              bytes_accessed=p2_bytes)
    out_shape = jax.ShapeDtypeStruct((B, out_dim), x.dtype)
    out_spec = pl.BlockSpec((tm, out_dim), lambda i: (i, 0))

    if cache_h:
        out = pl.pallas_call(
            mlp_apply_cached_kernel,
            out_shape=out_shape,
            grid=(n_tiles,),
            in_specs=[pl.BlockSpec((tm, hidden), lambda i: (i, 0)),
                      _resident(scale), _resident(shift),
                      _resident(w2_bf), _resident(b2)],
            out_specs=out_spec,
            compiler_params=p2_params, cost_estimate=p2_cost,
        )(h_cache, scale, shift, w2_bf, b2)
    else:
        out = pl.pallas_call(
            mlp_apply_recompute_kernel,
            out_shape=out_shape,
            grid=(n_tiles,),
            in_specs=[pl.BlockSpec((tm, in_dim), lambda i: (i, 0)),
                      _resident(w1_bf), _resident(scale), _resident(shift),
                      _resident(w2_bf), _resident(b2)],
            out_specs=out_spec,
            compiler_params=p2_params, cost_estimate=p2_cost,
        )(x, w1_bf, scale, shift, w2_bf, b2)
    return out


# ---------------------------------------------------------------------------
# Params / reference.
# ---------------------------------------------------------------------------
def init_params(key, in_dim, hidden_dim, out_dim):
    """PyTorch-style (kaiming-uniform) init for the two Linears; BatchNorm1d
    defaults gamma=1, beta=0.  Weights pre-transposed to (in, out) layout."""
    k1, k2, k3 = jax.random.split(key, 3)
    bound1 = 1.0 / (in_dim ** 0.5)
    w1 = jax.random.uniform(k1, (hidden_dim, in_dim), jnp.float32, -bound1, bound1)
    bound2 = 1.0 / (hidden_dim ** 0.5)
    w2 = jax.random.uniform(k2, (out_dim, hidden_dim), jnp.float32, -bound2, bound2)
    b2 = jax.random.uniform(k3, (out_dim,), jnp.float32, -bound2, bound2)
    gamma = jnp.ones((hidden_dim,), jnp.float32)
    beta = jnp.zeros((hidden_dim,), jnp.float32)
    return (w1.T, gamma.reshape(1, -1), beta.reshape(1, -1), w2.T, b2.reshape(1, -1))


def reference(x, w1_t, gamma, beta, w2_t, b2):
    """Pure-JAX reference mirroring the kernel's bf16-matmul / f32-stats math."""
    h = jnp.dot(x.astype(jnp.bfloat16), w1_t.astype(jnp.bfloat16),
                preferred_element_type=jnp.float32)
    mean = h.mean(axis=0, keepdims=True)
    var = ((h - mean) ** 2).mean(axis=0, keepdims=True)   # biased (train mode)
    hn = (h - mean) * jax.lax.rsqrt(var + BN_EPS) * gamma + beta
    a = jnp.maximum(hn, 0.0)
    y = jnp.dot(a.astype(jnp.bfloat16), w2_t.astype(jnp.bfloat16),
                preferred_element_type=jnp.float32) + b2
    return y.astype(x.dtype)


if __name__ == "__main__":
    key = jax.random.PRNGKey(0)

    # (B, in_dim, hidden, out_dim, tm):
    #   case 0: recompute path (in < 2*hidden), explicit tm=128 -> multi-tile
    #           grid + 2-way parallel stats split.
    #   case 1: h-cache path (in >= 2*hidden), auto tile selection.
    cases = [
        (256, 128, 256, 128, 128),
        (256, 256, 128, 256, None),
    ]
    for idx, (B, IN, HID, OUT, TM) in enumerate(cases):
        kx, kp = jax.random.split(jax.random.fold_in(key, idx))
        x = jax.random.normal(kx, (B, IN), jnp.float32)
        params = init_params(kp, IN, HID, OUT)
        try:
            out = prediction_mlp(x, *params, tm=TM)
        except Exception:
            # Fallback if single-buffered resident operands (pl.Buffered(1))
            # are not supported by this jax/libtpu combination.
            out = prediction_mlp(x, *params, tm=TM, single_buffer_weights=False)
        out = jax.block_until_ready(out)

        ref = reference(x, *params)
        assert out.shape == (B, OUT), out.shape
        assert jnp.allclose(out, ref, atol=5e-3, rtol=5e-3), (
            f"mismatch vs JAX reference in case {idx}: "
            f"max abs err {jnp.max(jnp.abs(out - ref))}")
    print("KERNEL_OK")
</pallas_src>

<mosaic_0001>
module attributes {stable_mosaic.version = 11 : i64} {
  func.func @mlp_apply_recompute_kernel(%arg0: i32, %arg1: memref<128x128xf32, #tpu.memory_space<vmem>>, %arg2: memref<128x256xbf16, #tpu.memory_space<vmem>>, %arg3: memref<1x256xf32, #tpu.memory_space<vmem>>, %arg4: memref<1x256xf32, #tpu.memory_space<vmem>>, %arg5: memref<256x128xbf16, #tpu.memory_space<vmem>>, %arg6: memref<1x128xf32, #tpu.memory_space<vmem>>, %arg7: memref<128x128xf32, #tpu.memory_space<vmem>>) attributes {dimension_semantics = [#tpu.dimension_semantics<parallel>], iteration_bounds = array<i64: 2>, scalar_prefetch = 0 : i64, scratch_operands = 0 : i64, tpu.core_type = #tpu.core_type<tc>, window_params = [{transform_indices = @transform_0, window_bounds = array<i64: 128, 128>}, {pipeline_mode = #tpu.pipeline_mode<synchronous>, transform_indices = @transform_1, window_bounds = array<i64: 128, 256>}, {pipeline_mode = #tpu.pipeline_mode<synchronous>, transform_indices = @transform_2, window_bounds = array<i64: 1, 256>}, {pipeline_mode = #tpu.pipeline_mode<synchronous>, transform_indices = @transform_3, window_bounds = array<i64: 1, 256>}, {pipeline_mode = #tpu.pipeline_mode<synchronous>, transform_indices = @transform_4, window_bounds = array<i64: 256, 128>}, {pipeline_mode = #tpu.pipeline_mode<synchronous>, transform_indices = @transform_5, window_bounds = array<i64: 1, 128>}, {transform_indices = @transform_6, window_bounds = array<i64: 128, 128>}]} {
    %c0 = arith.constant 0 : index
    %c0_0 = arith.constant 0 : index
    %0 = vector.load %arg1[%c0, %c0_0] : memref<128x128xf32, #tpu.memory_space<vmem>>, vector<128x128xf32>
    %1 = arith.truncf %0 : vector<128x128xf32> to vector<128x128xbf16>
    %c0_1 = arith.constant 0 : index
    %c0_2 = arith.constant 0 : index
    %2 = vector.load %arg2[%c0_1, %c0_2] : memref<128x256xbf16, #tpu.memory_space<vmem>>, vector<128x256xbf16>
    %cst = arith.constant dense<0.000000e+00> : vector<128x256xf32>
    %3 = tpu.matmul %1, %2, %cst {dimension_numbers = #tpu.dot_dimension_numbers<[1], [0], [0], [1], [0, 0, 1, 1], [], []>} : vector<128x128xbf16>, vector<128x256xbf16>, vector<128x256xf32> -> vector<128x256xf32>
    %c0_3 = arith.constant 0 : index
    %c0_4 = arith.constant 0 : index
    %4 = vector.load %arg3[%c0_3, %c0_4] : memref<1x256xf32, #tpu.memory_space<vmem>>, vector<1x256xf32>
    %5 = vector.broadcast %4 : vector<1x256xf32> to vector<128x256xf32>
    %6 = arith.mulf %3, %5 : vector<128x256xf32>
    %c0_5 = arith.constant 0 : index
    %c0_6 = arith.constant 0 : index
    %7 = vector.load %arg4[%c0_5, %c0_6] : memref<1x256xf32, #tpu.memory_space<vmem>>, vector<1x256xf32>
    %8 = vector.broadcast %7 : vector<1x256xf32> to vector<128x256xf32>
    %9 = arith.addf %6, %8 : vector<128x256xf32>
    %cst_7 = arith.constant 0.000000e+00 : f32
    %10 = vector.broadcast %cst_7 : f32 to vector<128x256xf32>
    %11 = arith.maximumf %9, %10 : vector<128x256xf32>
    %12 = arith.truncf %11 : vector<128x256xf32> to vector<128x256xbf16>
    %c0_8 = arith.constant 0 : index
    %c0_9 = arith.constant 0 : index
    %13 = vector.load %arg5[%c0_8, %c0_9] : memref<256x128xbf16, #tpu.memory_space<vmem>>, vector<256x128xbf16>
    %cst_10 = arith.constant dense<0.000000e+00> : vector<128x128xf32>
    %14 = tpu.matmul %12, %13, %cst_10 {dimension_numbers = #tpu.dot_dimension_numbers<[1], [0], [0], [1], [0, 0, 1, 1], [], []>} : vector<128x256xbf16>, vector<256x128xbf16>, vector<128x128xf32> -> vector<128x128xf32>
    %c0_11 = arith.constant 0 : index
    %c0_12 = arith.constant 0 : index
    %15 = vector.load %arg6[%c0_11, %c0_12] : memref<1x128xf32, #tpu.memory_space<vmem>>, vector<1x128xf32>
    %16 = vector.broadcast %15 : vector<1x128xf32> to vector<128x128xf32>
    %17 = arith.addf %14, %16 : vector<128x128xf32>
    %c0_13 = arith.constant 0 : index
    %c0_14 = arith.constant 0 : index
    %18 = vector.load %arg7[%c0_13, %c0_14] : memref<128x128xf32, #tpu.memory_space<vmem>>, vector<128x128xf32>
    tpu.vector_store %arg7[%c0_13, %c0_14], %17 {strides = array<i32>} : memref<128x128xf32, #tpu.memory_space<vmem>>, vector<128x128xf32>,
    return
  }
  func.func @transform_0(%arg0: i32) -> (i32, i32) {
    %c0_i32 = arith.constant 0 : i32
    %c0_i32_0 = arith.constant 0 : i32
    return %arg0, %c0_i32 : i32, i32
  }
  func.func @transform_1(%arg0: i32) -> (i32, i32) {
    %c0_i32 = arith.constant 0 : i32
    %c0_i32_0 = arith.constant 0 : i32
    %c0_i32_1 = arith.constant 0 : i32
    return %c0_i32, %c0_i32_0 : i32, i32
  }
  func.func @transform_2(%arg0: i32) -> (i32, i32) {
    %c0_i32 = arith.constant 0 : i32
    %c0_i32_0 = arith.constant 0 : i32
    %c0_i32_1 = arith.constant 0 : i32
    return %c0_i32, %c0_i32_0 : i32, i32
  }
  func.func @transform_3(%arg0: i32) -> (i32, i32) {
    %c0_i32 = arith.constant 0 : i32
    %c0_i32_0 = arith.constant 0 : i32
    %c0_i32_1 = arith.constant 0 : i32
    return %c0_i32, %c0_i32_0 : i32, i32
  }
  func.func @transform_4(%arg0: i32) -> (i32, i32) {
    %c0_i32 = arith.constant 0 : i32
    %c0_i32_0 = arith.constant 0 : i32
    %c0_i32_1 = arith.constant 0 : i32
    return %c0_i32, %c0_i32_0 : i32, i32
  }
  func.func @transform_5(%arg0: i32) -> (i32, i32) {
    %c0_i32 = arith.constant 0 : i32
    %c0_i32_0 = arith.constant 0 : i32
    %c0_i32_1 = arith.constant 0 : i32
    return %c0_i32, %c0_i32_0 : i32, i32
  }
  func.func @transform_6(%arg0: i32) -> (i32, i32) {
    %c0_i32 = arith.constant 0 : i32
    %c0_i32_0 = arith.constant 0 : i32
    return %arg0, %c0_i32 : i32, i32
  }
}

module attributes {stable_mosaic.version = 11 : i64} {
  func.func @bn_stats_kernel(%arg0: i32, %arg1: i32, %arg2: memref<128x128xf32, #tpu.memory_space<vmem>>, %arg3: memref<128x256xbf16, #tpu.memory_space<vmem>>, %arg4: memref<1x1x256xf32, #tpu.memory_space<vmem>>, %arg5: memref<1x1x256xf32, #tpu.memory_space<vmem>>) attributes {dimension_semantics = [#tpu.dimension_semantics<parallel>, #tpu.dimension_semantics<arbitrary>], iteration_bounds = array<i64: 2, 1>, scalar_prefetch = 0 : i64, scratch_operands = 0 : i64, tpu.core_type = #tpu.core_type<tc>, window_params = [{transform_indices = @transform_0, window_bounds = array<i64: 128, 128>}, {pipeline_mode = #tpu.pipeline_mode<synchronous>, transform_indices = @transform_1, window_bounds = array<i64: 128, 256>}, {transform_indices = @transform_2, window_bounds = array<i64: 1, 1, 256>}, {transform_indices = @transform_3, window_bounds = array<i64: 1, 1, 256>}]} {
    %c0_i32 = arith.constant 0 : i32
    %0 = arith.cmpi eq, %arg1, %c0_i32 : i32
    %1 = arith.extui %0 : i1 to i32
    %c0_i32_0 = arith.constant 0 : i32
    %2 = arith.cmpi ne, %1, %c0_i32_0 : i32
    scf.if %2 {
      %cst_18 = arith.constant 0.000000e+00 : f32
      %20 = vector.broadcast %cst_18 : f32 to vector<1x1x256xf32>
      %c0_19 = arith.constant 0 : index
      %c0_20 = arith.constant 0 : index
      %c0_21 = arith.constant 0 : index
      %21 = vector.load %arg4[%c0_19, %c0_20, %c0_21] : memref<1x1x256xf32, #tpu.memory_space<vmem>>, vector<1x1x256xf32>
      tpu.vector_store %arg4[%c0_19, %c0_20, %c0_21], %20 {strides = array<i32>} : memref<1x1x256xf32, #tpu.memory_space<vmem>>, vector<1x1x256xf32>,
      %cst_22 = arith.constant 0.000000e+00 : f32
      %22 = vector.broadcast %cst_22 : f32 to vector<1x1x256xf32>
      %c0_23 = arith.constant 0 : index
      %c0_24 = arith.constant 0 : index
      %c0_25 = arith.constant 0 : index
      %23 = vector.load %arg5[%c0_23, %c0_24, %c0_25] : memref<1x1x256xf32, #tpu.memory_space<vmem>>, vector<1x1x256xf32>
      tpu.vector_store %arg5[%c0_23, %c0_24, %c0_25], %22 {strides = array<i32>} : memref<1x1x256xf32, #tpu.memory_space<vmem>>, vector<1x1x256xf32>,
    } else {
    }
    %c0 = arith.constant 0 : index
    %c0_1 = arith.constant 0 : index
    %3 = vector.load %arg2[%c0, %c0_1] : memref<128x128xf32, #tpu.memory_space<vmem>>, vector<128x128xf32>
    %4 = arith.truncf %3 : vector<128x128xf32> to vector<128x128xbf16>
    %c0_2 = arith.constant 0 : index
    %c0_3 = arith.constant 0 : index
    %5 = vector.load %arg3[%c0_2, %c0_3] : memref<128x256xbf16, #tpu.memory_space<vmem>>, vector<128x256xbf16>
    %cst = arith.constant dense<0.000000e+00> : vector<128x256xf32>
    %6 = tpu.matmul %4, %5, %cst {dimension_numbers = #tpu.dot_dimension_numbers<[1], [0], [0], [1], [0, 0, 1, 1], [], []>} : vector<128x128xbf16>, vector<128x256xbf16>, vector<128x256xf32> -> vector<128x256xf32>
    %c0_4 = arith.constant 0 : index
    %c0_5 = arith.constant 0 : index
    %c0_6 = arith.constant 0 : index
    %7 = vector.load %arg4[%c0_4, %c0_5, %c0_6] : memref<1x1x256xf32, #tpu.memory_space<vmem>>, vector<1x1x256xf32>
    %cst_7 = arith.constant dense<0.000000e+00> : vector<256xf32>
    %8 = vector.multi_reduction <add>, %6, %cst_7 [0] : vector<128x256xf32> to vector<256xf32>
    %9 = vector.shape_cast %8 : vector<256xf32> to vector<1x256xf32>
    %10 = vector.shape_cast %9 : vector<1x256xf32> to vector<1x1x256xf32>
    %11 = arith.addf %7, %10 : vector<1x1x256xf32>
    %c0_8 = arith.constant 0 : index
    %c0_9 = arith.constant 0 : index
    %c0_10 = arith.constant 0 : index
    %12 = vector.load %arg4[%c0_8, %c0_9, %c0_10] : memref<1x1x256xf32, #tpu.memory_space<vmem>>, vector<1x1x256xf32>
    tpu.vector_store %arg4[%c0_8, %c0_9, %c0_10], %11 {strides = array<i32>} : memref<1x1x256xf32, #tpu.memory_space<vmem>>, vector<1x1x256xf32>,
    %c0_11 = arith.constant 0 : index
    %c0_12 = arith.constant 0 : index
    %c0_13 = arith.constant 0 : index
    %13 = vector.load %arg5[%c0_11, %c0_12, %c0_13] : memref<1x1x256xf32, #tpu.memory_space<vmem>>, vector<1x1x256xf32>
    %14 = arith.mulf %6, %6 : vector<128x256xf32>
    %cst_14 = arith.constant dense<0.000000e+00> : vector<256xf32>
    %15 = vector.multi_reduction <add>, %14, %cst_14 [0] : vector<128x256xf32> to vector<256xf32>
    %16 = vector.shape_cast %15 : vector<256xf32> to vector<1x256xf32>
    %17 = vector.shape_cast %16 : vector<1x256xf32> to vector<1x1x256xf32>
    %18 = arith.addf %13, %17 : vector<1x1x256xf32>
    %c0_15 = arith.constant 0 : index
    %c0_16 = arith.constant 0 : index
    %c0_17 = arith.constant 0 : index
    %19 = vector.load %arg5[%c0_15, %c0_16, %c0_17] : memref<1x1x256xf32, #tpu.memory_space<vmem>>, vector<1x1x256xf32>
    tpu.vector_store %arg5[%c0_15, %c0_16, %c0_17], %18 {strides = array<i32>} : memref<1x1x256xf32, #tpu.memory_space<vmem>>, vector<1x1x256xf32>,
    return
  }
  func.func @transform_0(%arg0: i32, %arg1: i32) -> (i32, i32) {
    %c1_i32 = arith.constant 1 : i32
    %0 = arith.muli %arg0, %c1_i32 : i32
    %1 = arith.addi %0, %arg1 : i32
    %c0_i32 = arith.constant 0 : i32
    %c0_i32_0 = arith.constant 0 : i32
    return %1, %c0_i32 : i32, i32
  }
  func.func @transform_1(%arg0: i32, %arg1: i32) -> (i32, i32) {
    %c0_i32 = arith.constant 0 : i32
    %c0_i32_0 = arith.constant 0 : i32
    %c0_i32_1 = arith.constant 0 : i32
    return %c0_i32, %c0_i32_0 : i32, i32
  }
  func.func @transform_2(%arg0: i32, %arg1: i32) -> (i32, i32, i32) {
    %c0_i32 = arith.constant 0 : i32
    %c0_i32_0 = arith.constant 0 : i32
    %c0_i32_1 = arith.constant 0 : i32
    return %arg0, %c0_i32, %c0_i32_0 : i32, i32, i32
  }
  func.func @transform_3(%arg0: i32, %arg1: i32) -> (i32, i32, i32) {
    %c0_i32 = arith.constant 0 : i32
    %c0_i32_0 = arith.constant 0 : i32
    %c0_i32_1 = arith.constant 0 : i32
    return %arg0, %c0_i32, %c0_i32_0 : i32, i32, i32
  }
}

module attributes {stable_mosaic.version = 11 : i64} {
  func.func @bn_stats_kernel(%arg0: i32, %arg1: i32, %arg2: memref<128x128xf32, #tpu.memory_space<vmem>>, %arg3: memref<128x256xbf16, #tpu.memory_space<vmem>>, %arg4: memref<1x1x256xf32, #tpu.memory_space<vmem>>, %arg5: memref<1x1x256xf32, #tpu.memory_space<vmem>>) attributes {dimension_semantics = [#tpu.dimension_semantics<parallel>, #tpu.dimension_semantics<arbitrary>], iteration_bounds = array<i64: 2, 1>, scalar_prefetch = 0 : i64, scratch_operands = 0 : i64, tpu.core_type = #tpu.core_type<tc>, window_params = [{transform_indices = @transform_0, window_bounds = array<i64: 128, 128>}, {pipeline_mode = #tpu.pipeline_mode<synchronous>, transform_indices = @transform_1, window_bounds = array<i64: 128, 256>}, {transform_indices = @transform_2, window_bounds = array<i64: 1, 1, 256>}, {transform_indices = @transform_3, window_bounds = array<i64: 1, 1, 256>}]} {
    %c0_i32 = arith.constant 0 : i32
    %0 = arith.cmpi eq, %arg1, %c0_i32 : i32
    %1 = arith.extui %0 : i1 to i32
    %c0_i32_0 = arith.constant 0 : i32
    %2 = arith.cmpi ne, %1, %c0_i32_0 : i32
    scf.if %2 {
      %cst_18 = arith.constant 0.000000e+00 : f32
      %20 = vector.broadcast %cst_18 : f32 to vector<1x1x256xf32>
      %c0_19 = arith.constant 0 : index
      %c0_20 = arith.constant 0 : index
      %c0_21 = arith.constant 0 : index
      %21 = vector.load %arg4[%c0_19, %c0_20, %c0_21] : memref<1x1x256xf32, #tpu.memory_space<vmem>>, vector<1x1x256xf32>
      tpu.vector_store %arg4[%c0_19, %c0_20, %c0_21], %20 {strides = array<i32>} : memref<1x1x256xf32, #tpu.memory_space<vmem>>, vector<1x1x256xf32>,
      %cst_22 = arith.constant 0.000000e+00 : f32
      %22 = vector.broadcast %cst_22 : f32 to vector<1x1x256xf32>
      %c0_23 = arith.constant 0 : index
      %c0_24 = arith.constant 0 : index
      %c0_25 = arith.constant 0 : index
      %23 = vector.load %arg5[%c0_23, %c0_24, %c0_25] : memref<1x1x256xf32, #tpu.memory_space<vmem>>, vector<1x1x256xf32>
      tpu.vector_store %arg5[%c0_23, %c0_24, %c0_25], %22 {strides = array<i32>} : memref<1x1x256xf32, #tpu.memory_space<vmem>>, vector<1x1x256xf32>,
    } else {
    }
    %c0 = arith.constant 0 : index
    %c0_1 = arith.constant 0 : index
    %3 = vector.load %arg2[%c0, %c0_1] : memref<128x128xf32, #tpu.memory_space<vmem>>, vector<128x128xf32>
    %4 = arith.truncf %3 : vector<128x128xf32> to vector<128x128xbf16>
    %c0_2 = arith.constant 0 : index
    %c0_3 = arith.constant 0 : index
    %5 = vector.load %arg3[%c0_2, %c0_3] : memref<128x256xbf16, #tpu.memory_space<vmem>>, vector<128x256xbf16>
    %cst = arith.constant dense<0.000000e+00> : vector<128x256xf32>
    %6 = tpu.matmul %4, %5, %cst {dimension_numbers = #tpu.dot_dimension_numbers<[1], [0], [0], [1], [0, 0, 1, 1], [], []>} : vector<128x128xbf16>, vector<128x256xbf16>, vector<128x256xf32> -> vector<128x256xf32>
    %c0_4 = arith.constant 0 : index
    %c0_5 = arith.constant 0 : index
    %c0_6 = arith.constant 0 : index
    %7 = vector.load %arg4[%c0_4, %c0_5, %c0_6] : memref<1x1x256xf32, #tpu.memory_space<vmem>>, vector<1x1x256xf32>
    %cst_7 = arith.constant dense<0.000000e+00> : vector<256xf32>
    %8 = vector.multi_reduction <add>, %6, %cst_7 [0] : vector<128x256xf32> to vector<256xf32>
    %9 = vector.shape_cast %8 : vector<256xf32> to vector<1x256xf32>
    %10 = vector.shape_cast %9 : vector<1x256xf32> to vector<1x1x256xf32>
    %11 = arith.addf %7, %10 : vector<1x1x256xf32>
    %c0_8 = arith.constant 0 : index
    %c0_9 = arith.constant 0 : index
    %c0_10 = arith.constant 0 : index
    %12 = vector.load %arg4[%c0_8, %c0_9, %c0_10] : memref<1x1x256xf32, #tpu.memory_space<vmem>>, vector<1x1x256xf32>
    tpu.vector_store %arg4[%c0_8, %c0_9, %c0_10], %11 {strides = array<i32>} : memref<1x1x256xf32, #tpu.memory_space<vmem>>, vector<1x1x256xf32>,
    %c0_11 = arith.constant 0 : index
    %c0_12 = arith.constant 0 : index
    %c0_13 = arith.constant 0 : index
    %13 = vector.load %arg5[%c0_11, %c0_12, %c0_13] : memref<1x1x256xf32, #tpu.memory_space<vmem>>, vector<1x1x256xf32>
    %14 = arith.mulf %6, %6 : vector<128x256xf32>
    %cst_14 = arith.constant dense<0.000000e+00> : vector<256xf32>
    %15 = vector.multi_reduction <add>, %14, %cst_14 [0] : vector<128x256xf32> to vector<256xf32>
    %16 = vector.shape_cast %15 : vector<256xf32> to vector<1x256xf32>
    %17 = vector.shape_cast %16 : vector<1x256xf32> to vector<1x1x256xf32>
    %18 = arith.addf %13, %17 : vector<1x1x256xf32>
    %c0_15 = arith.constant 0 : index
    %c0_16 = arith.constant 0 : index
    %c0_17 = arith.constant 0 : index
    %19 = vector.load %arg5[%c0_15, %c0_16, %c0_17] : memref<1x1x256xf32, #tpu.memory_space<vmem>>, vector<1x1x256xf32>
    tpu.vector_store %arg5[%c0_15, %c0_16, %c0_17], %18 {strides = array<i32>} : memref<1x1x256xf32, #tpu.memory_space<vmem>>, vector<1x1x256xf32>,
    return
  }
  func.func @transform_0(%arg0: i32, %arg1: i32) -> (i32, i32) {
    %c1_i32 = arith.constant 1 : i32
    %0 = arith.muli %arg0, %c1_i32 : i32
    %1 = arith.addi %0, %arg1 : i32
    %c0_i32 = arith.constant 0 : i32
    %c0_i32_0 = arith.constant 0 : i32
    return %1, %c0_i32 : i32, i32
  }
  func.func @transform_1(%arg0: i32, %arg1: i32) -> (i32, i32) {
    %c0_i32 = arith.constant 0 : i32
    %c0_i32_0 = arith.constant 0 : i32
    %c0_i32_1 = arith.constant 0 : i32
    return %c0_i32, %c0_i32_0 : i32, i32
  }
  func.func @transform_2(%arg0: i32, %arg1: i32) -> (i32, i32, i32) {
    %c0_i32 = arith.constant 0 : i32
    %c0_i32_0 = arith.constant 0 : i32
    %c0_i32_1 = arith.constant 0 : i32
    return %arg0, %c0_i32, %c0_i32_0 : i32, i32, i32
  }
  func.func @transform_3(%arg0: i32, %arg1: i32) -> (i32, i32, i32) {
    %c0_i32 = arith.constant 0 : i32
    %c0_i32_0 = arith.constant 0 : i32
    %c0_i32_1 = arith.constant 0 : i32
    return %arg0, %c0_i32, %c0_i32_0 : i32, i32, i32
  }
}

module attributes {stable_mosaic.version = 11 : i64} {
  func.func @mlp_apply_recompute_kernel(%arg0: i32, %arg1: memref<128x128xf32, #tpu.memory_space<vmem>>, %arg2: memref<128x256xbf16, #tpu.memory_space<vmem>>, %arg3: memref<1x256xf32, #tpu.memory_space<vmem>>, %arg4: memref<1x256xf32, #tpu.memory_space<vmem>>, %arg5: memref<256x128xbf16, #tpu.memory_space<vmem>>, %arg6: memref<1x128xf32, #tpu.memory_space<vmem>>, %arg7: memref<128x128xf32, #tpu.memory_space<vmem>>) attributes {dimension_semantics = [#tpu.dimension_semantics<parallel>], iteration_bounds = array<i64: 2>, scalar_prefetch = 0 : i64, scratch_operands = 0 : i64, tpu.core_type = #tpu.core_type<tc>, window_params = [{transform_indices = @transform_0, window_bounds = array<i64: 128, 128>}, {pipeline_mode = #tpu.pipeline_mode<synchronous>, transform_indices = @transform_1, window_bounds = array<i64: 128, 256>}, {pipeline_mode = #tpu.pipeline_mode<synchronous>, transform_indices = @transform_2, window_bounds = array<i64: 1, 256>}, {pipeline_mode = #tpu.pipeline_mode<synchronous>, transform_indices = @transform_3, window_bounds = array<i64: 1, 256>}, {pipeline_mode = #tpu.pipeline_mode<synchronous>, transform_indices = @transform_4, window_bounds = array<i64: 256, 128>}, {pipeline_mode = #tpu.pipeline_mode<synchronous>, transform_indices = @transform_5, window_bounds = array<i64: 1, 128>}, {transform_indices = @transform_6, window_bounds = array<i64: 128, 128>}]} {
    %c0 = arith.constant 0 : index
    %c0_0 = arith.constant 0 : index
    %0 = vector.load %arg1[%c0, %c0_0] : memref<128x128xf32, #tpu.memory_space<vmem>>, vector<128x128xf32>
    %1 = arith.truncf %0 : vector<128x128xf32> to vector<128x128xbf16>
    %c0_1 = arith.constant 0 : index
    %c0_2 = arith.constant 0 : index
    %2 = vector.load %arg2[%c0_1, %c0_2] : memref<128x256xbf16, #tpu.memory_space<vmem>>, vector<128x256xbf16>
    %cst = arith.constant dense<0.000000e+00> : vector<128x256xf32>
    %3 = tpu.matmul %1, %2, %cst {dimension_numbers = #tpu.dot_dimension_numbers<[1], [0], [0], [1], [0, 0, 1, 1], [], []>} : vector<128x128xbf16>, vector<128x256xbf16>, vector<128x256xf32> -> vector<128x256xf32>
    %c0_3 = arith.constant 0 : index
    %c0_4 = arith.constant 0 : index
    %4 = vector.load %arg3[%c0_3, %c0_4] : memref<1x256xf32, #tpu.memory_space<vmem>>, vector<1x256xf32>
    %5 = vector.broadcast %4 : vector<1x256xf32> to vector<128x256xf32>
    %6 = arith.mulf %3, %5 : vector<128x256xf32>
    %c0_5 = arith.constant 0 : index
    %c0_6 = arith.constant 0 : index
    %7 = vector.load %arg4[%c0_5, %c0_6] : memref<1x256xf32, #tpu.memory_space<vmem>>, vector<1x256xf32>
    %8 = vector.broadcast %7 : vector<1x256xf32> to vector<128x256xf32>
    %9 = arith.addf %6, %8 : vector<128x256xf32>
    %cst_7 = arith.constant 0.000000e+00 : f32
    %10 = vector.broadcast %cst_7 : f32 to vector<128x256xf32>
    %11 = arith.maximumf %9, %10 : vector<128x256xf32>
    %12 = arith.truncf %11 : vector<128x256xf32> to vector<128x256xbf16>
    %c0_8 = arith.constant 0 : index
    %c0_9 = arith.constant 0 : index
    %13 = vector.load %arg5[%c0_8, %c0_9] : memref<256x128xbf16, #tpu.memory_space<vmem>>, vector<256x128xbf16>
    %cst_10 = arith.constant dense<0.000000e+00> : vector<128x128xf32>
    %14 = tpu.matmul %12, %13, %cst_10 {dimension_numbers = #tpu.dot_dimension_numbers<[1], [0], [0], [1], [0, 0, 1, 1], [], []>} : vector<128x256xbf16>, vector<256x128xbf16>, vector<128x128xf32> -> vector<128x128xf32>
    %c0_11 = arith.constant 0 : index
    %c0_12 = arith.constant 0 : index
    %15 = vector.load %arg6[%c0_11, %c0_12] : memref<1x128xf32, #tpu.memory_space<vmem>>, vector<1x128xf32>
    %16 = vector.broadcast %15 : vector<1x128xf32> to vector<128x128xf32>
    %17 = arith.addf %14, %16 : vector<128x128xf32>
    %c0_13 = arith.constant 0 : index
    %c0_14 = arith.constant 0 : index
    %18 = vector.load %arg7[%c0_13, %c0_14] : memref<128x128xf32, #tpu.memory_space<vmem>>, vector<128x128xf32>
    tpu.vector_store %arg7[%c0_13, %c0_14], %17 {strides = array<i32>} : memref<128x128xf32, #tpu.memory_space<vmem>>, vector<128x128xf32>,
    return
  }
  func.func @transform_0(%arg0: i32) -> (i32, i32) {
    %c0_i32 = arith.constant 0 : i32
    %c0_i32_0 = arith.constant 0 : i32
    return %arg0, %c0_i32 : i32, i32
  }
  func.func @transform_1(%arg0: i32) -> (i32, i32) {
    %c0_i32 = arith.constant 0 : i32
    %c0_i32_0 = arith.constant 0 : i32
    %c0_i32_1 = arith.constant 0 : i32
    return %c0_i32, %c0_i32_0 : i32, i32
  }
  func.func @transform_2(%arg0: i32) -> (i32, i32) {
    %c0_i32 = arith.constant 0 : i32
    %c0_i32_0 = arith.constant 0 : i32
    %c0_i32_1 = arith.constant 0 : i32
    return %c0_i32, %c0_i32_0 : i32, i32
  }
  func.func @transform_3(%arg0: i32) -> (i32, i32) {
    %c0_i32 = arith.constant 0 : i32
    %c0_i32_0 = arith.constant 0 : i32
    %c0_i32_1 = arith.constant 0 : i32
    return %c0_i32, %c0_i32_0 : i32, i32
  }
  func.func @transform_4(%arg0: i32) -> (i32, i32) {
    %c0_i32 = arith.constant 0 : i32
    %c0_i32_0 = arith.constant 0 : i32
    %c0_i32_1 = arith.constant 0 : i32
    return %c0_i32, %c0_i32_0 : i32, i32
  }
  func.func @transform_5(%arg0: i32) -> (i32, i32) {
    %c0_i32 = arith.constant 0 : i32
    %c0_i32_0 = arith.constant 0 : i32
    %c0_i32_1 = arith.constant 0 : i32
    return %c0_i32, %c0_i32_0 : i32, i32
  }
  func.func @transform_6(%arg0: i32) -> (i32, i32) {
    %c0_i32 = arith.constant 0 : i32
    %c0_i32_0 = arith.constant 0 : i32
    return %arg0, %c0_i32 : i32, i32
  }
}

</mosaic_0001>

<llo_original>
// kernel: prediction_mlp.2
$region0: #{prediction_mlp.2}
  #allocation0 [shape = 'u32[]', space=smem, size = 0x4, offset = 0x4, fixed_abs, tag = 'smem constant byte address 0x4 - core index']
  #allocation1 [shape = 'u32[72,128]{1,0:T(1,128)}', space=vmem, size = 0x9000, scoped, tag = 'internal scratch']
  %s0 = inlined_call_operand.vmem [shape: f32[256,128], index: 0, kind: input, shape index: {}]
  %s1 = inlined_call_operand.vmem [shape: bf16[128,256], index: 1, kind: input, shape index: {}]
  %s2 = inlined_call_operand.vmem [shape: f32[2,1,256], index: 2, kind: output, shape index: {0}]
  %s3 = inlined_call_operand.vmem [shape: f32[2,1,256], index: 3, kind: output, shape index: {1}]
  %4 = xla_tuple %s2, %s3
  %s5 = sld [smem:[#allocation0]]
  $region53: #{prediction_mlp.2} parent=0
    _
  %s7 = ssub.s32 1, %s5
  %s8 = scalar_select 0, %s7, %s5
  loop: start=0, step=1, limit=4
  $region2: #{prediction_mlp.2} parent=0 // loop_pre_header
    _
  $region3: #{prediction_mlp.2} parent=0 // loop_header
    %s10 = sphi 0, %s14
    %p11 = scmp.ge.s32.totalorder %s10, 4
    %s17 = sphi 0, %s29
    %s18 = sphi 0, %s25
    %s19 = sphi 0, %s17
    %s20 = sphi 0, %s18
    %s21 = sphi 0, %s19
    %s22 = sphi 0, %s20
    %s34 = sphi 0, %s36
    %s37 = sphi 0, %s34
    %s38 = sphi 0, %s37
    %s54 = sphi 0, %s38
    %s58 = sphi 0, %s58
    %s60 = sphi 0, %s58
    %s61 = sphi 0, %s60
    %s75 = sphi 0, %s61
    %s81 = sphi 0, %s83
    %s84 = sphi 0, %s81
    %s85 = sphi 0, %s84
    %s101 = sphi 0, %s85
    %s107 = sphi 0, %s109
    %s110 = sphi 0, %s107
    %s111 = sphi 0, %s110
    %s127 = sphi 0, %s111
  $region4: #{prediction_mlp.2} parent=0 // loop_header_branch
    %13 = sbr.rel (%p11) target = $region8
  $region5: #{prediction_mlp.2} parent=0 // loop_body
    %s15 = ssub.s32 %s10, 1
    %s16 = ssub.s32 %s10, 2
    %s23 = sadd.s32 1, %s18
    %p24 = scmp.ge.s32.totalorder %s23, 1
    %s25 = scalar_select %p24, 0, %s23
    %s26 = sadd.s32 1, %s17
    %s27 = scalar_select %p24, %s26, %s17
    %p28 = scmp.ge.s32.totalorder %s27, 2
    %s29 = scalar_select %p28, 0, %s27
    %s30 = sadd.s32 %s17, %s18
    %s31 = sadd.s32 %s29, %s25
    %s32 = ssub.s32 %s30, %s31
    %p33 = scmp.eq.s32.totalorder %s32, 0
    %s35 = sadd.s32 %s34, 1
    %s36 = scalar_select %p33, %s34, %s35
    %p39 = pneg %p33
    %p40 = scmp.eq.s32.totalorder %s10, 1
    %p41 = por %p39, %p40
    %p42 = scmp.ne.s32.totalorder %s34, %s37
    %p43 = scmp.eq.s32.totalorder %s10, 0
    %p44 = por %p42, %p43
    %p45 = scmp.ne.s32.totalorder %s34, %s37
    %p46 = scmp.eq.s32.totalorder %s15, 1
    %p47 = por %p45, %p46
    %p48 = scmp.ne.s32.totalorder %s37, %s38
    %p49 = scmp.eq.s32.totalorder %s15, 0
    %p50 = por %p48, %p49
    %p51 = scmp.ne.s32.totalorder %s37, %s38
    %p52 = scmp.eq.s32.totalorder %s16, 1
    %p53 = por %p51, %p52
    %p55 = scmp.ne.s32.totalorder %s38, %s54
    %p56 = scmp.eq.s32.totalorder %s16, 0
    %p57 = por %p55, %p56
    %s59 = sadd.s32 %s58, 1
    %p62 = scmp.eq.s32.totalorder %s10, 1
    %p63 = scmp.ne.s32.totalorder %s58, %s60
    %p64 = scmp.eq.s32.totalorder %s10, 0
    %p65 = por %p63, %p64
    %p66 = scmp.ne.s32.totalorder %s58, %s60
    %p67 = scmp.eq.s32.totalorder %s15, 1
    %p68 = por %p66, %p67
    %p69 = scmp.ne.s32.totalorder %s60, %s61
    %p70 = scmp.eq.s32.totalorder %s15, 0
    %p71 = por %p69, %p70
    %p72 = scmp.ne.s32.totalorder %s60, %s61
    %p73 = scmp.eq.s32.totalorder %s16, 1
    %p74 = por %p72, %p73
    %p76 = scmp.ne.s32.totalorder %s61, %s75
    %p77 = scmp.eq.s32.totalorder %s16, 0
    %p78 = por %p76, %p77
    %s79 = ssub.s32 %s17, %s29
    %p80 = scmp.eq.s32.totalorder %s79, 0
    %s82 = sadd.s32 %s81, 1
    %s83 = scalar_select %p80, %s81, %s82
    %p86 = pneg %p80
    %p87 = scmp.eq.s32.totalorder %s10, 1
    %p88 = por %p86, %p87
    %p89 = scmp.ne.s32.totalorder %s81, %s84
    %p90 = scmp.eq.s32.totalorder %s10, 0
    %p91 = por %p89, %p90
    %p92 = scmp.ne.s32.totalorder %s81, %s84
    %p93 = scmp.eq.s32.totalorder %s15, 1
    %p94 = por %p92, %p93
    %p95 = scmp.ne.s32.totalorder %s84, %s85
    %p96 = scmp.eq.s32.totalorder %s15, 0
    %p97 = por %p95, %p96
    %p98 = scmp.ne.s32.totalorder %s84, %s85
    %p99 = scmp.eq.s32.totalorder %s16, 1
    %p100 = por %p98, %p99
    %p102 = scmp.ne.s32.totalorder %s85, %s101
    %p103 = scmp.eq.s32.totalorder %s16, 0
    %p104 = por %p102, %p103
    %s105 = ssub.s32 %s17, %s29
    %p106 = scmp.eq.s32.totalorder %s105, 0
    %s108 = sadd.s32 %s107, 1
    %s109 = scalar_select %p106, %s107, %s108
    %p112 = pneg %p106
    %p113 = scmp.eq.s32.totalorder %s10, 1
    %p114 = por %p112, %p113
    %p115 = scmp.ne.s32.totalorder %s107, %s110
    %p116 = scmp.eq.s32.totalorder %s10, 0
    %p117 = por %p115, %p116
    %p118 = scmp.ne.s32.totalorder %s107, %s110
    %p119 = scmp.eq.s32.totalorder %s15, 1
    %p120 = por %p118, %p119
    %p121 = scmp.ne.s32.totalorder %s110, %s111
    %p122 = scmp.eq.s32.totalorder %s15, 0
    %p123 = por %p121, %p122
    %p124 = scmp.ne.s32.totalorder %s110, %s111
    %p125 = scmp.eq.s32.totalorder %s16, 1
    %p126 = por %p124, %p125
    %p128 = scmp.ne.s32.totalorder %s111, %s127
    %p129 = scmp.eq.s32.totalorder %s16, 0
    %p130 = por %p128, %p129
    %p131 = scmp.le.s32.totalorder 1, %s10
    %p132 = scmp.lt.s32.totalorder %s10, 3
    %p133 = pnand %p131, %p132
    %p134 = pneg %p133
    // Predicated region
    $region9: #{prediction_mlp.2} parent=5 // pred_check
      _
    $region10: #{prediction_mlp.2} parent=5 // pred_check_branch
      %136 = sbr.rel (%p133) target = $region12
    $region11: #{prediction_mlp.2} parent=5 // pred_region
      %s137 = ssub.s32 %s10, 1
      // Predicated region
      $region13: #{prediction_mlp.2} parent=11 // pred_check
        %p138 = pneg %p71
      $region14: #{prediction_mlp.2} parent=11 // pred_check_branch
        %140 = sbr.rel (%p138) target = $region16
      $region15: #{prediction_mlp.2} parent=11 // pred_region
        _
      $region16: #{prediction_mlp.2} parent=11 // pred_fallthru
        _
    $region12: #{prediction_mlp.2} parent=5 // pred_fallthru
      _
    %p141 = scmp.lt.s32.totalorder %s10, 2
    // Predicated region
    $region17: #{prediction_mlp.2} parent=5 // pred_check
      %p142 = pneg %p141
    $region18: #{prediction_mlp.2} parent=5 // pred_check_branch
      %144 = sbr.rel (%p142) target = $region20
    $region19: #{prediction_mlp.2} parent=5 // pred_region
      // Predicated region
      $region21: #{prediction_mlp.2} parent=19 // pred_check
        %p145 = pneg %p44
      $region22: #{prediction_mlp.2} parent=19 // pred_check_branch
        %147 = sbr.rel (%p145) target = $region24
      $region23: #{prediction_mlp.2} parent=19 // pred_region
        %s148 = sadd.s32 %s17, %s18
        %s149 = smul.u32 16, %s148
        %p150 = scmp.lt.s32.totalorder %s149, 31
        %s151 = scalar_select %p150, %s149, 31
        %s152 = smul.addr %s151, 8
        %s153 = scalar_lea.vmem %s0, %s152
        %s154 = sadd.s32 %s17, %s18
        %s155 = smul.u32 16, %s154
      $region24: #{prediction_mlp.2} parent=19 // pred_fallthru
        _
    $region20: #{prediction_mlp.2} parent=5 // pred_fallthru
      _
    %p156 = scmp.le.s32.totalorder 1, %s10
    %p157 = scmp.lt.s32.totalorder %s10, 3
    %p158 = pnand %p156, %p157
    %p159 = pneg %p158
    // Predicated region
    $region25: #{prediction_mlp.2} parent=5 // pred_check
      _
    $region26: #{prediction_mlp.2} parent=5 // pred_check_branch
      %161 = sbr.rel (%p158) target = $region28
    $region27: #{prediction_mlp.2} parent=5 // pred_region
      %s162 = ssub.s32 %s10, 1
      %s163 = sadd.s32 %s19, %s20
      %s164 = smul.u32 16, %s163
      %p165 = scmp.lt.s32.totalorder %s164, 31
      %s166 = scalar_select %p165, %s164, 31
      %s167 = smul.addr %s166, 8
      %s168 = scalar_lea.vmem %s0, %s167
      %p169 = pneg %p50
      %p170 = pneg %p47
      %p171 = pneg %p71
      %p172 = pneg %p68
      %p173 = pneg %p97
      %p174 = pneg %p94
      %p175 = scmp.lt.s32.totalorder %s19, 1
      %s176 = scalar_select %p175, %s19, 1
      %s177 = smul.addr %s176, 2
      %s178 = scalar_lea.vmem %s2, %s177
      %p179 = pneg %p123
      %p180 = pneg %p120
      %p181 = scmp.lt.s32.totalorder %s19, 1
      %s182 = scalar_select %p181, %s19, 1
      %s183 = smul.addr %s182, 2
      %s184 = scalar_lea.vmem %s3, %s183
      %s185 = sadd.s32 %s19, %s20
      %s186 = smul.u32 16, %s185
      %p187 = scmp.lt.s32.totalorder %s186, 31
      %s188 = scalar_select %p187, %s186, 31
      %s189 = smul.addr %s188, 8
      %s190 = scalar_lea.vmem %s0, %s189
      %s191 = sadd.s32 %s19, %s20
      %s192 = smul.u32 16, %s191
      %p193 = scmp.lt.s32.totalorder %s19, 1
      %s194 = scalar_select %p193, %s19, 1
      %s195 = smul.addr %s194, 2
      %s196 = scalar_lea.vmem %s2, %s195
      %p197 = scmp.lt.s32.totalorder %s19, 1
      %s198 = scalar_select %p197, %s19, 1
      %s199 = smul.addr %s198, 2
      %s200 = scalar_lea.vmem %s3, %s199
      %p201 = scmp.eq.s32.totalorder %s20, 0
      // Predicated region
      $region29: #{prediction_mlp.2} parent=27 // pred_check
        %p202 = pneg %p201
      $region30: #{prediction_mlp.2} parent=27 // pred_check_branch
        %204 = sbr.rel (%p202) target = $region32
      $region31: #{prediction_mlp.2} parent=27 // pred_region
        %v205 = vlaneseq
        %vm206 = vcmp.ge.s32.totalorder %v205, 0
        %vm207 = vcmp.lt.s32.totalorder %v205, 256
        %vm208 = vmand %vm206, %vm207
        %209 = vst.msk [vmem:[%s196] sm:$0x3] %vm208, 0.0
        %210 = vst.msk [vmem:[%s200] sm:$0x3] %vm208, 0.0
      $region32: #{prediction_mlp.2} parent=27 // pred_fallthru
        _
      %v211 = vld [vmem:[%s190] sm:$0xff]
      %v212 = vld [vmem:[%s190 + $0x8] sm:$0xff]
      %v213 = vld [vmem:[%s190 + $0x10] sm:$0xff]
      %v214 = vld [vmem:[%s190 + $0x18] sm:$0xff]
      %v215 = vld [vmem:[%s190 + $0x20] sm:$0xff]
      %v216 = vld [vmem:[%s190 + $0x28] sm:$0xff]
      %v217 = vld [vmem:[%s190 + $0x30] sm:$0xff]
      %v218 = vld [vmem:[%s190 + $0x38] sm:$0xff]
      %v219 = vld [vmem:[%s190 + $0x40] sm:$0xff]
      %v220 = vld [vmem:[%s190 + $0x48] sm:$0xff]
      %v221 = vld [vmem:[%s190 + $0x50] sm:$0xff]
      %v222 = vld [vmem:[%s190 + $0x58] sm:$0xff]
      %v223 = vld [vmem:[%s190 + $0x60] sm:$0xff]
      %v224 = vld [vmem:[%s190 + $0x68] sm:$0xff]
      %v225 = vld [vmem:[%s190 + $0x70] sm:$0xff]
      %v226 = vld [vmem:[%s190 + $0x78] sm:$0xff]
      %v227 = vpack.c.bf16 %v212, %v211
      %v228 = vpack.c.bf16 %v214, %v213
      %v229 = vpack.c.bf16 %v216, %v215
      %v230 = vpack.c.bf16 %v218, %v217
      %v231 = vpack.c.bf16 %v220, %v219
      %v232 = vpack.c.bf16 %v222, %v221
      %v233 = vpack.c.bf16 %v224, %v223
      %v234 = vpack.c.bf16 %v226, %v225
      %v235 = vld [vmem:[%s1] sm:$0xff]
      %v236 = vld [vmem:[%s1 + $0x8] sm:$0xff]
      %v237 = vld [vmem:[%s1 + $0x10] sm:$0xff]
      %v238 = vld [vmem:[%s1 + $0x18] sm:$0xff]
      %v239 = vld [vmem:[%s1 + $0x20] sm:$0xff]
      %v240 = vld [vmem:[%s1 + $0x28] sm:$0xff]
      %v241 = vld [vmem:[%s1 + $0x30] sm:$0xff]
      %v242 = vld [vmem:[%s1 + $0x38] sm:$0xff]
      %v243 = vld [vmem:[%s1 + $0x40] sm:$0xff]
      %v244 = vld [vmem:[%s1 + $0x48] sm:$0xff]
      %v245 = vld [vmem:[%s1 + $0x50] sm:$0xff]
      %v246 = vld [vmem:[%s1 + $0x58] sm:$0xff]
      %v247 = vld [vmem:[%s1 + $0x60] sm:$0xff]
      %v248 = vld [vmem:[%s1 + $0x68] sm:$0xff]
      %v249 = vld [vmem:[%s1 + $0x70] sm:$0xff]
      %v250 = vld [vmem:[%s1 + $0x78] sm:$0xff]
      %v267 = vunpack.c.l.b16 %v235
      %v268 = vunpack.c.h.b16 %v235
      %v269 = vunpack.c.l.b16 %v236
      %v270 = vunpack.c.h.b16 %v236
      %v271 = vunpack.c.l.b16 %v237
      %v272 = vunpack.c.h.b16 %v237
      %v273 = vunpack.c.l.b16 %v238
      %v274 = vunpack.c.h.b16 %v238
      %v275 = vunpack.c.l.b16 %v239
      %v276 = vunpack.c.h.b16 %v239
      %v277 = vunpack.c.l.b16 %v240
      %v278 = vunpack.c.h.b16 %v240
      %v279 = vunpack.c.l.b16 %v241
      %v280 = vunpack.c.h.b16 %v241
      %v281 = vunpack.c.l.b16 %v242
      %v282 = vunpack.c.h.b16 %v242
      %v283 = vunpack.c.l.b16 %v243
      %v284 = vunpack.c.h.b16 %v243
      %v285 = vunpack.c.l.b16 %v244
      %v286 = vunpack.c.h.b16 %v244
      %v287 = vunpack.c.l.b16 %v245
      %v288 = vunpack.c.h.b16 %v245
      %v289 = vunpack.c.l.b16 %v246
      %v290 = vunpack.c.h.b16 %v246
      %v291 = vunpack.c.l.b16 %v247
      %v292 = vunpack.c.h.b16 %v247
      %v293 = vunpack.c.l.b16 %v248
      %v294 = vunpack.c.h.b16 %v248
      %v295 = vunpack.c.l.b16 %v249
      %v296 = vunpack.c.h.b16 %v249
      %v297 = vunpack.c.l.b16 %v250
      %v298 = vunpack.c.h.b16 %v250
      %v299 = vpack.c.b16 %v269, %v267
      %v300 = vpack.c.b16 %v270, %v268
      %v301 = vpack.c.b16 %v273, %v271
      %v302 = vpack.c.b16 %v274, %v272
      %v303 = vpack.c.b16 %v277, %v275
      %v304 = vpack.c.b16 %v278, %v276
      %v305 = vpack.c.b16 %v281, %v279
      %v306 = vpack.c.b16 %v282, %v280
      %v307 = vpack.c.b16 %v285, %v283
      %v308 = vpack.c.b16 %v286, %v284
      %v309 = vpack.c.b16 %v289, %v287
      %v310 = vpack.c.b16 %v290, %v288
      %v311 = vpack.c.b16 %v293, %v291
      %v312 = vpack.c.b16 %v294, %v292
      %v313 = vpack.c.b16 %v297, %v295
      %v314 = vpack.c.b16 %v298, %v296
      %331 = vmatpush.bf16.msra.mxu0 %v313
      %332 = vmatpush.bf16.msra.mxu0 %v311
      %333 = vmatpush.bf16.msra.mxu0 %v309
      %334 = vmatpush.bf16.msra.mxu0 %v307
      %335 = vmatpush.bf16.msra.mxu0 %v305
      %336 = vmatpush.bf16.msra.mxu0 %v303
      %337 = vmatpush.bf16.msra.mxu0 %v301
      %338 = vmatpush.bf16.msra.mxu0 %v299
      %339 = vmatmul.bf16.gmra.mxu0 %v227
      %v340 = vpop.f32.mrf.mxu0
      %v341 = vadd.f32 0.0, %v340
      %v342 = vpop.f32.mrf.mxu0
      %v343 = vadd.f32 0.0, %v342
      %344 = vmatmul.bf16.gmra.mxu0 %v228
      %v345 = vpop.f32.mrf.mxu0
      %v346 = vadd.f32 0.0, %v345
      %v347 = vpop.f32.mrf.mxu0
      %v348 = vadd.f32 0.0, %v347
      %349 = vmatmul.bf16.gmra.mxu0 %v229
      %v350 = vpop.f32.mrf.mxu0
      %v351 = vadd.f32 0.0, %v350
      %v352 = vpop.f32.mrf.mxu0
      %v353 = vadd.f32 0.0, %v352
      %354 = vmatmul.bf16.gmra.mxu0 %v230
      %v355 = vpop.f32.mrf.mxu0
      %v356 = vadd.f32 0.0, %v355
      %v357 = vpop.f32.mrf.mxu0
      %v358 = vadd.f32 0.0, %v357
      %359 = vmatmul.bf16.gmra.mxu0 %v231
      %v360 = vpop.f32.mrf.mxu0
      %v361 = vadd.f32 0.0, %v360
      %v362 = vpop.f32.mrf.mxu0
      %v363 = vadd.f32 0.0, %v362
      %364 = vmatmul.bf16.gmra.mxu0 %v232
      %v365 = vpop.f32.mrf.mxu0
      %v366 = vadd.f32 0.0, %v365
      %v367 = vpop.f32.mrf.mxu0
      %v368 = vadd.f32 0.0, %v367
      %369 = vmatmul.bf16.gmra.mxu0 %v233
      %v370 = vpop.f32.mrf.mxu0
      %v371 = vadd.f32 0.0, %v370
      %v372 = vpop.f32.mrf.mxu0
      %v373 = vadd.f32 0.0, %v372
      %374 = vmatmul.bf16.gmra.mxu0 %v234
      %v375 = vpop.f32.mrf.mxu0
      %v376 = vadd.f32 0.0, %v375
      %v377 = vpop.f32.mrf.mxu0
      %v378 = vadd.f32 0.0, %v377
      %379 = vdwg.mxu0
      %380 = vmatpush.bf16.msra.mxu0 %v314
      %381 = vmatpush.bf16.msra.mxu0 %v312
      %382 = vmatpush.bf16.msra.mxu0 %v310
      %383 = vmatpush.bf16.msra.mxu0 %v308
      %384 = vmatpush.bf16.msra.mxu0 %v306
      %385 = vmatpush.bf16.msra.mxu0 %v304
      %386 = vmatpush.bf16.msra.mxu0 %v302
      %387 = vmatpush.bf16.msra.mxu0 %v300
      %388 = vmatmul.bf16.gmra.mxu0 %v227
      %v389 = vpop.f32.mrf.mxu0
      %v390 = vadd.f32 0.0, %v389
      %v391 = vpop.f32.mrf.mxu0
      %v392 = vadd.f32 0.0, %v391
      %393 = vmatmul.bf16.gmra.mxu0 %v228
      %v394 = vpop.f32.mrf.mxu0
      %v395 = vadd.f32 0.0, %v394
      %v396 = vpop.f32.mrf.mxu0
      %v397 = vadd.f32 0.0, %v396
      %398 = vmatmul.bf16.gmra.mxu0 %v229
      %v399 = vpop.f32.mrf.mxu0
      %v400 = vadd.f32 0.0, %v399
      %v401 = vpop.f32.mrf.mxu0
      %v402 = vadd.f32 0.0, %v401
      %403 = vmatmul.bf16.gmra.mxu0 %v230
      %v404 = vpop.f32.mrf.mxu0
      %v405 = vadd.f32 0.0, %v404
      %v406 = vpop.f32.mrf.mxu0
      %v407 = vadd.f32 0.0, %v406
      %408 = vmatmul.bf16.gmra.mxu0 %v231
      %v409 = vpop.f32.mrf.mxu0
      %v410 = vadd.f32 0.0, %v409
      %v411 = vpop.f32.mrf.mxu0
      %v412 = vadd.f32 0.0, %v411
      %413 = vmatmul.bf16.gmra.mxu0 %v232
      %v414 = vpop.f32.mrf.mxu0
      %v415 = vadd.f32 0.0, %v414
      %v416 = vpop.f32.mrf.mxu0
      %v417 = vadd.f32 0.0, %v416
      %418 = vmatmul.bf16.gmra.mxu0 %v233
      %v419 = vpop.f32.mrf.mxu0
      %v420 = vadd.f32 0.0, %v419
      %v421 = vpop.f32.mrf.mxu0
      %v422 = vadd.f32 0.0, %v421
      %423 = vmatmul.bf16.gmra.mxu0 %v234
      %v424 = vpop.f32.mrf.mxu0
      %v425 = vadd.f32 0.0, %v424
      %v426 = vpop.f32.mrf.mxu0
      %v427 = vadd.f32 0.0, %v426
      %428 = vdwg.mxu0
      %v429 = vld [vmem:[%s196] sm:$0x3]
      %v430 = vadd.f32 %v341, %v343
      %v431 = vadd.f32 %v430, %v346
      %v432 = vadd.f32 %v431, %v348
      %v433 = vadd.f32 %v432, %v351
      %v434 = vadd.f32 %v433, %v353
      %v435 = vadd.f32 %v434, %v356
      %v436 = vadd.f32 %v435, %v358
      %v437 = vadd.f32 %v436, %v361
      %v438 = vadd.f32 %v437, %v363
      %v439 = vadd.f32 %v438, %v366
      %v440 = vadd.f32 %v439, %v368
      %v441 = vadd.f32 %v440, %v371
      %v442 = vadd.f32 %v441, %v373
      %v443 = vadd.f32 %v442, %v376
      %v444 = vadd.f32 %v443, %v378
      %v445 = vrot.slane %v444, 4
      %v446 = vadd.f32 %v444, %v445
      %v447 = vrot.slane %v446, 2
      %v448 = vadd.f32 %v446, %v447
      %v449 = vrot.slane %v448, 1
      %v450 = vadd.f32 %v448, %v449
      %v451 = vadd.f32 %v390, %v392
      %v452 = vadd.f32 %v451, %v395
      %v453 = vadd.f32 %v452, %v397
      %v454 = vadd.f32 %v453, %v400
      %v455 = vadd.f32 %v454, %v402
      %v456 = vadd.f32 %v455, %v405
      %v457 = vadd.f32 %v456, %v407
      %v458 = vadd.f32 %v457, %v410
      %v459 = vadd.f32 %v458, %v412
      %v460 = vadd.f32 %v459, %v415
      %v461 = vadd.f32 %v460, %v417
      %v462 = vadd.f32 %v461, %v420
      %v463 = vadd.f32 %v462, %v422
      %v464 = vadd.f32 %v463, %v425
      %v465 = vadd.f32 %v464, %v427
      %v466 = vrot.slane %v465, 4
      %v467 = vadd.f32 %v465, %v466
      %v468 = vrot.slane %v467, 2
      %v469 = vadd.f32 %v467, %v468
      %v470 = vrot.slane %v469, 1
      %v471 = vadd.f32 %v469, %v470
      %v474 = vrot.slane %v471, 7
      %vm475 = vcmask 1040384
      %v476 = vsel %vm475, %v450, %v474
      %v478 = vadd.f32 %v429, %v476
      %v479 = vlaneseq
      %vm480 = vcmp.ge.s32.totalorder %v479, 0
      %vm481 = vcmp.lt.s32.totalorder %v479, 256
      %vm482 = vmand %vm480, %vm481
      %483 = vst.msk [vmem:[%s196] sm:$0x3] %vm482, %v478
      %v484 = vld [vmem:[%s200] sm:$0x3]
      %v485 = vmul.f32 %v341, %v341
      %v486 = vmul.f32 %v390, %v390
      %v487 = vmul.f32 %v343, %v343
      %v488 = vmul.f32 %v392, %v392
      %v489 = vmul.f32 %v346, %v346
      %v490 = vmul.f32 %v395, %v395
      %v491 = vmul.f32 %v348, %v348
      %v492 = vmul.f32 %v397, %v397
      %v493 = vmul.f32 %v351, %v351
      %v494 = vmul.f32 %v400, %v400
      %v495 = vmul.f32 %v353, %v353
      %v496 = vmul.f32 %v402, %v402
      %v497 = vmul.f32 %v356, %v356
      %v498 = vmul.f32 %v405, %v405
      %v499 = vmul.f32 %v358, %v358
      %v500 = vmul.f32 %v407, %v407
      %v501 = vmul.f32 %v361, %v361
      %v502 = vmul.f32 %v410, %v410
      %v503 = vmul.f32 %v363, %v363
      %v504 = vmul.f32 %v412, %v412
      %v505 = vmul.f32 %v366, %v366
      %v506 = vmul.f32 %v415, %v415
      %v507 = vmul.f32 %v368, %v368
      %v508 = vmul.f32 %v417, %v417
      %v509 = vmul.f32 %v371, %v371
      %v510 = vmul.f32 %v420, %v420
      %v511 = vmul.f32 %v373, %v373
      %v512 = vmul.f32 %v422, %v422
      %v513 = vmul.f32 %v376, %v376
      %v514 = vmul.f32 %v425, %v425
      %v515 = vmul.f32 %v378, %v378
      %v516 = vmul.f32 %v427, %v427
      %v517 = vadd.f32 %v485, %v487
      %v518 = vadd.f32 %v517, %v489
      %v519 = vadd.f32 %v518, %v491
      %v520 = vadd.f32 %v519, %v493
      %v521 = vadd.f32 %v520, %v495
      %v522 = vadd.f32 %v521, %v497
      %v523 = vadd.f32 %v522, %v499
      %v524 = vadd.f32 %v523, %v501
      %v525 = vadd.f32 %v524, %v503
      %v526 = vadd.f32 %v525, %v505
      %v527 = vadd.f32 %v526, %v507
      %v528 = vadd.f32 %v527, %v509
      %v529 = vadd.f32 %v528, %v511
      %v530 = vadd.f32 %v529, %v513
      %v531 = vadd.f32 %v530, %v515
      %v532 = vrot.slane %v531, 4
      %v533 = vadd.f32 %v531, %v532
      %v534 = vrot.slane %v533, 2
      %v535 = vadd.f32 %v533, %v534
      %v536 = vrot.slane %v535, 1
      %v537 = vadd.f32 %v535, %v536
      %v538 = vadd.f32 %v486, %v488
      %v539 = vadd.f32 %v538, %v490
      %v540 = vadd.f32 %v539, %v492
      %v541 = vadd.f32 %v540, %v494
      %v542 = vadd.f32 %v541, %v496
      %v543 = vadd.f32 %v542, %v498
      %v544 = vadd.f32 %v543, %v500
      %v545 = vadd.f32 %v544, %v502
      %v546 = vadd.f32 %v545, %v504
      %v547 = vadd.f32 %v546, %v506
      %v548 = vadd.f32 %v547, %v508
      %v549 = vadd.f32 %v548, %v510
      %v550 = vadd.f32 %v549, %v512
      %v551 = vadd.f32 %v550, %v514
      %v552 = vadd.f32 %v551, %v516
      %v553 = vrot.slane %v552, 4
      %v554 = vadd.f32 %v552, %v553
      %v555 = vrot.slane %v554, 2
      %v556 = vadd.f32 %v554, %v555
      %v557 = vrot.slane %v556, 1
      %v558 = vadd.f32 %v556, %v557
      %v561 = vrot.slane %v558, 7
      %v562 = vsel %vm475, %v537, %v561
      %v564 = vadd.f32 %v484, %v562
      %565 = vst.msk [vmem:[%s200] sm:$0x3] %vm482, %v564
      %p566 = scmp.lt.s32.totalorder %s19, 1
      %s567 = scalar_select %p566, %s19, 1
      %s568 = smul.addr %s567, 2
      %s569 = scalar_lea.vmem %s2, %s568
      %p570 = scmp.lt.s32.totalorder %s19, 1
      %s571 = scalar_select %p570, %s19, 1
      %s572 = smul.addr %s571, 2
      %s573 = scalar_lea.vmem %s3, %s572
      // Predicated region
      $region33: #{prediction_mlp.2} parent=27 // pred_check
        %p574 = pneg %p94
      $region34: #{prediction_mlp.2} parent=27 // pred_check_branch
        %576 = sbr.rel (%p574) target = $region36
      $region35: #{prediction_mlp.2} parent=27 // pred_region
        _
      $region36: #{prediction_mlp.2} parent=27 // pred_fallthru
        _
      // Predicated region
      $region37: #{prediction_mlp.2} parent=27 // pred_check
        %p577 = pneg %p120
      $region38: #{prediction_mlp.2} parent=27 // pred_check_branch
        %579 = sbr.rel (%p577) target = $region40
      $region39: #{prediction_mlp.2} parent=27 // pred_region
        _
      $region40: #{prediction_mlp.2} parent=27 // pred_fallthru
        _
    $region28: #{prediction_mlp.2} parent=5 // pred_fallthru
      _
    %p580 = scmp.le.s32.totalorder 2, %s10
    // Predicated region
    $region41: #{prediction_mlp.2} parent=5 // pred_check
      %p581 = pneg %p580
    $region42: #{prediction_mlp.2} parent=5 // pred_check_branch
      %583 = sbr.rel (%p581) target = $region44
    $region43: #{prediction_mlp.2} parent=5 // pred_region
      %s584 = ssub.s32 %s10, 2
      // Predicated region
      $region45: #{prediction_mlp.2} parent=43 // pred_check
        %p585 = pneg %p100
      $region46: #{prediction_mlp.2} parent=43 // pred_check_branch
        %587 = sbr.rel (%p585) target = $region48
      $region47: #{prediction_mlp.2} parent=43 // pred_region
        %p588 = scmp.lt.s32.totalorder %s21, 1
        %s589 = scalar_select %p588, %s21, 1
        %s590 = smul.addr %s589, 2
        %s591 = scalar_lea.vmem %s2, %s590
      $region48: #{prediction_mlp.2} parent=43 // pred_fallthru
        _
      // Predicated region
      $region49: #{prediction_mlp.2} parent=43 // pred_check
        %p592 = pneg %p126
      $region50: #{prediction_mlp.2} parent=43 // pred_check_branch
        %594 = sbr.rel (%p592) target = $region52
      $region51: #{prediction_mlp.2} parent=43 // pred_region
        %p595 = scmp.lt.s32.totalorder %s21, 1
        %s596 = scalar_select %p595, %s21, 1
        %s597 = smul.addr %s596, 2
        %s598 = scalar_lea.vmem %s3, %s597
      $region52: #{prediction_mlp.2} parent=43 // pred_fallthru
        _
    $region44: #{prediction_mlp.2} parent=5 // pred_fallthru
      _
  $region6: #{prediction_mlp.2} parent=0 // loop_footer
    %s14 = sadd.s32 1, %s10
  $region7: #{prediction_mlp.2} parent=0 // loop_footer_branch
    %9 = sbr.rel target = $region3
  $region8: #{prediction_mlp.2} parent=0 // loop_exit
    _

// kernel: prediction_mlp.3
$region0: #{prediction_mlp.3}
  #allocation0 [shape = 'u32[]', space=smem, size = 0x4, offset = 0x4, fixed_abs, tag = 'smem constant byte address 0x4 - core index']
  #allocation1 [shape = 'u32[72,128]{1,0:T(1,128)}', space=vmem, size = 0x9000, scoped, tag = 'internal scratch']
  %s0 = inlined_call_operand.vmem [shape: f32[256,128], index: 0, kind: input, shape index: {}]
  %s1 = inlined_call_operand.vmem [shape: bf16[128,256], index: 1, kind: input, shape index: {}]
  %s2 = inlined_call_operand.vmem [shape: f32[1,256], index: 2, kind: input, shape index: {}]
  %s3 = inlined_call_operand.vmem [shape: f32[1,256], index: 3, kind: input, shape index: {}]
  %s4 = inlined_call_operand.vmem [shape: bf16[256,128], index: 4, kind: input, shape index: {}]
  %s5 = inlined_call_operand.vmem [shape: f32[1,128], index: 5, kind: input, shape index: {}]
  %s6 = inlined_call_operand.hbm [shape: f32[256,128], index: 6, kind: output, shape index: {}]
  %s7 = sld [smem:[#allocation0]]
  $region57: #{prediction_mlp.3} parent=0
    _
  %s9 = ssub.s32 1, %s7
  %s10 = scalar_select 0, %s9, %s7
  $region1: #{prediction_mlp.3} parent=0
    #allocation2 [shape = 'u8[131072]{0}', space=vmem, size = 0x20000, scoped, tag = 'output window, operand 0']
    #allocation3 [shape = 's32[2]{0}', space=sflag, size = 0x8, scoped, tag = 'scoped memory for prediction_mlp.3']
    %11 = vsyncpa [#allocation3], 0
    %s12 = scalar_lea.sflag [#allocation3], 1
    %13 = vsyncpa %s12, 0
    loop: start=0, step=1, limit=4
    $region2: #{prediction_mlp.3} parent=1 // loop_pre_header
      _
    $region3: #{prediction_mlp.3} parent=1 // loop_header
      %s15 = sphi 0, %s19
      %p16 = scmp.ge.s32.totalorder %s15, 4
      %s25 = sphi 0, %s27
      %s28 = sphi 0, %s25
      %s29 = sphi 0, %s28
      %s45 = sphi 0, %s29
      %s49 = sphi 0, %s49
      %s51 = sphi 0, %s49
      %s52 = sphi 0, %s51
      %s66 = sphi 0, %s52
      %s70 = sphi 0, %s70
      %s72 = sphi 0, %s70
      %s73 = sphi 0, %s72
      %s87 = sphi 0, %s73
      %s91 = sphi 0, %s91
      %s93 = sphi 0, %s91
      %s94 = sphi 0, %s93
      %s108 = sphi 0, %s94
      %s112 = sphi 0, %s112
      %s114 = sphi 0, %s112
      %s115 = sphi 0, %s114
      %s129 = sphi 0, %s115
      %s133 = sphi 0, %s133
      %s135 = sphi 0, %s133
      %s136 = sphi 0, %s135
      %s150 = sphi 0, %s136
      %s156 = sphi 0, %s158
      %s159 = sphi 0, %s156
      %s160 = sphi 0, %s159
      %s176 = sphi 0, %s160
    $region4: #{prediction_mlp.3} parent=1 // loop_header_branch
      %18 = sbr.rel (%p16) target = $region8
    $region5: #{prediction_mlp.3} parent=1 // loop_body
      %s20 = ssub.s32 %s15, 1
      %s21 = ssub.s32 %s15, 2
      %s22 = sadd.s32 %s15, 1
      %s23 = ssub.s32 %s15, %s22
      %p24 = scmp.eq.s32.totalorder %s23, 0
      %s26 = sadd.s32 %s25, 1
      %s27 = scalar_select %p24, %s25, %s26
      %p30 = pneg %p24
      %p31 = scmp.eq.s32.totalorder %s15, 1
      %p32 = por %p30, %p31
      %p33 = scmp.ne.s32.totalorder %s25, %s28
      %p34 = scmp.eq.s32.totalorder %s15, 0
      %p35 = por %p33, %p34
      %p36 = scmp.ne.s32.totalorder %s25, %s28
      %p37 = scmp.eq.s32.totalorder %s20, 1
      %p38 = por %p36, %p37
      %p39 = scmp.ne.s32.totalorder %s28, %s29
      %p40 = scmp.eq.s32.totalorder %s20, 0
      %p41 = por %p39, %p40
      %p42 = scmp.ne.s32.totalorder %s28, %s29
      %p43 = scmp.eq.s32.totalorder %s21, 1
      %p44 = por %p42, %p43
      %p46 = scmp.ne.s32.totalorder %s29, %s45
      %p47 = scmp.eq.s32.totalorder %s21, 0
      %p48 = por %p46, %p47
      %s50 = sadd.s32 %s49, 1
      %p53 = scmp.eq.s32.totalorder %s15, 1
      %p54 = scmp.ne.s32.totalorder %s49, %s51
      %p55 = scmp.eq.s32.totalorder %s15, 0
      %p56 = por %p54, %p55
      %p57 = scmp.ne.s32.totalorder %s49, %s51
      %p58 = scmp.eq.s32.totalorder %s20, 1
      %p59 = por %p57, %p58
      %p60 = scmp.ne.s32.totalorder %s51, %s52
      %p61 = scmp.eq.s32.totalorder %s20, 0
      %p62 = por %p60, %p61
      %p63 = scmp.ne.s32.totalorder %s51, %s52
      %p64 = scmp.eq.s32.totalorder %s21, 1
      %p65 = por %p63, %p64
      %p67 = scmp.ne.s32.totalorder %s52, %s66
      %p68 = scmp.eq.s32.totalorder %s21, 0
      %p69 = por %p67, %p68
      %s71 = sadd.s32 %s70, 1
      %p74 = scmp.eq.s32.totalorder %s15, 1
      %p75 = scmp.ne.s32.totalorder %s70, %s72
      %p76 = scmp.eq.s32.totalorder %s15, 0
      %p77 = por %p75, %p76
      %p78 = scmp.ne.s32.totalorder %s70, %s72
      %p79 = scmp.eq.s32.totalorder %s20, 1
      %p80 = por %p78, %p79
      %p81 = scmp.ne.s32.totalorder %s72, %s73
      %p82 = scmp.eq.s32.totalorder %s20, 0
      %p83 = por %p81, %p82
      %p84 = scmp.ne.s32.totalorder %s72, %s73
      %p85 = scmp.eq.s32.totalorder %s21, 1
      %p86 = por %p84, %p85
      %p88 = scmp.ne.s32.totalorder %s73, %s87
      %p89 = scmp.eq.s32.totalorder %s21, 0
      %p90 = por %p88, %p89
      %s92 = sadd.s32 %s91, 1
      %p95 = scmp.eq.s32.totalorder %s15, 1
      %p96 = scmp.ne.s32.totalorder %s91, %s93
      %p97 = scmp.eq.s32.totalorder %s15, 0
      %p98 = por %p96, %p97
      %p99 = scmp.ne.s32.totalorder %s91, %s93
      %p100 = scmp.eq.s32.totalorder %s20, 1
      %p101 = por %p99, %p100
      %p102 = scmp.ne.s32.totalorder %s93, %s94
      %p103 = scmp.eq.s32.totalorder %s20, 0
      %p104 = por %p102, %p103
      %p105 = scmp.ne.s32.totalorder %s93, %s94
      %p106 = scmp.eq.s32.totalorder %s21, 1
      %p107 = por %p105, %p106
      %p109 = scmp.ne.s32.totalorder %s94, %s108
      %p110 = scmp.eq.s32.totalorder %s21, 0
      %p111 = por %p109, %p110
      %s113 = sadd.s32 %s112, 1
      %p116 = scmp.eq.s32.totalorder %s15, 1
      %p117 = scmp.ne.s32.totalorder %s112, %s114
      %p118 = scmp.eq.s32.totalorder %s15, 0
      %p119 = por %p117, %p118
      %p120 = scmp.ne.s32.totalorder %s112, %s114
      %p121 = scmp.eq.s32.totalorder %s20, 1
      %p122 = por %p120, %p121
      %p123 = scmp.ne.s32.totalorder %s114, %s115
      %p124 = scmp.eq.s32.totalorder %s20, 0
      %p125 = por %p123, %p124
      %p126 = scmp.ne.s32.totalorder %s114, %s115
      %p127 = scmp.eq.s32.totalorder %s21, 1
      %p128 = por %p126, %p127
      %p130 = scmp.ne.s32.totalorder %s115, %s129
      %p131 = scmp.eq.s32.totalorder %s21, 0
      %p132 = por %p130, %p131
      %s134 = sadd.s32 %s133, 1
      %p137 = scmp.eq.s32.totalorder %s15, 1
      %p138 = scmp.ne.s32.totalorder %s133, %s135
      %p139 = scmp.eq.s32.totalorder %s15, 0
      %p140 = por %p138, %p139
      %p141 = scmp.ne.s32.totalorder %s133, %s135
      %p142 = scmp.eq.s32.totalorder %s20, 1
      %p143 = por %p141, %p142
      %p144 = scmp.ne.s32.totalorder %s135, %s136
      %p145 = scmp.eq.s32.totalorder %s20, 0
      %p146 = por %p144, %p145
      %p147 = scmp.ne.s32.totalorder %s135, %s136
      %p148 = scmp.eq.s32.totalorder %s21, 1
      %p149 = por %p147, %p148
      %p151 = scmp.ne.s32.totalorder %s136, %s150
      %p152 = scmp.eq.s32.totalorder %s21, 0
      %p153 = por %p151, %p152
      %s154 = ssub.s32 %s15, %s22
      %p155 = scmp.eq.s32.totalorder %s154, 0
      %s157 = sadd.s32 %s156, 1
      %s158 = scalar_select %p155, %s156, %s157
      %p161 = pneg %p155
      %p162 = scmp.eq.s32.totalorder %s15, 1
      %p163 = por %p161, %p162
      %p164 = scmp.ne.s32.totalorder %s156, %s159
      %p165 = scmp.eq.s32.totalorder %s15, 0
      %p166 = por %p164, %p165
      %p167 = scmp.ne.s32.totalorder %s156, %s159
      %p168 = scmp.eq.s32.totalorder %s20, 1
      %p169 = por %p167, %p168
      %p170 = scmp.ne.s32.totalorder %s159, %s160
      %p171 = scmp.eq.s32.totalorder %s20, 0
      %p172 = por %p170, %p171
      %p173 = scmp.ne.s32.totalorder %s159, %s160
      %p174 = scmp.eq.s32.totalorder %s21, 1
      %p175 = por %p173, %p174
      %p177 = scmp.ne.s32.totalorder %s160, %s176
      %p178 = scmp.eq.s32.totalorder %s21, 0
      %p179 = por %p177, %p178
      %p180 = scmp.le.s32.totalorder 1, %s15
      %p181 = scmp.lt.s32.totalorder %s15, 3
      %p182 = pnand %p180, %p181
      %p183 = pneg %p182
      // Predicated region
      $region9: #{prediction_mlp.3} parent=5 // pred_check
        _
      $region10: #{prediction_mlp.3} parent=5 // pred_check_branch
        %185 = sbr.rel (%p182) target = $region12
      $region11: #{prediction_mlp.3} parent=5 // pred_region
        %s186 = ssub.s32 %s15, 1
        // Predicated region
        $region13: #{prediction_mlp.3} parent=11 // pred_check
          %p187 = pneg %p62
        $region14: #{prediction_mlp.3} parent=11 // pred_check_branch
          %189 = sbr.rel (%p187) target = $region16
        $region15: #{prediction_mlp.3} parent=11 // pred_region
          _
        $region16: #{prediction_mlp.3} parent=11 // pred_fallthru
          _
        // Predicated region
        $region17: #{prediction_mlp.3} parent=11 // pred_check
          %p190 = pneg %p83
        $region18: #{prediction_mlp.3} parent=11 // pred_check_branch
          %192 = sbr.rel (%p190) target = $region20
        $region19: #{prediction_mlp.3} parent=11 // pred_region
          _
        $region20: #{prediction_mlp.3} parent=11 // pred_fallthru
          _
        // Predicated region
        $region21: #{prediction_mlp.3} parent=11 // pred_check
          %p193 = pneg %p104
        $region22: #{prediction_mlp.3} parent=11 // pred_check_branch
          %195 = sbr.rel (%p193) target = $region24
        $region23: #{prediction_mlp.3} parent=11 // pred_region
          _
        $region24: #{prediction_mlp.3} parent=11 // pred_fallthru
          _
        // Predicated region
        $region25: #{prediction_mlp.3} parent=11 // pred_check
          %p196 = pneg %p125
        $region26: #{prediction_mlp.3} parent=11 // pred_check_branch
          %198 = sbr.rel (%p196) target = $region28
        $region27: #{prediction_mlp.3} parent=11 // pred_region
          _
        $region28: #{prediction_mlp.3} parent=11 // pred_fallthru
          _
        // Predicated region
        $region29: #{prediction_mlp.3} parent=11 // pred_check
          %p199 = pneg %p146
        $region30: #{prediction_mlp.3} parent=11 // pred_check_branch
          %201 = sbr.rel (%p199) target = $region32
        $region31: #{prediction_mlp.3} parent=11 // pred_region
          _
        $region32: #{prediction_mlp.3} parent=11 // pred_fallthru
          _
      $region12: #{prediction_mlp.3} parent=5 // pred_fallthru
        _
      %p202 = scmp.lt.s32.totalorder %s15, 2
      // Predicated region
      $region33: #{prediction_mlp.3} parent=5 // pred_check
        %p203 = pneg %p202
      $region34: #{prediction_mlp.3} parent=5 // pred_check_branch
        %205 = sbr.rel (%p203) target = $region36
      $region35: #{prediction_mlp.3} parent=5 // pred_region
        // Predicated region
        $region37: #{prediction_mlp.3} parent=35 // pred_check
          %p206 = pneg %p35
        $region38: #{prediction_mlp.3} parent=35 // pred_check_branch
          %208 = sbr.rel (%p206) target = $region40
        $region39: #{prediction_mlp.3} parent=35 // pred_region
          %s209 = smul.u32 16, %s15
          %p210 = scmp.lt.s32.totalorder %s209, 31
          %s211 = scalar_select %p210, %s209, 31
          %s212 = smul.addr %s211, 8
          %s213 = scalar_lea.vmem %s0, %s212
          %s214 = smul.u32 16, %s15
        $region40: #{prediction_mlp.3} parent=35 // pred_fallthru
          _
      $region36: #{prediction_mlp.3} parent=5 // pred_fallthru
        _
      %p215 = scmp.le.s32.totalorder 1, %s15
      %p216 = scmp.lt.s32.totalorder %s15, 3
      %p217 = pnand %p215, %p216
      %p218 = pneg %p217
      // Predicated region
      $region41: #{prediction_mlp.3} parent=5 // pred_check
        _
      $region42: #{prediction_mlp.3} parent=5 // pred_check_branch
        %220 = sbr.rel (%p217) target = $region44
      $region43: #{prediction_mlp.3} parent=5 // pred_region
        %s221 = ssub.s32 %s15, 1
        %s222 = smul.u32 16, %s20
        %p223 = scmp.lt.s32.totalorder %s222, 31
        %s224 = scalar_select %p223, %s222, 31
        %s225 = smul.addr %s224, 8
        %s226 = scalar_lea.vmem %s0, %s225
        %p227 = pneg %p41
        %p228 = pneg %p38
        %p229 = pneg %p62
        %p230 = pneg %p59
        %p231 = pneg %p83
        %p232 = pneg %p80
        %p233 = pneg %p104
        %p234 = pneg %p101
        %p235 = pneg %p125
        %p236 = pneg %p122
        %p237 = pneg %p146
        %p238 = pneg %p143
        %p239 = pneg %p172
        %p240 = pneg %p169
        %s241 = sand.u32 %s159, 1
        %s242 = scalar_lea.sflag [#allocation3], %s241
        %s243 = sand.u32 %s159, 1
        %s244 = smul.addr %s243, 128
        %s245 = scalar_lea.vmem [#allocation2], %s244
        %s246 = smul.u32 16, %s20
        %p247 = scmp.lt.s32.totalorder %s246, 31
        %s248 = scalar_select %p247, %s246, 31
        %s249 = smul.addr %s248, 8
        %s250 = scalar_lea.vmem %s0, %s249
        %s251 = smul.u32 16, %s20
        %s252 = smul.u32 16, %s20
        %v253 = vld [vmem:[%s250] sm:$0xff]
        %v254 = vld [vmem:[%s250 + $0x8] sm:$0xff]
        %v255 = vld [vmem:[%s250 + $0x10] sm:$0xff]
        %v256 = vld [vmem:[%s250 + $0x18] sm:$0xff]
        %v257 = vld [vmem:[%s250 + $0x20] sm:$0xff]
        %v258 = vld [vmem:[%s250 + $0x28] sm:$0xff]
        %v259 = vld [vmem:[%s250 + $0x30] sm:$0xff]
        %v260 = vld [vmem:[%s250 + $0x38] sm:$0xff]
        %v261 = vld [vmem:[%s250 + $0x40] sm:$0xff]
        %v262 = vld [vmem:[%s250 + $0x48] sm:$0xff]
        %v263 = vld [vmem:[%s250 + $0x50] sm:$0xff]
        %v264 = vld [vmem:[%s250 + $0x58] sm:$0xff]
        %v265 = vld [vmem:[%s250 + $0x60] sm:$0xff]
        %v266 = vld [vmem:[%s250 + $0x68] sm:$0xff]
        %v267 = vld [vmem:[%s250 + $0x70] sm:$0xff]
        %v268 = vld [vmem:[%s250 + $0x78] sm:$0xff]
        %v269 = vpack.c.bf16 %v254, %v253
        %v270 = vpack.c.bf16 %v256, %v255
        %v271 = vpack.c.bf16 %v258, %v257
        %v272 = vpack.c.bf16 %v260, %v259
        %v273 = vpack.c.bf16 %v262, %v261
        %v274 = vpack.c.bf16 %v264, %v263
        %v275 = vpack.c.bf16 %v266, %v265
        %v276 = vpack.c.bf16 %v268, %v267
        %v277 = vld [vmem:[%s1] sm:$0xff]
        %v278 = vld [vmem:[%s1 + $0x8] sm:$0xff]
        %v279 = vld [vmem:[%s1 + $0x10] sm:$0xff]
        %v280 = vld [vmem:[%s1 + $0x18] sm:$0xff]
        %v281 = vld [vmem:[%s1 + $0x20] sm:$0xff]
        %v282 = vld [vmem:[%s1 + $0x28] sm:$0xff]
        %v283 = vld [vmem:[%s1 + $0x30] sm:$0xff]
        %v284 = vld [vmem:[%s1 + $0x38] sm:$0xff]
        %v285 = vld [vmem:[%s1 + $0x40] sm:$0xff]
        %v286 = vld [vmem:[%s1 + $0x48] sm:$0xff]
        %v287 = vld [vmem:[%s1 + $0x50] sm:$0xff]
        %v288 = vld [vmem:[%s1 + $0x58] sm:$0xff]
        %v289 = vld [vmem:[%s1 + $0x60] sm:$0xff]
        %v290 = vld [vmem:[%s1 + $0x68] sm:$0xff]
        %v291 = vld [vmem:[%s1 + $0x70] sm:$0xff]
        %v292 = vld [vmem:[%s1 + $0x78] sm:$0xff]
        %v309 = vunpack.c.l.b16 %v277
        %v310 = vunpack.c.h.b16 %v277
        %v311 = vunpack.c.l.b16 %v278
        %v312 = vunpack.c.h.b16 %v278
        %v313 = vunpack.c.l.b16 %v279
        %v314 = vunpack.c.h.b16 %v279
        %v315 = vunpack.c.l.b16 %v280
        %v316 = vunpack.c.h.b16 %v280
        %v317 = vunpack.c.l.b16 %v281
        %v318 = vunpack.c.h.b16 %v281
        %v319 = vunpack.c.l.b16 %v282
        %v320 = vunpack.c.h.b16 %v282
        %v321 = vunpack.c.l.b16 %v283
        %v322 = vunpack.c.h.b16 %v283
        %v323 = vunpack.c.l.b16 %v284
        %v324 = vunpack.c.h.b16 %v284
        %v325 = vunpack.c.l.b16 %v285
        %v326 = vunpack.c.h.b16 %v285
        %v327 = vunpack.c.l.b16 %v286
        %v328 = vunpack.c.h.b16 %v286
        %v329 = vunpack.c.l.b16 %v287
        %v330 = vunpack.c.h.b16 %v287
        %v331 = vunpack.c.l.b16 %v288
        %v332 = vunpack.c.h.b16 %v288
        %v333 = vunpack.c.l.b16 %v289
        %v334 = vunpack.c.h.b16 %v289
        %v335 = vunpack.c.l.b16 %v290
        %v336 = vunpack.c.h.b16 %v290
        %v337 = vunpack.c.l.b16 %v291
        %v338 = vunpack.c.h.b16 %v291
        %v339 = vunpack.c.l.b16 %v292
        %v340 = vunpack.c.h.b16 %v292
        %v341 = vpack.c.b16 %v311, %v309
        %v342 = vpack.c.b16 %v312, %v310
        %v343 = vpack.c.b16 %v315, %v313
        %v344 = vpack.c.b16 %v316, %v314
        %v345 = vpack.c.b16 %v319, %v317
        %v346 = vpack.c.b16 %v320, %v318
        %v347 = vpack.c.b16 %v323, %v321
        %v348 = vpack.c.b16 %v324, %v322
        %v349 = vpack.c.b16 %v327, %v325
        %v350 = vpack.c.b16 %v328, %v326
        %v351 = vpack.c.b16 %v331, %v329
        %v352 = vpack.c.b16 %v332, %v330
        %v353 = vpack.c.b16 %v335, %v333
        %v354 = vpack.c.b16 %v336, %v334
        %v355 = vpack.c.b16 %v339, %v337
        %v356 = vpack.c.b16 %v340, %v338
        %373 = vmatpush.bf16.msra.mxu0 %v355
        %374 = vmatpush.bf16.msra.mxu0 %v353
        %375 = vmatpush.bf16.msra.mxu0 %v351
        %376 = vmatpush.bf16.msra.mxu0 %v349
        %377 = vmatpush.bf16.msra.mxu0 %v347
        %378 = vmatpush.bf16.msra.mxu0 %v345
        %379 = vmatpush.bf16.msra.mxu0 %v343
        %380 = vmatpush.bf16.msra.mxu0 %v341
        %381 = vmatmul.bf16.gmra.mxu0 %v269
        %v382 = vpop.f32.mrf.mxu0
        %v383 = vadd.f32 0.0, %v382
        %v384 = vpop.f32.mrf.mxu0
        %v385 = vadd.f32 0.0, %v384
        %386 = vmatmul.bf16.gmra.mxu0 %v270
        %v387 = vpop.f32.mrf.mxu0
        %v388 = vadd.f32 0.0, %v387
        %v389 = vpop.f32.mrf.mxu0
        %v390 = vadd.f32 0.0, %v389
        %391 = vmatmul.bf16.gmra.mxu0 %v271
        %v392 = vpop.f32.mrf.mxu0
        %v393 = vadd.f32 0.0, %v392
        %v394 = vpop.f32.mrf.mxu0
        %v395 = vadd.f32 0.0, %v394
        %396 = vmatmul.bf16.gmra.mxu0 %v272
        %v397 = vpop.f32.mrf.mxu0
        %v398 = vadd.f32 0.0, %v397
        %v399 = vpop.f32.mrf.mxu0
        %v400 = vadd.f32 0.0, %v399
        %401 = vmatmul.bf16.gmra.mxu0 %v273
        %v402 = vpop.f32.mrf.mxu0
        %v403 = vadd.f32 0.0, %v402
        %v404 = vpop.f32.mrf.mxu0
        %v405 = vadd.f32 0.0, %v404
        %406 = vmatmul.bf16.gmra.mxu0 %v274
        %v407 = vpop.f32.mrf.mxu0
        %v408 = vadd.f32 0.0, %v407
        %v409 = vpop.f32.mrf.mxu0
        %v410 = vadd.f32 0.0, %v409
        %411 = vmatmul.bf16.gmra.mxu0 %v275
        %v412 = vpop.f32.mrf.mxu0
        %v413 = vadd.f32 0.0, %v412
        %v414 = vpop.f32.mrf.mxu0
        %v415 = vadd.f32 0.0, %v414
        %416 = vmatmul.bf16.gmra.mxu0 %v276
        %v417 = vpop.f32.mrf.mxu0
        %v418 = vadd.f32 0.0, %v417
        %v419 = vpop.f32.mrf.mxu0
        %v420 = vadd.f32 0.0, %v419
        %421 = vdwg.mxu0
        %422 = vmatpush.bf16.msra.mxu0 %v356
        %423 = vmatpush.bf16.msra.mxu0 %v354
        %424 = vmatpush.bf16.msra.mxu0 %v352
        %425 = vmatpush.bf16.msra.mxu0 %v350
        %426 = vmatpush.bf16.msra.mxu0 %v348
        %427 = vmatpush.bf16.msra.mxu0 %v346
        %428 = vmatpush.bf16.msra.mxu0 %v344
        %429 = vmatpush.bf16.msra.mxu0 %v342
        %430 = vmatmul.bf16.gmra.mxu0 %v269
        %v431 = vpop.f32.mrf.mxu0
        %v432 = vadd.f32 0.0, %v431
        %v433 = vpop.f32.mrf.mxu0
        %v434 = vadd.f32 0.0, %v433
        %435 = vmatmul.bf16.gmra.mxu0 %v270
        %v436 = vpop.f32.mrf.mxu0
        %v437 = vadd.f32 0.0, %v436
        %v438 = vpop.f32.mrf.mxu0
        %v439 = vadd.f32 0.0, %v438
        %440 = vmatmul.bf16.gmra.mxu0 %v271
        %v441 = vpop.f32.mrf.mxu0
        %v442 = vadd.f32 0.0, %v441
        %v443 = vpop.f32.mrf.mxu0
        %v444 = vadd.f32 0.0, %v443
        %445 = vmatmul.bf16.gmra.mxu0 %v272
        %v446 = vpop.f32.mrf.mxu0
        %v447 = vadd.f32 0.0, %v446
        %v448 = vpop.f32.mrf.mxu0
        %v449 = vadd.f32 0.0, %v448
        %450 = vmatmul.bf16.gmra.mxu0 %v273
        %v451 = vpop.f32.mrf.mxu0
        %v452 = vadd.f32 0.0, %v451
        %v453 = vpop.f32.mrf.mxu0
        %v454 = vadd.f32 0.0, %v453
        %455 = vmatmul.bf16.gmra.mxu0 %v274
        %v456 = vpop.f32.mrf.mxu0
        %v457 = vadd.f32 0.0, %v456
        %v458 = vpop.f32.mrf.mxu0
        %v459 = vadd.f32 0.0, %v458
        %460 = vmatmul.bf16.gmra.mxu0 %v275
        %v461 = vpop.f32.mrf.mxu0
        %v462 = vadd.f32 0.0, %v461
        %v463 = vpop.f32.mrf.mxu0
        %v464 = vadd.f32 0.0, %v463
        %465 = vmatmul.bf16.gmra.mxu0 %v276
        %v466 = vpop.f32.mrf.mxu0
        %v467 = vadd.f32 0.0, %v466
        %v468 = vpop.f32.mrf.mxu0
        %v469 = vadd.f32 0.0, %v468
        %470 = vdwg.mxu0
        %v471 = vld [vmem:[%s2] sm:$0x3]
        %v473 = vperm.slane %v471, 0
        %v474 = vperm.slane %v471, 1
        %v477 = vmul.f32 %v383, %v473
        %v478 = vmul.f32 %v432, %v474
        %v479 = vmul.f32 %v385, %v473
        %v480 = vmul.f32 %v434, %v474
        %v481 = vmul.f32 %v388, %v473
        %v482 = vmul.f32 %v437, %v474
        %v483 = vmul.f32 %v390, %v473
        %v484 = vmul.f32 %v439, %v474
        %v485 = vmul.f32 %v393, %v473
        %v486 = vmul.f32 %v442, %v474
        %v487 = vmul.f32 %v395, %v473
        %v488 = vmul.f32 %v444, %v474
        %v489 = vmul.f32 %v398, %v473
        %v490 = vmul.f32 %v447, %v474
        %v491 = vmul.f32 %v400, %v473
        %v492 = vmul.f32 %v449, %v474
        %v493 = vmul.f32 %v403, %v473
        %v494 = vmul.f32 %v452, %v474
        %v495 = vmul.f32 %v405, %v473
        %v496 = vmul.f32 %v454, %v474
        %v497 = vmul.f32 %v408, %v473
        %v498 = vmul.f32 %v457, %v474
        %v499 = vmul.f32 %v410, %v473
        %v500 = vmul.f32 %v459, %v474
        %v501 = vmul.f32 %v413, %v473
        %v502 = vmul.f32 %v462, %v474
        %v503 = vmul.f32 %v415, %v473
        %v504 = vmul.f32 %v464, %v474
        %v505 = vmul.f32 %v418, %v473
        %v506 = vmul.f32 %v467, %v474
        %v507 = vmul.f32 %v420, %v473
        %v508 = vmul.f32 %v469, %v474
        %v509 = vld [vmem:[%s3] sm:$0x3]
        %v511 = vperm.slane %v509, 0
        %v512 = vperm.slane %v509, 1
        %v515 = vadd.f32 %v477, %v511
        %v516 = vadd.f32 %v478, %v512
        %v517 = vadd.f32 %v479, %v511
        %v518 = vadd.f32 %v480, %v512
        %v519 = vadd.f32 %v481, %v511
        %v520 = vadd.f32 %v482, %v512
        %v521 = vadd.f32 %v483, %v511
        %v522 = vadd.f32 %v484, %v512
        %v523 = vadd.f32 %v485, %v511
        %v524 = vadd.f32 %v486, %v512
        %v525 = vadd.f32 %v487, %v511
        %v526 = vadd.f32 %v488, %v512
        %v527 = vadd.f32 %v489, %v511
        %v528 = vadd.f32 %v490, %v512
        %v529 = vadd.f32 %v491, %v511
        %v530 = vadd.f32 %v492, %v512
        %v531 = vadd.f32 %v493, %v511
        %v532 = vadd.f32 %v494, %v512
        %v533 = vadd.f32 %v495, %v511
        %v534 = vadd.f32 %v496, %v512
        %v535 = vadd.f32 %v497, %v511
        %v536 = vadd.f32 %v498, %v512
        %v537 = vadd.f32 %v499, %v511
        %v538 = vadd.f32 %v500, %v512
        %v539 = vadd.f32 %v501, %v511
        %v540 = vadd.f32 %v502, %v512
        %v541 = vadd.f32 %v503, %v511
        %v542 = vadd.f32 %v504, %v512
        %v543 = vadd.f32 %v505, %v511
        %v544 = vadd.f32 %v506, %v512
        %v545 = vadd.f32 %v507, %v511
        %v546 = vadd.f32 %v508, %v512
        %v547 = vmax.f32 %v515, 0.0
        %v548 = vmax.f32 %v516, 0.0
        %v549 = vmax.f32 %v517, 0.0
        %v550 = vmax.f32 %v518, 0.0
        %v551 = vmax.f32 %v519, 0.0
        %v552 = vmax.f32 %v520, 0.0
        %v553 = vmax.f32 %v521, 0.0
        %v554 = vmax.f32 %v522, 0.0
        %v555 = vmax.f32 %v523, 0.0
        %v556 = vmax.f32 %v524, 0.0
        %v557 = vmax.f32 %v525, 0.0
        %v558 = vmax.f32 %v526, 0.0
        %v559 = vmax.f32 %v527, 0.0
        %v560 = vmax.f32 %v528, 0.0
        %v561 = vmax.f32 %v529, 0.0
        %v562 = vmax.f32 %v530, 0.0
        %v563 = vmax.f32 %v531, 0.0
        %v564 = vmax.f32 %v532, 0.0
        %v565 = vmax.f32 %v533, 0.0
        %v566 = vmax.f32 %v534, 0.0
        %v567 = vmax.f32 %v535, 0.0
        %v568 = vmax.f32 %v536, 0.0
        %v569 = vmax.f32 %v537, 0.0
        %v570 = vmax.f32 %v538, 0.0
        %v571 = vmax.f32 %v539, 0.0
        %v572 = vmax.f32 %v540, 0.0
        %v573 = vmax.f32 %v541, 0.0
        %v574 = vmax.f32 %v542, 0.0
        %v575 = vmax.f32 %v543, 0.0
        %v576 = vmax.f32 %v544, 0.0
        %v577 = vmax.f32 %v545, 0.0
        %v578 = vmax.f32 %v546, 0.0
        %v579 = vpack.c.bf16 %v549, %v547
        %v580 = vpack.c.bf16 %v550, %v548
        %v581 = vpack.c.bf16 %v553, %v551
        %v582 = vpack.c.bf16 %v554, %v552
        %v583 = vpack.c.bf16 %v557, %v555
        %v584 = vpack.c.bf16 %v558, %v556
        %v585 = vpack.c.bf16 %v561, %v559
        %v586 = vpack.c.bf16 %v562, %v560
        %v587 = vpack.c.bf16 %v565, %v563
        %v588 = vpack.c.bf16 %v566, %v564
        %v589 = vpack.c.bf16 %v569, %v567
        %v590 = vpack.c.bf16 %v570, %v568
        %v591 = vpack.c.bf16 %v573, %v571
        %v592 = vpack.c.bf16 %v574, %v572
        %v593 = vpack.c.bf16 %v577, %v575
        %v594 = vpack.c.bf16 %v578, %v576
        %v595 = vld [vmem:[%s4] sm:$0xf]
        %v596 = vld [vmem:[%s4 + $0x4] sm:$0xf]
        %v597 = vld [vmem:[%s4 + $0x8] sm:$0xf]
        %v598 = vld [vmem:[%s4 + $0xc] sm:$0xf]
        %v599 = vld [vmem:[%s4 + $0x10] sm:$0xf]
        %v600 = vld [vmem:[%s4 + $0x14] sm:$0xf]
        %v601 = vld [vmem:[%s4 + $0x18] sm:$0xf]
        %v602 = vld [vmem:[%s4 + $0x1c] sm:$0xf]
        %v603 = vld [vmem:[%s4 + $0x20] sm:$0xf]
        %v604 = vld [vmem:[%s4 + $0x24] sm:$0xf]
        %v605 = vld [vmem:[%s4 + $0x28] sm:$0xf]
        %v606 = vld [vmem:[%s4 + $0x2c] sm:$0xf]
        %v607 = vld [vmem:[%s4 + $0x30] sm:$0xf]
        %v608 = vld [vmem:[%s4 + $0x34] sm:$0xf]
        %v609 = vld [vmem:[%s4 + $0x38] sm:$0xf]
        %v610 = vld [vmem:[%s4 + $0x3c] sm:$0xf]
        %v611 = vld [vmem:[%s4 + $0x40] sm:$0xf]
        %v612 = vld [vmem:[%s4 + $0x44] sm:$0xf]
        %v613 = vld [vmem:[%s4 + $0x48] sm:$0xf]
        %v614 = vld [vmem:[%s4 + $0x4c] sm:$0xf]
        %v615 = vld [vmem:[%s4 + $0x50] sm:$0xf]
        %v616 = vld [vmem:[%s4 + $0x54] sm:$0xf]
        %v617 = vld [vmem:[%s4 + $0x58] sm:$0xf]
        %v618 = vld [vmem:[%s4 + $0x5c] sm:$0xf]
        %v619 = vld [vmem:[%s4 + $0x60] sm:$0xf]
        %v620 = vld [vmem:[%s4 + $0x64] sm:$0xf]
        %v621 = vld [vmem:[%s4 + $0x68] sm:$0xf]
        %v622 = vld [vmem:[%s4 + $0x6c] sm:$0xf]
        %v623 = vld [vmem:[%s4 + $0x70] sm:$0xf]
        %v624 = vld [vmem:[%s4 + $0x74] sm:$0xf]
        %v625 = vld [vmem:[%s4 + $0x78] sm:$0xf]
        %v626 = vld [vmem:[%s4 + $0x7c] sm:$0xf]
        %v627 = vld [vmem:[%s5] sm:$0x1]
        %v629 = vperm.slane %v627, 0
        %v663 = vunpack.c.l.b16 %v595
        %v664 = vunpack.c.l.b16 %v596
        %v665 = vunpack.c.l.b16 %v597
        %v666 = vunpack.c.l.b16 %v598
        %v667 = vunpack.c.l.b16 %v599
        %v668 = vunpack.c.l.b16 %v600
        %v669 = vunpack.c.l.b16 %v601
        %v670 = vunpack.c.l.b16 %v602
        %v671 = vunpack.c.l.b16 %v603
        %v672 = vunpack.c.l.b16 %v604
        %v673 = vunpack.c.l.b16 %v605
        %v674 = vunpack.c.l.b16 %v606
        %v675 = vunpack.c.l.b16 %v607
        %v676 = vunpack.c.l.b16 %v608
        %v677 = vunpack.c.l.b16 %v609
        %v678 = vunpack.c.l.b16 %v610
        %v679 = vunpack.c.l.b16 %v611
        %v680 = vunpack.c.l.b16 %v612
        %v681 = vunpack.c.l.b16 %v613
        %v682 = vunpack.c.l.b16 %v614
        %v683 = vunpack.c.l.b16 %v615
        %v684 = vunpack.c.l.b16 %v616
        %v685 = vunpack.c.l.b16 %v617
        %v686 = vunpack.c.l.b16 %v618
        %v687 = vunpack.c.l.b16 %v619
        %v688 = vunpack.c.l.b16 %v620
        %v689 = vunpack.c.l.b16 %v621
        %v690 = vunpack.c.l.b16 %v622
        %v691 = vunpack.c.l.b16 %v623
        %v692 = vunpack.c.l.b16 %v624
        %v693 = vunpack.c.l.b16 %v625
        %v694 = vunpack.c.l.b16 %v626
        %v695 = vpack.c.b16 %v664, %v663
        %v696 = vpack.c.b16 %v666, %v665
        %v697 = vpack.c.b16 %v668, %v667
        %v698 = vpack.c.b16 %v670, %v669
        %v699 = vpack.c.b16 %v672, %v671
        %v700 = vpack.c.b16 %v674, %v673
        %v701 = vpack.c.b16 %v676, %v675
        %v702 = vpack.c.b16 %v678, %v677
        %v703 = vpack.c.b16 %v680, %v679
        %v704 = vpack.c.b16 %v682, %v681
        %v705 = vpack.c.b16 %v684, %v683
        %v706 = vpack.c.b16 %v686, %v685
        %v707 = vpack.c.b16 %v688, %v687
        %v708 = vpack.c.b16 %v690, %v689
        %v709 = vpack.c.b16 %v692, %v691
        %v710 = vpack.c.b16 %v694, %v693
        %727 = vmatpush.bf16.msra.mxu0 %v702
        %728 = vmatpush.bf16.msra.mxu0 %v701
        %729 = vmatpush.bf16.msra.mxu0 %v700
        %730 = vmatpush.bf16.msra.mxu0 %v699
        %731 = vmatpush.bf16.msra.mxu0 %v698
        %732 = vmatpush.bf16.msra.mxu0 %v697
        %733 = vmatpush.bf16.msra.mxu0 %v696
        %734 = vmatpush.bf16.msra.mxu0 %v695
        %735 = vmatmul.bf16.gmra.mxu0 %v579
        %v736 = vpop.f32.mrf.mxu0
        %v737 = vadd.f32 %v629, %v736
        %v738 = vpop.f32.mrf.mxu0
        %v739 = vadd.f32 %v629, %v738
        %740 = vmatmul.bf16.gmra.mxu0 %v581
        %v741 = vpop.f32.mrf.mxu0
        %v742 = vadd.f32 %v629, %v741
        %v743 = vpop.f32.mrf.mxu0
        %v744 = vadd.f32 %v629, %v743
        %745 = vmatmul.bf16.gmra.mxu0 %v583
        %v746 = vpop.f32.mrf.mxu0
        %v747 = vadd.f32 %v629, %v746
        %v748 = vpop.f32.mrf.mxu0
        %v749 = vadd.f32 %v629, %v748
        %750 = vmatmul.bf16.gmra.mxu0 %v585
        %v751 = vpop.f32.mrf.mxu0
        %v752 = vadd.f32 %v629, %v751
        %v753 = vpop.f32.mrf.mxu0
        %v754 = vadd.f32 %v629, %v753
        %755 = vmatmul.bf16.gmra.mxu0 %v587
        %v756 = vpop.f32.mrf.mxu0
        %v757 = vadd.f32 %v629, %v756
        %v758 = vpop.f32.mrf.mxu0
        %v759 = vadd.f32 %v629, %v758
        %760 = vmatmul.bf16.gmra.mxu0 %v589
        %v761 = vpop.f32.mrf.mxu0
        %v762 = vadd.f32 %v629, %v761
        %v763 = vpop.f32.mrf.mxu0
        %v764 = vadd.f32 %v629, %v763
        %765 = vmatmul.bf16.gmra.mxu0 %v591
        %v766 = vpop.f32.mrf.mxu0
        %v767 = vadd.f32 %v629, %v766
        %v768 = vpop.f32.mrf.mxu0
        %v769 = vadd.f32 %v629, %v768
        %770 = vmatmul.bf16.gmra.mxu0 %v593
        %v771 = vpop.f32.mrf.mxu0
        %v772 = vadd.f32 %v629, %v771
        %v773 = vpop.f32.mrf.mxu0
        %v774 = vadd.f32 %v629, %v773
        %775 = vdwg.mxu0
        %776 = vmatpush.bf16.msra.mxu0 %v710
        %777 = vmatpush.bf16.msra.mxu0 %v709
        %778 = vmatpush.bf16.msra.mxu0 %v708
        %779 = vmatpush.bf16.msra.mxu0 %v707
        %780 = vmatpush.bf16.msra.mxu0 %v706
        %781 = vmatpush.bf16.msra.mxu0 %v705
        %782 = vmatpush.bf16.msra.mxu0 %v704
        %783 = vmatpush.bf16.msra.mxu0 %v703
        %784 = vmatmul.bf16.gmra.mxu0 %v580
        %v785 = vpop.f32.mrf.mxu0
        %v786 = vadd.f32 %v737, %v785
        %v787 = vpop.f32.mrf.mxu0
        %v788 = vadd.f32 %v739, %v787
        %789 = vmatmul.bf16.gmra.mxu0 %v582
        %v790 = vpop.f32.mrf.mxu0
        %v791 = vadd.f32 %v742, %v790
        %v792 = vpop.f32.mrf.mxu0
        %v793 = vadd.f32 %v744, %v792
        %794 = vmatmul.bf16.gmra.mxu0 %v584
        %v795 = vpop.f32.mrf.mxu0
        %v796 = vadd.f32 %v747, %v795
        %v797 = vpop.f32.mrf.mxu0
        %v798 = vadd.f32 %v749, %v797
        %799 = vmatmul.bf16.gmra.mxu0 %v586
        %v800 = vpop.f32.mrf.mxu0
        %v801 = vadd.f32 %v752, %v800
        %v802 = vpop.f32.mrf.mxu0
        %v803 = vadd.f32 %v754, %v802
        %804 = vmatmul.bf16.gmra.mxu0 %v588
        %v805 = vpop.f32.mrf.mxu0
        %v806 = vadd.f32 %v757, %v805
        %v807 = vpop.f32.mrf.mxu0
        %v808 = vadd.f32 %v759, %v807
        %809 = vmatmul.bf16.gmra.mxu0 %v590
        %v810 = vpop.f32.mrf.mxu0
        %v811 = vadd.f32 %v762, %v810
        %v812 = vpop.f32.mrf.mxu0
        %v813 = vadd.f32 %v764, %v812
        %814 = vmatmul.bf16.gmra.mxu0 %v592
        %v815 = vpop.f32.mrf.mxu0
        %v816 = vadd.f32 %v767, %v815
        %v817 = vpop.f32.mrf.mxu0
        %v818 = vadd.f32 %v769, %v817
        %819 = vmatmul.bf16.gmra.mxu0 %v594
        %v820 = vpop.f32.mrf.mxu0
        %v821 = vadd.f32 %v772, %v820
        %v822 = vpop.f32.mrf.mxu0
        %v823 = vadd.f32 %v774, %v822
        %824 = vdwg.mxu0
        %825 = vst [vmem:[%s245] sm:$0xff] %v786
        %826 = vst [vmem:[%s245 + $0x8] sm:$0xff] %v788
        %827 = vst [vmem:[%s245 + $0x10] sm:$0xff] %v791
        %828 = vst [vmem:[%s245 + $0x18] sm:$0xff] %v793
        %829 = vst [vmem:[%s245 + $0x20] sm:$0xff] %v796
        %830 = vst [vmem:[%s245 + $0x28] sm:$0xff] %v798
        %831 = vst [vmem:[%s245 + $0x30] sm:$0xff] %v801
        %832 = vst [vmem:[%s245 + $0x38] sm:$0xff] %v803
        %833 = vst [vmem:[%s245 + $0x40] sm:$0xff] %v806
        %834 = vst [vmem:[%s245 + $0x48] sm:$0xff] %v808
        %835 = vst [vmem:[%s245 + $0x50] sm:$0xff] %v811
        %836 = vst [vmem:[%s245 + $0x58] sm:$0xff] %v813
        %837 = vst [vmem:[%s245 + $0x60] sm:$0xff] %v816
        %838 = vst [vmem:[%s245 + $0x68] sm:$0xff] %v818
        %839 = vst [vmem:[%s245 + $0x70] sm:$0xff] %v821
        %840 = vst [vmem:[%s245 + $0x78] sm:$0xff] %v823
        %s841 = sand.u32 %s159, 1
        %s842 = scalar_lea.sflag [#allocation3], %s841
        %s843 = sand.u32 %s159, 1
        %s844 = smul.addr %s843, 128
        %s845 = scalar_lea.vmem [#allocation2], %s844
        // Predicated region
        $region45: #{prediction_mlp.3} parent=43 // pred_check
          %p846 = pneg %p169
        $region46: #{prediction_mlp.3} parent=43 // pred_check_branch
          %848 = sbr.rel (%p846) target = $region48
        $region47: #{prediction_mlp.3} parent=43 // pred_region
          %s849 = smul.u32 16, %s20
          %851 = vsyncadd %s842, 0
          %s852 = smul.addr %s849, 8
          %s853 = scalar_lea.hbm %s6, %s852
          %s854 = sshll.u32 %s845, 4
          %s855 = int_to_ptr.vmem [resolvable:$true] %s854
          %s856 = sshll.u32 %s853, 4
          %s857 = int_to_ptr.hbm [resolvable:$true] %s856
          %862 = dma.vmem_to_hbm [thread:$0]  %s855, 2048, %s857, %s842, 128, 128, 8
        $region48: #{prediction_mlp.3} parent=43 // pred_fallthru
          _
      $region44: #{prediction_mlp.3} parent=5 // pred_fallthru
        _
      %p863 = scmp.le.s32.totalorder 2, %s15
      // Predicated region
      $region49: #{prediction_mlp.3} parent=5 // pred_check
        %p864 = pneg %p863
      $region50: #{prediction_mlp.3} parent=5 // pred_check_branch
        %866 = sbr.rel (%p864) target = $region52
      $region51: #{prediction_mlp.3} parent=5 // pred_region
        %s867 = ssub.s32 %s15, 2
        // Predicated region
        $region53: #{prediction_mlp.3} parent=51 // pred_check
          %p868 = pneg %p175
        $region54: #{prediction_mlp.3} parent=51 // pred_check_branch
          %870 = sbr.rel (%p868) target = $region56
        $region55: #{prediction_mlp.3} parent=51 // pred_region
          %s871 = sand.u32 %s160, 1
          %s872 = scalar_lea.sflag [#allocation3], %s871
          %s873 = sand.u32 %s160, 1
          %s874 = smul.addr %s873, 128
          %s875 = scalar_lea.vmem [#allocation2], %s874
          %877 = dma.done %s872, 2048
        $region56: #{prediction_mlp.3} parent=51 // pred_fallthru
          _
      $region52: #{prediction_mlp.3} parent=5 // pred_fallthru
        _
    $region6: #{prediction_mlp.3} parent=1 // loop_footer
      %s19 = sadd.s32 1, %s15
    $region7: #{prediction_mlp.3} parent=1 // loop_footer_branch
      %14 = sbr.rel target = $region3
    $region8: #{prediction_mlp.3} parent=1 // loop_exit
      _
    %878 = vsyncpa [#allocation3], 1
    %s879 = scalar_lea.sflag [#allocation3], 1
    %880 = vsyncpa %s879, 1

// kernel: prediction_mlp.2
$region0: #{prediction_mlp.2}
  #allocation0 [shape = 'u32[]', space=smem, size = 0x4, offset = 0x4, fixed_abs, tag = 'smem constant byte address 0x4 - core index']
  #allocation1 [shape = 'u32[72,128]{1,0:T(1,128)}', space=vmem, size = 0x9000, scoped, tag = 'internal scratch']
  %s0 = inlined_call_operand.vmem [shape: f32[256,128], index: 0, kind: input, shape index: {}]
  %s1 = inlined_call_operand.vmem [shape: bf16[128,256], index: 1, kind: input, shape index: {}]
  %s2 = inlined_call_operand.vmem [shape: f32[2,1,256], index: 2, kind: output, shape index: {0}]
  %s3 = inlined_call_operand.vmem [shape: f32[2,1,256], index: 3, kind: output, shape index: {1}]
  %4 = xla_tuple %s2, %s3
  %s5 = sld [smem:[#allocation0]]
  $region53: #{prediction_mlp.2} parent=0
    _
  %s7 = ssub.s32 1, %s5
  %s8 = scalar_select 0, %s7, %s5
  loop: start=0, step=1, limit=4
  $region2: #{prediction_mlp.2} parent=0 // loop_pre_header
    _
  $region3: #{prediction_mlp.2} parent=0 // loop_header
    %s10 = sphi 0, %s14
    %p11 = scmp.ge.s32.totalorder %s10, 4
    %s17 = sphi 0, %s29
    %s18 = sphi 0, %s25
    %s19 = sphi 0, %s17
    %s20 = sphi 0, %s18
    %s21 = sphi 0, %s19
    %s22 = sphi 0, %s20
    %s34 = sphi 0, %s36
    %s37 = sphi 0, %s34
    %s38 = sphi 0, %s37
    %s54 = sphi 0, %s38
    %s58 = sphi 0, %s58
    %s60 = sphi 0, %s58
    %s61 = sphi 0, %s60
    %s75 = sphi 0, %s61
    %s81 = sphi 0, %s83
    %s84 = sphi 0, %s81
    %s85 = sphi 0, %s84
    %s101 = sphi 0, %s85
    %s107 = sphi 0, %s109
    %s110 = sphi 0, %s107
    %s111 = sphi 0, %s110
    %s127 = sphi 0, %s111
  $region4: #{prediction_mlp.2} parent=0 // loop_header_branch
    %13 = sbr.rel (%p11) target = $region8
  $region5: #{prediction_mlp.2} parent=0 // loop_body
    %s15 = ssub.s32 %s10, 1
    %s16 = ssub.s32 %s10, 2
    %s23 = sadd.s32 1, %s18
    %p24 = scmp.ge.s32.totalorder %s23, 1
    %s25 = scalar_select %p24, 0, %s23
    %s26 = sadd.s32 1, %s17
    %s27 = scalar_select %p24, %s26, %s17
    %p28 = scmp.ge.s32.totalorder %s27, 2
    %s29 = scalar_select %p28, 0, %s27
    %s30 = sadd.s32 %s17, %s18
    %s31 = sadd.s32 %s29, %s25
    %s32 = ssub.s32 %s30, %s31
    %p33 = scmp.eq.s32.totalorder %s32, 0
    %s35 = sadd.s32 %s34, 1
    %s36 = scalar_select %p33, %s34, %s35
    %p39 = pneg %p33
    %p40 = scmp.eq.s32.totalorder %s10, 1
    %p41 = por %p39, %p40
    %p42 = scmp.ne.s32.totalorder %s34, %s37
    %p43 = scmp.eq.s32.totalorder %s10, 0
    %p44 = por %p42, %p43
    %p45 = scmp.ne.s32.totalorder %s34, %s37
    %p46 = scmp.eq.s32.totalorder %s15, 1
    %p47 = por %p45, %p46
    %p48 = scmp.ne.s32.totalorder %s37, %s38
    %p49 = scmp.eq.s32.totalorder %s15, 0
    %p50 = por %p48, %p49
    %p51 = scmp.ne.s32.totalorder %s37, %s38
    %p52 = scmp.eq.s32.totalorder %s16, 1
    %p53 = por %p51, %p52
    %p55 = scmp.ne.s32.totalorder %s38, %s54
    %p56 = scmp.eq.s32.totalorder %s16, 0
    %p57 = por %p55, %p56
    %s59 = sadd.s32 %s58, 1
    %p62 = scmp.eq.s32.totalorder %s10, 1
    %p63 = scmp.ne.s32.totalorder %s58, %s60
    %p64 = scmp.eq.s32.totalorder %s10, 0
    %p65 = por %p63, %p64
    %p66 = scmp.ne.s32.totalorder %s58, %s60
    %p67 = scmp.eq.s32.totalorder %s15, 1
    %p68 = por %p66, %p67
    %p69 = scmp.ne.s32.totalorder %s60, %s61
    %p70 = scmp.eq.s32.totalorder %s15, 0
    %p71 = por %p69, %p70
    %p72 = scmp.ne.s32.totalorder %s60, %s61
    %p73 = scmp.eq.s32.totalorder %s16, 1
    %p74 = por %p72, %p73
    %p76 = scmp.ne.s32.totalorder %s61, %s75
    %p77 = scmp.eq.s32.totalorder %s16, 0
    %p78 = por %p76, %p77
    %s79 = ssub.s32 %s17, %s29
    %p80 = scmp.eq.s32.totalorder %s79, 0
    %s82 = sadd.s32 %s81, 1
    %s83 = scalar_select %p80, %s81, %s82
    %p86 = pneg %p80
    %p87 = scmp.eq.s32.totalorder %s10, 1
    %p88 = por %p86, %p87
    %p89 = scmp.ne.s32.totalorder %s81, %s84
    %p90 = scmp.eq.s32.totalorder %s10, 0
    %p91 = por %p89, %p90
    %p92 = scmp.ne.s32.totalorder %s81, %s84
    %p93 = scmp.eq.s32.totalorder %s15, 1
    %p94 = por %p92, %p93
    %p95 = scmp.ne.s32.totalorder %s84, %s85
    %p96 = scmp.eq.s32.totalorder %s15, 0
    %p97 = por %p95, %p96
    %p98 = scmp.ne.s32.totalorder %s84, %s85
    %p99 = scmp.eq.s32.totalorder %s16, 1
    %p100 = por %p98, %p99
    %p102 = scmp.ne.s32.totalorder %s85, %s101
    %p103 = scmp.eq.s32.totalorder %s16, 0
    %p104 = por %p102, %p103
    %s105 = ssub.s32 %s17, %s29
    %p106 = scmp.eq.s32.totalorder %s105, 0
    %s108 = sadd.s32 %s107, 1
    %s109 = scalar_select %p106, %s107, %s108
    %p112 = pneg %p106
    %p113 = scmp.eq.s32.totalorder %s10, 1
    %p114 = por %p112, %p113
    %p115 = scmp.ne.s32.totalorder %s107, %s110
    %p116 = scmp.eq.s32.totalorder %s10, 0
    %p117 = por %p115, %p116
    %p118 = scmp.ne.s32.totalorder %s107, %s110
    %p119 = scmp.eq.s32.totalorder %s15, 1
    %p120 = por %p118, %p119
    %p121 = scmp.ne.s32.totalorder %s110, %s111
    %p122 = scmp.eq.s32.totalorder %s15, 0
    %p123 = por %p121, %p122
    %p124 = scmp.ne.s32.totalorder %s110, %s111
    %p125 = scmp.eq.s32.totalorder %s16, 1
    %p126 = por %p124, %p125
    %p128 = scmp.ne.s32.totalorder %s111, %s127
    %p129 = scmp.eq.s32.totalorder %s16, 0
    %p130 = por %p128, %p129
    %p131 = scmp.le.s32.totalorder 1, %s10
    %p132 = scmp.lt.s32.totalorder %s10, 3
    %p133 = pnand %p131, %p132
    %p134 = pneg %p133
    // Predicated region
    $region9: #{prediction_mlp.2} parent=5 // pred_check
      _
    $region10: #{prediction_mlp.2} parent=5 // pred_check_branch
      %136 = sbr.rel (%p133) target = $region12
    $region11: #{prediction_mlp.2} parent=5 // pred_region
      %s137 = ssub.s32 %s10, 1
      // Predicated region
      $region13: #{prediction_mlp.2} parent=11 // pred_check
        %p138 = pneg %p71
      $region14: #{prediction_mlp.2} parent=11 // pred_check_branch
        %140 = sbr.rel (%p138) target = $region16
      $region15: #{prediction_mlp.2} parent=11 // pred_region
        _
      $region16: #{prediction_mlp.2} parent=11 // pred_fallthru
        _
    $region12: #{prediction_mlp.2} parent=5 // pred_fallthru
      _
    %p141 = scmp.lt.s32.totalorder %s10, 2
    // Predicated region
    $region17: #{prediction_mlp.2} parent=5 // pred_check
      %p142 = pneg %p141
    $region18: #{prediction_mlp.2} parent=5 // pred_check_branch
      %144 = sbr.rel (%p142) target = $region20
    $region19: #{prediction_mlp.2} parent=5 // pred_region
      // Predicated region
      $region21: #{prediction_mlp.2} parent=19 // pred_check
        %p145 = pneg %p44
      $region22: #{prediction_mlp.2} parent=19 // pred_check_branch
        %147 = sbr.rel (%p145) target = $region24
      $region23: #{prediction_mlp.2} parent=19 // pred_region
        %s148 = sadd.s32 %s17, %s18
        %s149 = smul.u32 16, %s148
        %p150 = scmp.lt.s32.totalorder %s149, 31
        %s151 = scalar_select %p150, %s149, 31
        %s152 = smul.addr %s151, 8
        %s153 = scalar_lea.vmem %s0, %s152
        %s154 = sadd.s32 %s17, %s18
        %s155 = smul.u32 16, %s154
      $region24: #{prediction_mlp.2} parent=19 // pred_fallthru
        _
    $region20: #{prediction_mlp.2} parent=5 // pred_fallthru
      _
    %p156 = scmp.le.s32.totalorder 1, %s10
    %p157 = scmp.lt.s32.totalorder %s10, 3
    %p158 = pnand %p156, %p157
    %p159 = pneg %p158
    // Predicated region
    $region25: #{prediction_mlp.2} parent=5 // pred_check
      _
    $region26: #{prediction_mlp.2} parent=5 // pred_check_branch
      %161 = sbr.rel (%p158) target = $region28
    $region27: #{prediction_mlp.2} parent=5 // pred_region
      %s162 = ssub.s32 %s10, 1
      %s163 = sadd.s32 %s19, %s20
      %s164 = smul.u32 16, %s163
      %p165 = scmp.lt.s32.totalorder %s164, 31
      %s166 = scalar_select %p165, %s164, 31
      %s167 = smul.addr %s166, 8
      %s168 = scalar_lea.vmem %s0, %s167
      %p169 = pneg %p50
      %p170 = pneg %p47
      %p171 = pneg %p71
      %p172 = pneg %p68
      %p173 = pneg %p97
      %p174 = pneg %p94
      %p175 = scmp.lt.s32.totalorder %s19, 1
      %s176 = scalar_select %p175, %s19, 1
      %s177 = smul.addr %s176, 2
      %s178 = scalar_lea.vmem %s2, %s177
      %p179 = pneg %p123
      %p180 = pneg %p120
      %p181 = scmp.lt.s32.totalorder %s19, 1
      %s182 = scalar_select %p181, %s19, 1
      %s183 = smul.addr %s182, 2
      %s184 = scalar_lea.vmem %s3, %s183
      %s185 = sadd.s32 %s19, %s20
      %s186 = smul.u32 16, %s185
      %p187 = scmp.lt.s32.totalorder %s186, 31
      %s188 = scalar_select %p187, %s186, 31
      %s189 = smul.addr %s188, 8
      %s190 = scalar_lea.vmem %s0, %s189
      %s191 = sadd.s32 %s19, %s20
      %s192 = smul.u32 16, %s191
      %p193 = scmp.lt.s32.totalorder %s19, 1
      %s194 = scalar_select %p193, %s19, 1
      %s195 = smul.addr %s194, 2
      %s196 = scalar_lea.vmem %s2, %s195
      %p197 = scmp.lt.s32.totalorder %s19, 1
      %s198 = scalar_select %p197, %s19, 1
      %s199 = smul.addr %s198, 2
      %s200 = scalar_lea.vmem %s3, %s199
      %p201 = scmp.eq.s32.totalorder %s20, 0
      // Predicated region
      $region29: #{prediction_mlp.2} parent=27 // pred_check
        %p202 = pneg %p201
      $region30: #{prediction_mlp.2} parent=27 // pred_check_branch
        %204 = sbr.rel (%p202) target = $region32
      $region31: #{prediction_mlp.2} parent=27 // pred_region
        %v205 = vlaneseq
        %vm206 = vcmp.ge.s32.totalorder %v205, 0
        %vm207 = vcmp.lt.s32.totalorder %v205, 256
        %vm208 = vmand %vm206, %vm207
        %209 = vst.msk [vmem:[%s196] sm:$0x3] %vm208, 0.0
        %210 = vst.msk [vmem:[%s200] sm:$0x3] %vm208, 0.0
      $region32: #{prediction_mlp.2} parent=27 // pred_fallthru
        _
      %v211 = vld [vmem:[%s190] sm:$0xff]
      %v212 = vld [vmem:[%s190 + $0x8] sm:$0xff]
      %v213 = vld [vmem:[%s190 + $0x10] sm:$0xff]
      %v214 = vld [vmem:[%s190 + $0x18] sm:$0xff]
      %v215 = vld [vmem:[%s190 + $0x20] sm:$0xff]
      %v216 = vld [vmem:[%s190 + $0x28] sm:$0xff]
      %v217 = vld [vmem:[%s190 + $0x30] sm:$0xff]
      %v218 = vld [vmem:[%s190 + $0x38] sm:$0xff]
      %v219 = vld [vmem:[%s190 + $0x40] sm:$0xff]
      %v220 = vld [vmem:[%s190 + $0x48] sm:$0xff]
      %v221 = vld [vmem:[%s190 + $0x50] sm:$0xff]
      %v222 = vld [vmem:[%s190 + $0x58] sm:$0xff]
      %v223 = vld [vmem:[%s190 + $0x60] sm:$0xff]
      %v224 = vld [vmem:[%s190 + $0x68] sm:$0xff]
      %v225 = vld [vmem:[%s190 + $0x70] sm:$0xff]
      %v226 = vld [vmem:[%s190 + $0x78] sm:$0xff]
      %v227 = vpack.c.bf16 %v212, %v211
      %v228 = vpack.c.bf16 %v214, %v213
      %v229 = vpack.c.bf16 %v216, %v215
      %v230 = vpack.c.bf16 %v218, %v217
      %v231 = vpack.c.bf16 %v220, %v219
      %v232 = vpack.c.bf16 %v222, %v221
      %v233 = vpack.c.bf16 %v224, %v223
      %v234 = vpack.c.bf16 %v226, %v225
      %v235 = vld [vmem:[%s1] sm:$0xff]
      %v236 = vld [vmem:[%s1 + $0x8] sm:$0xff]
      %v237 = vld [vmem:[%s1 + $0x10] sm:$0xff]
      %v238 = vld [vmem:[%s1 + $0x18] sm:$0xff]
      %v239 = vld [vmem:[%s1 + $0x20] sm:$0xff]
      %v240 = vld [vmem:[%s1 + $0x28] sm:$0xff]
      %v241 = vld [vmem:[%s1 + $0x30] sm:$0xff]
      %v242 = vld [vmem:[%s1 + $0x38] sm:$0xff]
      %v243 = vld [vmem:[%s1 + $0x40] sm:$0xff]
      %v244 = vld [vmem:[%s1 + $0x48] sm:$0xff]
      %v245 = vld [vmem:[%s1 + $0x50] sm:$0xff]
      %v246 = vld [vmem:[%s1 + $0x58] sm:$0xff]
      %v247 = vld [vmem:[%s1 + $0x60] sm:$0xff]
      %v248 = vld [vmem:[%s1 + $0x68] sm:$0xff]
      %v249 = vld [vmem:[%s1 + $0x70] sm:$0xff]
      %v250 = vld [vmem:[%s1 + $0x78] sm:$0xff]
      %v267 = vunpack.c.l.b16 %v235
      %v268 = vunpack.c.h.b16 %v235
      %v269 = vunpack.c.l.b16 %v236
      %v270 = vunpack.c.h.b16 %v236
      %v271 = vunpack.c.l.b16 %v237
      %v272 = vunpack.c.h.b16 %v237
      %v273 = vunpack.c.l.b16 %v238
      %v274 = vunpack.c.h.b16 %v238
      %v275 = vunpack.c.l.b16 %v239
      %v276 = vunpack.c.h.b16 %v239
      %v277 = vunpack.c.l.b16 %v240
      %v278 = vunpack.c.h.b16 %v240
      %v279 = vunpack.c.l.b16 %v241
      %v280 = vunpack.c.h.b16 %v241
      %v281 = vunpack.c.l.b16 %v242
      %v282 = vunpack.c.h.b16 %v242
      %v283 = vunpack.c.l.b16 %v243
      %v284 = vunpack.c.h.b16 %v243
      %v285 = vunpack.c.l.b16 %v244
      %v286 = vunpack.c.h.b16 %v244
      %v287 = vunpack.c.l.b16 %v245
      %v288 = vunpack.c.h.b16 %v245
      %v289 = vunpack.c.l.b16 %v246
      %v290 = vunpack.c.h.b16 %v246
      %v291 = vunpack.c.l.b16 %v247
      %v292 = vunpack.c.h.b16 %v247
      %v293 = vunpack.c.l.b16 %v248
      %v294 = vunpack.c.h.b16 %v248
      %v295 = vunpack.c.l.b16 %v249
      %v296 = vunpack.c.h.b16 %v249
      %v297 = vunpack.c.l.b16 %v250
      %v298 = vunpack.c.h.b16 %v250
      %v299 = vpack.c.b16 %v269, %v267
      %v300 = vpack.c.b16 %v270, %v268
      %v301 = vpack.c.b16 %v273, %v271
      %v302 = vpack.c.b16 %v274, %v272
      %v303 = vpack.c.b16 %v277, %v275
      %v304 = vpack.c.b16 %v278, %v276
      %v305 = vpack.c.b16 %v281, %v279
      %v306 = vpack.c.b16 %v282, %v280
      %v307 = vpack.c.b16 %v285, %v283
      %v308 = vpack.c.b16 %v286, %v284
      %v309 = vpack.c.b16 %v289, %v287
      %v310 = vpack.c.b16 %v290, %v288
      %v311 = vpack.c.b16 %v293, %v291
      %v312 = vpack.c.b16 %v294, %v292
      %v313 = vpack.c.b16 %v297, %v295
      %v314 = vpack.c.b16 %v298, %v296
      %331 = vmatpush.bf16.msra.mxu0 %v313
      %332 = vmatpush.bf16.msra.mxu0 %v311
      %333 = vmatpush.bf16.msra.mxu0 %v309
      %334 = vmatpush.bf16.msra.mxu0 %v307
      %335 = vmatpush.bf16.msra.mxu0 %v305
      %336 = vmatpush.bf16.msra.mxu0 %v303
      %337 = vmatpush.bf16.msra.mxu0 %v301
      %338 = vmatpush.bf16.msra.mxu0 %v299
      %339 = vmatmul.bf16.gmra.mxu0 %v227
      %v340 = vpop.f32.mrf.mxu0
      %v341 = vadd.f32 0.0, %v340
      %v342 = vpop.f32.mrf.mxu0
      %v343 = vadd.f32 0.0, %v342
      %344 = vmatmul.bf16.gmra.mxu0 %v228
      %v345 = vpop.f32.mrf.mxu0
      %v346 = vadd.f32 0.0, %v345
      %v347 = vpop.f32.mrf.mxu0
      %v348 = vadd.f32 0.0, %v347
      %349 = vmatmul.bf16.gmra.mxu0 %v229
      %v350 = vpop.f32.mrf.mxu0
      %v351 = vadd.f32 0.0, %v350
      %v352 = vpop.f32.mrf.mxu0
      %v353 = vadd.f32 0.0, %v352
      %354 = vmatmul.bf16.gmra.mxu0 %v230
      %v355 = vpop.f32.mrf.mxu0
      %v356 = vadd.f32 0.0, %v355
      %v357 = vpop.f32.mrf.mxu0
      %v358 = vadd.f32 0.0, %v357
      %359 = vmatmul.bf16.gmra.mxu0 %v231
      %v360 = vpop.f32.mrf.mxu0
      %v361 = vadd.f32 0.0, %v360
      %v362 = vpop.f32.mrf.mxu0
      %v363 = vadd.f32 0.0, %v362
      %364 = vmatmul.bf16.gmra.mxu0 %v232
      %v365 = vpop.f32.mrf.mxu0
      %v366 = vadd.f32 0.0, %v365
      %v367 = vpop.f32.mrf.mxu0
      %v368 = vadd.f32 0.0, %v367
      %369 = vmatmul.bf16.gmra.mxu0 %v233
      %v370 = vpop.f32.mrf.mxu0
      %v371 = vadd.f32 0.0, %v370
      %v372 = vpop.f32.mrf.mxu0
      %v373 = vadd.f32 0.0, %v372
      %374 = vmatmul.bf16.gmra.mxu0 %v234
      %v375 = vpop.f32.mrf.mxu0
      %v376 = vadd.f32 0.0, %v375
      %v377 = vpop.f32.mrf.mxu0
      %v378 = vadd.f32 0.0, %v377
      %379 = vdwg.mxu0
      %380 = vmatpush.bf16.msra.mxu0 %v314
      %381 = vmatpush.bf16.msra.mxu0 %v312
      %382 = vmatpush.bf16.msra.mxu0 %v310
      %383 = vmatpush.bf16.msra.mxu0 %v308
      %384 = vmatpush.bf16.msra.mxu0 %v306
      %385 = vmatpush.bf16.msra.mxu0 %v304
      %386 = vmatpush.bf16.msra.mxu0 %v302
      %387 = vmatpush.bf16.msra.mxu0 %v300
      %388 = vmatmul.bf16.gmra.mxu0 %v227
      %v389 = vpop.f32.mrf.mxu0
      %v390 = vadd.f32 0.0, %v389
      %v391 = vpop.f32.mrf.mxu0
      %v392 = vadd.f32 0.0, %v391
      %393 = vmatmul.bf16.gmra.mxu0 %v228
      %v394 = vpop.f32.mrf.mxu0
      %v395 = vadd.f32 0.0, %v394
      %v396 = vpop.f32.mrf.mxu0
      %v397 = vadd.f32 0.0, %v396
      %398 = vmatmul.bf16.gmra.mxu0 %v229
      %v399 = vpop.f32.mrf.mxu0
      %v400 = vadd.f32 0.0, %v399
      %v401 = vpop.f32.mrf.mxu0
      %v402 = vadd.f32 0.0, %v401
      %403 = vmatmul.bf16.gmra.mxu0 %v230
      %v404 = vpop.f32.mrf.mxu0
      %v405 = vadd.f32 0.0, %v404
      %v406 = vpop.f32.mrf.mxu0
      %v407 = vadd.f32 0.0, %v406
      %408 = vmatmul.bf16.gmra.mxu0 %v231
      %v409 = vpop.f32.mrf.mxu0
      %v410 = vadd.f32 0.0, %v409
      %v411 = vpop.f32.mrf.mxu0
      %v412 = vadd.f32 0.0, %v411
      %413 = vmatmul.bf16.gmra.mxu0 %v232
      %v414 = vpop.f32.mrf.mxu0
      %v415 = vadd.f32 0.0, %v414
      %v416 = vpop.f32.mrf.mxu0
      %v417 = vadd.f32 0.0, %v416
      %418 = vmatmul.bf16.gmra.mxu0 %v233
      %v419 = vpop.f32.mrf.mxu0
      %v420 = vadd.f32 0.0, %v419
      %v421 = vpop.f32.mrf.mxu0
      %v422 = vadd.f32 0.0, %v421
      %423 = vmatmul.bf16.gmra.mxu0 %v234
      %v424 = vpop.f32.mrf.mxu0
      %v425 = vadd.f32 0.0, %v424
      %v426 = vpop.f32.mrf.mxu0
      %v427 = vadd.f32 0.0, %v426
      %428 = vdwg.mxu0
      %v429 = vld [vmem:[%s196] sm:$0x3]
      %v430 = vadd.f32 %v341, %v343
      %v431 = vadd.f32 %v430, %v346
      %v432 = vadd.f32 %v431, %v348
      %v433 = vadd.f32 %v432, %v351
      %v434 = vadd.f32 %v433, %v353
      %v435 = vadd.f32 %v434, %v356
      %v436 = vadd.f32 %v435, %v358
      %v437 = vadd.f32 %v436, %v361
      %v438 = vadd.f32 %v437, %v363
      %v439 = vadd.f32 %v438, %v366
      %v440 = vadd.f32 %v439, %v368
      %v441 = vadd.f32 %v440, %v371
      %v442 = vadd.f32 %v441, %v373
      %v443 = vadd.f32 %v442, %v376
      %v444 = vadd.f32 %v443, %v378
      %v445 = vrot.slane %v444, 4
      %v446 = vadd.f32 %v444, %v445
      %v447 = vrot.slane %v446, 2
      %v448 = vadd.f32 %v446, %v447
      %v449 = vrot.slane %v448, 1
      %v450 = vadd.f32 %v448, %v449
      %v451 = vadd.f32 %v390, %v392
      %v452 = vadd.f32 %v451, %v395
      %v453 = vadd.f32 %v452, %v397
      %v454 = vadd.f32 %v453, %v400
      %v455 = vadd.f32 %v454, %v402
      %v456 = vadd.f32 %v455, %v405
      %v457 = vadd.f32 %v456, %v407
      %v458 = vadd.f32 %v457, %v410
      %v459 = vadd.f32 %v458, %v412
      %v460 = vadd.f32 %v459, %v415
      %v461 = vadd.f32 %v460, %v417
      %v462 = vadd.f32 %v461, %v420
      %v463 = vadd.f32 %v462, %v422
      %v464 = vadd.f32 %v463, %v425
      %v465 = vadd.f32 %v464, %v427
      %v466 = vrot.slane %v465, 4
      %v467 = vadd.f32 %v465, %v466
      %v468 = vrot.slane %v467, 2
      %v469 = vadd.f32 %v467, %v468
      %v470 = vrot.slane %v469, 1
      %v471 = vadd.f32 %v469, %v470
      %v474 = vrot.slane %v471, 7
      %vm475 = vcmask 1040384
      %v476 = vsel %vm475, %v450, %v474
      %v478 = vadd.f32 %v429, %v476
      %v479 = vlaneseq
      %vm480 = vcmp.ge.s32.totalorder %v479, 0
      %vm481 = vcmp.lt.s32.totalorder %v479, 256
      %vm482 = vmand %vm480, %vm481
      %483 = vst.msk [vmem:[%s196] sm:$0x3] %vm482, %v478
      %v484 = vld [vmem:[%s200] sm:$0x3]
      %v485 = vmul.f32 %v341, %v341
      %v486 = vmul.f32 %v390, %v390
      %v487 = vmul.f32 %v343, %v343
      %v488 = vmul.f32 %v392, %v392
      %v489 = vmul.f32 %v346, %v346
      %v490 = vmul.f32 %v395, %v395
      %v491 = vmul.f32 %v348, %v348
      %v492 = vmul.f32 %v397, %v397
      %v493 = vmul.f32 %v351, %v351
      %v494 = vmul.f32 %v400, %v400
      %v495 = vmul.f32 %v353, %v353
      %v496 = vmul.f32 %v402, %v402
      %v497 = vmul.f32 %v356, %v356
      %v498 = vmul.f32 %v405, %v405
      %v499 = vmul.f32 %v358, %v358
      %v500 = vmul.f32 %v407, %v407
      %v501 = vmul.f32 %v361, %v361
      %v502 = vmul.f32 %v410, %v410
      %v503 = vmul.f32 %v363, %v363
      %v504 = vmul.f32 %v412, %v412
      %v505 = vmul.f32 %v366, %v366
      %v506 = vmul.f32 %v415, %v415
      %v507 = vmul.f32 %v368, %v368
      %v508 = vmul.f32 %v417, %v417
      %v509 = vmul.f32 %v371, %v371
      %v510 = vmul.f32 %v420, %v420
      %v511 = vmul.f32 %v373, %v373
      %v512 = vmul.f32 %v422, %v422
      %v513 = vmul.f32 %v376, %v376
      %v514 = vmul.f32 %v425, %v425
      %v515 = vmul.f32 %v378, %v378
      %v516 = vmul.f32 %v427, %v427
      %v517 = vadd.f32 %v485, %v487
      %v518 = vadd.f32 %v517, %v489
      %v519 = vadd.f32 %v518, %v491
      %v520 = vadd.f32 %v519, %v493
      %v521 = vadd.f32 %v520, %v495
      %v522 = vadd.f32 %v521, %v497
      %v523 = vadd.f32 %v522, %v499
      %v524 = vadd.f32 %v523, %v501
      %v525 = vadd.f32 %v524, %v503
      %v526 = vadd.f32 %v525, %v505
      %v527 = vadd.f32 %v526, %v507
      %v528 = vadd.f32 %v527, %v509
      %v529 = vadd.f32 %v528, %v511
      %v530 = vadd.f32 %v529, %v513
      %v531 = vadd.f32 %v530, %v515
      %v532 = vrot.slane %v531, 4
      %v533 = vadd.f32 %v531, %v532
      %v534 = vrot.slane %v533, 2
      %v535 = vadd.f32 %v533, %v534
      %v536 = vrot.slane %v535, 1
      %v537 = vadd.f32 %v535, %v536
      %v538 = vadd.f32 %v486, %v488
      %v539 = vadd.f32 %v538, %v490
      %v540 = vadd.f32 %v539, %v492
      %v541 = vadd.f32 %v540, %v494
      %v542 = vadd.f32 %v541, %v496
      %v543 = vadd.f32 %v542, %v498
      %v544 = vadd.f32 %v543, %v500
      %v545 = vadd.f32 %v544, %v502
      %v546 = vadd.f32 %v545, %v504
      %v547 = vadd.f32 %v546, %v506
      %v548 = vadd.f32 %v547, %v508
      %v549 = vadd.f32 %v548, %v510
      %v550 = vadd.f32 %v549, %v512
      %v551 = vadd.f32 %v550, %v514
      %v552 = vadd.f32 %v551, %v516
      %v553 = vrot.slane %v552, 4
      %v554 = vadd.f32 %v552, %v553
      %v555 = vrot.slane %v554, 2
      %v556 = vadd.f32 %v554, %v555
      %v557 = vrot.slane %v556, 1
      %v558 = vadd.f32 %v556, %v557
      %v561 = vrot.slane %v558, 7
      %v562 = vsel %vm475, %v537, %v561
      %v564 = vadd.f32 %v484, %v562
      %565 = vst.msk [vmem:[%s200] sm:$0x3] %vm482, %v564
      %p566 = scmp.lt.s32.totalorder %s19, 1
      %s567 = scalar_select %p566, %s19, 1
      %s568 = smul.addr %s567, 2
      %s569 = scalar_lea.vmem %s2, %s568
      %p570 = scmp.lt.s32.totalorder %s19, 1
      %s571 = scalar_select %p570, %s19, 1
      %s572 = smul.addr %s571, 2
      %s573 = scalar_lea.vmem %s3, %s572
      // Predicated region
      $region33: #{prediction_mlp.2} parent=27 // pred_check
        %p574 = pneg %p94
      $region34: #{prediction_mlp.2} parent=27 // pred_check_branch
        %576 = sbr.rel (%p574) target = $region36
      $region35: #{prediction_mlp.2} parent=27 // pred_region
        _
      $region36: #{prediction_mlp.2} parent=27 // pred_fallthru
        _
      // Predicated region
      $region37: #{prediction_mlp.2} parent=27 // pred_check
        %p577 = pneg %p120
      $region38: #{prediction_mlp.2} parent=27 // pred_check_branch
        %579 = sbr.rel (%p577) target = $region40
      $region39: #{prediction_mlp.2} parent=27 // pred_region
        _
      $region40: #{prediction_mlp.2} parent=27 // pred_fallthru
        _
    $region28: #{prediction_mlp.2} parent=5 // pred_fallthru
      _
    %p580 = scmp.le.s32.totalorder 2, %s10
    // Predicated region
    $region41: #{prediction_mlp.2} parent=5 // pred_check
      %p581 = pneg %p580
    $region42: #{prediction_mlp.2} parent=5 // pred_check_branch
      %583 = sbr.rel (%p581) target = $region44
    $region43: #{prediction_mlp.2} parent=5 // pred_region
      %s584 = ssub.s32 %s10, 2
      // Predicated region
      $region45: #{prediction_mlp.2} parent=43 // pred_check
        %p585 = pneg %p100
      $region46: #{prediction_mlp.2} parent=43 // pred_check_branch
        %587 = sbr.rel (%p585) target = $region48
      $region47: #{prediction_mlp.2} parent=43 // pred_region
        %p588 = scmp.lt.s32.totalorder %s21, 1
        %s589 = scalar_select %p588, %s21, 1
        %s590 = smul.addr %s589, 2
        %s591 = scalar_lea.vmem %s2, %s590
      $region48: #{prediction_mlp.2} parent=43 // pred_fallthru
        _
      // Predicated region
      $region49: #{prediction_mlp.2} parent=43 // pred_check
        %p592 = pneg %p126
      $region50: #{prediction_mlp.2} parent=43 // pred_check_branch
        %594 = sbr.rel (%p592) target = $region52
      $region51: #{prediction_mlp.2} parent=43 // pred_region
        %p595 = scmp.lt.s32.totalorder %s21, 1
        %s596 = scalar_select %p595, %s21, 1
        %s597 = smul.addr %s596, 2
        %s598 = scalar_lea.vmem %s3, %s597
      $region52: #{prediction_mlp.2} parent=43 // pred_fallthru
        _
    $region44: #{prediction_mlp.2} parent=5 // pred_fallthru
      _
  $region6: #{prediction_mlp.2} parent=0 // loop_footer
    %s14 = sadd.s32 1, %s10
  $region7: #{prediction_mlp.2} parent=0 // loop_footer_branch
    %9 = sbr.rel target = $region3
  $region8: #{prediction_mlp.2} parent=0 // loop_exit
    _

// kernel: prediction_mlp.3
$region0: #{prediction_mlp.3}
  #allocation0 [shape = 'u32[]', space=smem, size = 0x4, offset = 0x4, fixed_abs, tag = 'smem constant byte address 0x4 - core index']
  #allocation1 [shape = 'u32[72,128]{1,0:T(1,128)}', space=vmem, size = 0x9000, scoped, tag = 'internal scratch']
  %s0 = inlined_call_operand.vmem [shape: f32[256,128], index: 0, kind: input, shape index: {}]
  %s1 = inlined_call_operand.vmem [shape: bf16[128,256], index: 1, kind: input, shape index: {}]
  %s2 = inlined_call_operand.vmem [shape: f32[1,256], index: 2, kind: input, shape index: {}]
  %s3 = inlined_call_operand.vmem [shape: f32[1,256], index: 3, kind: input, shape index: {}]
  %s4 = inlined_call_operand.vmem [shape: bf16[256,128], index: 4, kind: input, shape index: {}]
  %s5 = inlined_call_operand.vmem [shape: f32[1,128], index: 5, kind: input, shape index: {}]
  %s6 = inlined_call_operand.hbm [shape: f32[256,128], index: 6, kind: output, shape index: {}]
  %s7 = sld [smem:[#allocation0]]
  $region57: #{prediction_mlp.3} parent=0
    _
  %s9 = ssub.s32 1, %s7
  %s10 = scalar_select 0, %s9, %s7
  $region1: #{prediction_mlp.3} parent=0
    #allocation2 [shape = 'u8[131072]{0}', space=vmem, size = 0x20000, scoped, tag = 'output window, operand 0']
    #allocation3 [shape = 's32[2]{0}', space=sflag, size = 0x8, scoped, tag = 'scoped memory for prediction_mlp.3']
    %11 = vsyncpa [#allocation3], 0
    %s12 = scalar_lea.sflag [#allocation3], 1
    %13 = vsyncpa %s12, 0
    loop: start=0, step=1, limit=4
    $region2: #{prediction_mlp.3} parent=1 // loop_pre_header
      _
    $region3: #{prediction_mlp.3} parent=1 // loop_header
      %s15 = sphi 0, %s19
      %p16 = scmp.ge.s32.totalorder %s15, 4
      %s25 = sphi 0, %s27
      %s28 = sphi 0, %s25
      %s29 = sphi 0, %s28
      %s45 = sphi 0, %s29
      %s49 = sphi 0, %s49
      %s51 = sphi 0, %s49
      %s52 = sphi 0, %s51
      %s66 = sphi 0, %s52
      %s70 = sphi 0, %s70
      %s72 = sphi 0, %s70
      %s73 = sphi 0, %s72
      %s87 = sphi 0, %s73
      %s91 = sphi 0, %s91
      %s93 = sphi 0, %s91
      %s94 = sphi 0, %s93
      %s108 = sphi 0, %s94
      %s112 = sphi 0, %s112
      %s114 = sphi 0, %s112
      %s115 = sphi 0, %s114
      %s129 = sphi 0, %s115
      %s133 = sphi 0, %s133
      %s135 = sphi 0, %s133
      %s136 = sphi 0, %s135
      %s150 = sphi 0, %s136
      %s156 = sphi 0, %s158
      %s159 = sphi 0, %s156
      %s160 = sphi 0, %s159
      %s176 = sphi 0, %s160
    $region4: #{prediction_mlp.3} parent=1 // loop_header_branch
      %18 = sbr.rel (%p16) target = $region8
    $region5: #{prediction_mlp.3} parent=1 // loop_body
      %s20 = ssub.s32 %s15, 1
      %s21 = ssub.s32 %s15, 2
      %s22 = sadd.s32 %s15, 1
      %s23 = ssub.s32 %s15, %s22
      %p24 = scmp.eq.s32.totalorder %s23, 0
      %s26 = sadd.s32 %s25, 1
      %s27 = scalar_select %p24, %s25, %s26
      %p30 = pneg %p24
      %p31 = scmp.eq.s32.totalorder %s15, 1
      %p32 = por %p30, %p31
      %p33 = scmp.ne.s32.totalorder %s25, %s28
      %p34 = scmp.eq.s32.totalorder %s15, 0
      %p35 = por %p33, %p34
      %p36 = scmp.ne.s32.totalorder %s25, %s28
      %p37 = scmp.eq.s32.totalorder %s20, 1
      %p38 = por %p36, %p37
      %p39 = scmp.ne.s32.totalorder %s28, %s29
      %p40 = scmp.eq.s32.totalorder %s20, 0
      %p41 = por %p39, %p40
      %p42 = scmp.ne.s32.totalorder %s28, %s29
      %p43 = scmp.eq.s32.totalorder %s21, 1
      %p44 = por %p42, %p43
      %p46 = scmp.ne.s32.totalorder %s29, %s45
      %p47 = scmp.eq.s32.totalorder %s21, 0
      %p48 = por %p46, %p47
      %s50 = sadd.s32 %s49, 1
      %p53 = scmp.eq.s32.totalorder %s15, 1
      %p54 = scmp.ne.s32.totalorder %s49, %s51
      %p55 = scmp.eq.s32.totalorder %s15, 0
      %p56 = por %p54, %p55
      %p57 = scmp.ne.s32.totalorder %s49, %s51
      %p58 = scmp.eq.s32.totalorder %s20, 1
      %p59 = por %p57, %p58
      %p60 = scmp.ne.s32.totalorder %s51, %s52
      %p61 = scmp.eq.s32.totalorder %s20, 0
      %p62 = por %p60, %p61
      %p63 = scmp.ne.s32.totalorder %s51, %s52
      %p64 = scmp.eq.s32.totalorder %s21, 1
      %p65 = por %p63, %p64
      %p67 = scmp.ne.s32.totalorder %s52, %s66
      %p68 = scmp.eq.s32.totalorder %s21, 0
      %p69 = por %p67, %p68
      %s71 = sadd.s32 %s70, 1
      %p74 = scmp.eq.s32.totalorder %s15, 1
      %p75 = scmp.ne.s32.totalorder %s70, %s72
      %p76 = scmp.eq.s32.totalorder %s15, 0
      %p77 = por %p75, %p76
      %p78 = scmp.ne.s32.totalorder %s70, %s72
      %p79 = scmp.eq.s32.totalorder %s20, 1
      %p80 = por %p78, %p79
      %p81 = scmp.ne.s32.totalorder %s72, %s73
      %p82 = scmp.eq.s32.totalorder %s20, 0
      %p83 = por %p81, %p82
      %p84 = scmp.ne.s32.totalorder %s72, %s73
      %p85 = scmp.eq.s32.totalorder %s21, 1
      %p86 = por %p84, %p85
      %p88 = scmp.ne.s32.totalorder %s73, %s87
      %p89 = scmp.eq.s32.totalorder %s21, 0
      %p90 = por %p88, %p89
      %s92 = sadd.s32 %s91, 1
      %p95 = scmp.eq.s32.totalorder %s15, 1
      %p96 = scmp.ne.s32.totalorder %s91, %s93
      %p97 = scmp.eq.s32.totalorder %s15, 0
      %p98 = por %p96, %p97
      %p99 = scmp.ne.s32.totalorder %s91, %s93
      %p100 = scmp.eq.s32.totalorder %s20, 1
      %p101 = por %p99, %p100
      %p102 = scmp.ne.s32.totalorder %s93, %s94
      %p103 = scmp.eq.s32.totalorder %s20, 0
      %p104 = por %p102, %p103
      %p105 = scmp.ne.s32.totalorder %s93, %s94
      %p106 = scmp.eq.s32.totalorder %s21, 1
      %p107 = por %p105, %p106
      %p109 = scmp.ne.s32.totalorder %s94, %s108
      %p110 = scmp.eq.s32.totalorder %s21, 0
      %p111 = por %p109, %p110
      %s113 = sadd.s32 %s112, 1
      %p116 = scmp.eq.s32.totalorder %s15, 1
      %p117 = scmp.ne.s32.totalorder %s112, %s114
      %p118 = scmp.eq.s32.totalorder %s15, 0
      %p119 = por %p117, %p118
      %p120 = scmp.ne.s32.totalorder %s112, %s114
      %p121 = scmp.eq.s32.totalorder %s20, 1
      %p122 = por %p120, %p121
      %p123 = scmp.ne.s32.totalorder %s114, %s115
      %p124 = scmp.eq.s32.totalorder %s20, 0
      %p125 = por %p123, %p124
      %p126 = scmp.ne.s32.totalorder %s114, %s115
      %p127 = scmp.eq.s32.totalorder %s21, 1
      %p128 = por %p126, %p127
      %p130 = scmp.ne.s32.totalorder %s115, %s129
      %p131 = scmp.eq.s32.totalorder %s21, 0
      %p132 = por %p130, %p131
      %s134 = sadd.s32 %s133, 1
      %p137 = scmp.eq.s32.totalorder %s15, 1
      %p138 = scmp.ne.s32.totalorder %s133, %s135
      %p139 = scmp.eq.s32.totalorder %s15, 0
      %p140 = por %p138, %p139
      %p141 = scmp.ne.s32.totalorder %s133, %s135
      %p142 = scmp.eq.s32.totalorder %s20, 1
      %p143 = por %p141, %p142
      %p144 = scmp.ne.s32.totalorder %s135, %s136
      %p145 = scmp.eq.s32.totalorder %s20, 0
      %p146 = por %p144, %p145
      %p147 = scmp.ne.s32.totalorder %s135, %s136
      %p148 = scmp.eq.s32.totalorder %s21, 1
      %p149 = por %p147, %p148
      %p151 = scmp.ne.s32.totalorder %s136, %s150
      %p152 = scmp.eq.s32.totalorder %s21, 0
      %p153 = por %p151, %p152
      %s154 = ssub.s32 %s15, %s22
      %p155 = scmp.eq.s32.totalorder %s154, 0
      %s157 = sadd.s32 %s156, 1
      %s158 = scalar_select %p155, %s156, %s157
      %p161 = pneg %p155
      %p162 = scmp.eq.s32.totalorder %s15, 1
      %p163 = por %p161, %p162
      %p164 = scmp.ne.s32.totalorder %s156, %s159
      %p165 = scmp.eq.s32.totalorder %s15, 0
      %p166 = por %p164, %p165
      %p167 = scmp.ne.s32.totalorder %s156, %s159
      %p168 = scmp.eq.s32.totalorder %s20, 1
      %p169 = por %p167, %p168
      %p170 = scmp.ne.s32.totalorder %s159, %s160
      %p171 = scmp.eq.s32.totalorder %s20, 0
      %p172 = por %p170, %p171
      %p173 = scmp.ne.s32.totalorder %s159, %s160
      %p174 = scmp.eq.s32.totalorder %s21, 1
      %p175 = por %p173, %p174
      %p177 = scmp.ne.s32.totalorder %s160, %s176
      %p178 = scmp.eq.s32.totalorder %s21, 0
      %p179 = por %p177, %p178
      %p180 = scmp.le.s32.totalorder 1, %s15
      %p181 = scmp.lt.s32.totalorder %s15, 3
      %p182 = pnand %p180, %p181
      %p183 = pneg %p182
      // Predicated region
      $region9: #{prediction_mlp.3} parent=5 // pred_check
        _
      $region10: #{prediction_mlp.3} parent=5 // pred_check_branch
        %185 = sbr.rel (%p182) target = $region12
      $region11: #{prediction_mlp.3} parent=5 // pred_region
        %s186 = ssub.s32 %s15, 1
        // Predicated region
        $region13: #{prediction_mlp.3} parent=11 // pred_check
          %p187 = pneg %p62
        $region14: #{prediction_mlp.3} parent=11 // pred_check_branch
          %189 = sbr.rel (%p187) target = $region16
        $region15: #{prediction_mlp.3} parent=11 // pred_region
          _
        $region16: #{prediction_mlp.3} parent=11 // pred_fallthru
          _
        // Predicated region
        $region17: #{prediction_mlp.3} parent=11 // pred_check
          %p190 = pneg %p83
        $region18: #{prediction_mlp.3} parent=11 // pred_check_branch
          %192 = sbr.rel (%p190) target = $region20
        $region19: #{prediction_mlp.3} parent=11 // pred_region
          _
        $region20: #{prediction_mlp.3} parent=11 // pred_fallthru
          _
        // Predicated region
        $region21: #{prediction_mlp.3} parent=11 // pred_check
          %p193 = pneg %p104
        $region22: #{prediction_mlp.3} parent=11 // pred_check_branch
          %195 = sbr.rel (%p193) target = $region24
        $region23: #{prediction_mlp.3} parent=11 // pred_region
          _
        $region24: #{prediction_mlp.3} parent=11 // pred_fallthru
          _
        // Predicated region
        $region25: #{prediction_mlp.3} parent=11 // pred_check
          %p196 = pneg %p125
        $region26: #{prediction_mlp.3} parent=11 // pred_check_branch
          %198 = sbr.rel (%p196) target = $region28
        $region27: #{prediction_mlp.3} parent=11 // pred_region
          _
        $region28: #{prediction_mlp.3} parent=11 // pred_fallthru
          _
        // Predicated region
        $region29: #{prediction_mlp.3} parent=11 // pred_check
          %p199 = pneg %p146
        $region30: #{prediction_mlp.3} parent=11 // pred_check_branch
          %201 = sbr.rel (%p199) target = $region32
        $region31: #{prediction_mlp.3} parent=11 // pred_region
          _
        $region32: #{prediction_mlp.3} parent=11 // pred_fallthru
          _
      $region12: #{prediction_mlp.3} parent=5 // pred_fallthru
        _
      %p202 = scmp.lt.s32.totalorder %s15, 2
      // Predicated region
      $region33: #{prediction_mlp.3} parent=5 // pred_check
        %p203 = pneg %p202
      $region34: #{prediction_mlp.3} parent=5 // pred_check_branch
        %205 = sbr.rel (%p203) target = $region36
      $region35: #{prediction_mlp.3} parent=5 // pred_region
        // Predicated region
        $region37: #{prediction_mlp.3} parent=35 // pred_check
          %p206 = pneg %p35
        $region38: #{prediction_mlp.3} parent=35 // pred_check_branch
          %208 = sbr.rel (%p206) target = $region40
        $region39: #{prediction_mlp.3} parent=35 // pred_region
          %s209 = smul.u32 16, %s15
          %p210 = scmp.lt.s32.totalorder %s209, 31
          %s211 = scalar_select %p210, %s209, 31
          %s212 = smul.addr %s211, 8
          %s213 = scalar_lea.vmem %s0, %s212
          %s214 = smul.u32 16, %s15
        $region40: #{prediction_mlp.3} parent=35 // pred_fallthru
          _
      $region36: #{prediction_mlp.3} parent=5 // pred_fallthru
        _
      %p215 = scmp.le.s32.totalorder 1, %s15
      %p216 = scmp.lt.s32.totalorder %s15, 3
      %p217 = pnand %p215, %p216
      %p218 = pneg %p217
      // Predicated region
      $region41: #{prediction_mlp.3} parent=5 // pred_check
        _
      $region42: #{prediction_mlp.3} parent=5 // pred_check_branch
        %220 = sbr.rel (%p217) target = $region44
      $region43: #{prediction_mlp.3} parent=5 // pred_region
        %s221 = ssub.s32 %s15, 1
        %s222 = smul.u32 16, %s20
        %p223 = scmp.lt.s32.totalorder %s222, 31
        %s224 = scalar_select %p223, %s222, 31
        %s225 = smul.addr %s224, 8
        %s226 = scalar_lea.vmem %s0, %s225
        %p227 = pneg %p41
        %p228 = pneg %p38
        %p229 = pneg %p62
        %p230 = pneg %p59
        %p231 = pneg %p83
        %p232 = pneg %p80
        %p233 = pneg %p104
        %p234 = pneg %p101
        %p235 = pneg %p125
        %p236 = pneg %p122
        %p237 = pneg %p146
        %p238 = pneg %p143
        %p239 = pneg %p172
        %p240 = pneg %p169
        %s241 = sand.u32 %s159, 1
        %s242 = scalar_lea.sflag [#allocation3], %s241
        %s243 = sand.u32 %s159, 1
        %s244 = smul.addr %s243, 128
        %s245 = scalar_lea.vmem [#allocation2], %s244
        %s246 = smul.u32 16, %s20
        %p247 = scmp.lt.s32.totalorder %s246, 31
        %s248 = scalar_select %p247, %s246, 31
        %s249 = smul.addr %s248, 8
        %s250 = scalar_lea.vmem %s0, %s249
        %s251 = smul.u32 16, %s20
        %s252 = smul.u32 16, %s20
        %v253 = vld [vmem:[%s250] sm:$0xff]
        %v254 = vld [vmem:[%s250 + $0x8] sm:$0xff]
        %v255 = vld [vmem:[%s250 + $0x10] sm:$0xff]
        %v256 = vld [vmem:[%s250 + $0x18] sm:$0xff]
        %v257 = vld [vmem:[%s250 + $0x20] sm:$0xff]
        %v258 = vld [vmem:[%s250 + $0x28] sm:$0xff]
        %v259 = vld [vmem:[%s250 + $0x30] sm:$0xff]
        %v260 = vld [vmem:[%s250 + $0x38] sm:$0xff]
        %v261 = vld [vmem:[%s250 + $0x40] sm:$0xff]
        %v262 = vld [vmem:[%s250 + $0x48] sm:$0xff]
        %v263 = vld [vmem:[%s250 + $0x50] sm:$0xff]
        %v264 = vld [vmem:[%s250 + $0x58] sm:$0xff]
        %v265 = vld [vmem:[%s250 + $0x60] sm:$0xff]
        %v266 = vld [vmem:[%s250 + $0x68] sm:$0xff]
        %v267 = vld [vmem:[%s250 + $0x70] sm:$0xff]
        %v268 = vld [vmem:[%s250 + $0x78] sm:$0xff]
        %v269 = vpack.c.bf16 %v254, %v253
        %v270 = vpack.c.bf16 %v256, %v255
        %v271 = vpack.c.bf16 %v258, %v257
        %v272 = vpack.c.bf16 %v260, %v259
        %v273 = vpack.c.bf16 %v262, %v261
        %v274 = vpack.c.bf16 %v264, %v263
        %v275 = vpack.c.bf16 %v266, %v265
        %v276 = vpack.c.bf16 %v268, %v267
        %v277 = vld [vmem:[%s1] sm:$0xff]
        %v278 = vld [vmem:[%s1 + $0x8] sm:$0xff]
        %v279 = vld [vmem:[%s1 + $0x10] sm:$0xff]
        %v280 = vld [vmem:[%s1 + $0x18] sm:$0xff]
        %v281 = vld [vmem:[%s1 + $0x20] sm:$0xff]
        %v282 = vld [vmem:[%s1 + $0x28] sm:$0xff]
        %v283 = vld [vmem:[%s1 + $0x30] sm:$0xff]
        %v284 = vld [vmem:[%s1 + $0x38] sm:$0xff]
        %v285 = vld [vmem:[%s1 + $0x40] sm:$0xff]
        %v286 = vld [vmem:[%s1 + $0x48] sm:$0xff]
        %v287 = vld [vmem:[%s1 + $0x50] sm:$0xff]
        %v288 = vld [vmem:[%s1 + $0x58] sm:$0xff]
        %v289 = vld [vmem:[%s1 + $0x60] sm:$0xff]
        %v290 = vld [vmem:[%s1 + $0x68] sm:$0xff]
        %v291 = vld [vmem:[%s1 + $0x70] sm:$0xff]
        %v292 = vld [vmem:[%s1 + $0x78] sm:$0xff]
        %v309 = vunpack.c.l.b16 %v277
        %v310 = vunpack.c.h.b16 %v277
        %v311 = vunpack.c.l.b16 %v278
        %v312 = vunpack.c.h.b16 %v278
        %v313 = vunpack.c.l.b16 %v279
        %v314 = vunpack.c.h.b16 %v279
        %v315 = vunpack.c.l.b16 %v280
        %v316 = vunpack.c.h.b16 %v280
        %v317 = vunpack.c.l.b16 %v281
        %v318 = vunpack.c.h.b16 %v281
        %v319 = vunpack.c.l.b16 %v282
        %v320 = vunpack.c.h.b16 %v282
        %v321 = vunpack.c.l.b16 %v283
        %v322 = vunpack.c.h.b16 %v283
        %v323 = vunpack.c.l.b16 %v284
        %v324 = vunpack.c.h.b16 %v284
        %v325 = vunpack.c.l.b16 %v285
        %v326 = vunpack.c.h.b16 %v285
        %v327 = vunpack.c.l.b16 %v286
        %v328 = vunpack.c.h.b16 %v286
        %v329 = vunpack.c.l.b16 %v287
        %v330 = vunpack.c.h.b16 %v287
        %v331 = vunpack.c.l.b16 %v288
        %v332 = vunpack.c.h.b16 %v288
        %v333 = vunpack.c.l.b16 %v289
        %v334 = vunpack.c.h.b16 %v289
        %v335 = vunpack.c.l.b16 %v290
        %v336 = vunpack.c.h.b16 %v290
        %v337 = vunpack.c.l.b16 %v291
        %v338 = vunpack.c.h.b16 %v291
        %v339 = vunpack.c.l.b16 %v292
        %v340 = vunpack.c.h.b16 %v292
        %v341 = vpack.c.b16 %v311, %v309
        %v342 = vpack.c.b16 %v312, %v310
        %v343 = vpack.c.b16 %v315, %v313
        %v344 = vpack.c.b16 %v316, %v314
        %v345 = vpack.c.b16 %v319, %v317
        %v346 = vpack.c.b16 %v320, %v318
        %v347 = vpack.c.b16 %v323, %v321
        %v348 = vpack.c.b16 %v324, %v322
        %v349 = vpack.c.b16 %v327, %v325
        %v350 = vpack.c.b16 %v328, %v326
        %v351 = vpack.c.b16 %v331, %v329
        %v352 = vpack.c.b16 %v332, %v330
        %v353 = vpack.c.b16 %v335, %v333
        %v354 = vpack.c.b16 %v336, %v334
        %v355 = vpack.c.b16 %v339, %v337
        %v356 = vpack.c.b16 %v340, %v338
        %373 = vmatpush.bf16.msra.mxu0 %v355
        %374 = vmatpush.bf16.msra.mxu0 %v353
        %375 = vmatpush.bf16.msra.mxu0 %v351
        %376 = vmatpush.bf16.msra.mxu0 %v349
        %377 = vmatpush.bf16.msra.mxu0 %v347
        %378 = vmatpush.bf16.msra.mxu0 %v345
        %379 = vmatpush.bf16.msra.mxu0 %v343
        %380 = vmatpush.bf16.msra.mxu0 %v341
        %381 = vmatmul.bf16.gmra.mxu0 %v269
        %v382 = vpop.f32.mrf.mxu0
        %v383 = vadd.f32 0.0, %v382
        %v384 = vpop.f32.mrf.mxu0
        %v385 = vadd.f32 0.0, %v384
        %386 = vmatmul.bf16.gmra.mxu0 %v270
        %v387 = vpop.f32.mrf.mxu0
        %v388 = vadd.f32 0.0, %v387
        %v389 = vpop.f32.mrf.mxu0
        %v390 = vadd.f32 0.0, %v389
        %391 = vmatmul.bf16.gmra.mxu0 %v271
        %v392 = vpop.f32.mrf.mxu0
        %v393 = vadd.f32 0.0, %v392
        %v394 = vpop.f32.mrf.mxu0
        %v395 = vadd.f32 0.0, %v394
        %396 = vmatmul.bf16.gmra.mxu0 %v272
        %v397 = vpop.f32.mrf.mxu0
        %v398 = vadd.f32 0.0, %v397
        %v399 = vpop.f32.mrf.mxu0
        %v400 = vadd.f32 0.0, %v399
        %401 = vmatmul.bf16.gmra.mxu0 %v273
        %v402 = vpop.f32.mrf.mxu0
        %v403 = vadd.f32 0.0, %v402
        %v404 = vpop.f32.mrf.mxu0
        %v405 = vadd.f32 0.0, %v404
        %406 = vmatmul.bf16.gmra.mxu0 %v274
        %v407 = vpop.f32.mrf.mxu0
        %v408 = vadd.f32 0.0, %v407
        %v409 = vpop.f32.mrf.mxu0
        %v410 = vadd.f32 0.0, %v409
        %411 = vmatmul.bf16.gmra.mxu0 %v275
        %v412 = vpop.f32.mrf.mxu0
        %v413 = vadd.f32 0.0, %v412
        %v414 = vpop.f32.mrf.mxu0
        %v415 = vadd.f32 0.0, %v414
        %416 = vmatmul.bf16.gmra.mxu0 %v276
        %v417 = vpop.f32.mrf.mxu0
        %v418 = vadd.f32 0.0, %v417
        %v419 = vpop.f32.mrf.mxu0
        %v420 = vadd.f32 0.0, %v419
        %421 = vdwg.mxu0
        %422 = vmatpush.bf16.msra.mxu0 %v356
        %423 = vmatpush.bf16.msra.mxu0 %v354
        %424 = vmatpush.bf16.msra.mxu0 %v352
        %425 = vmatpush.bf16.msra.mxu0 %v350
        %426 = vmatpush.bf16.msra.mxu0 %v348
        %427 = vmatpush.bf16.msra.mxu0 %v346
        %428 = vmatpush.bf16.msra.mxu0 %v344
        %429 = vmatpush.bf16.msra.mxu0 %v342
        %430 = vmatmul.bf16.gmra.mxu0 %v269
        %v431 = vpop.f32.mrf.mxu0
        %v432 = vadd.f32 0.0, %v431
        %v433 = vpop.f32.mrf.mxu0
        %v434 = vadd.f32 0.0, %v433
        %435 = vmatmul.bf16.gmra.mxu0 %v270
        %v436 = vpop.f32.mrf.mxu0
        %v437 = vadd.f32 0.0, %v436
        %v438 = vpop.f32.mrf.mxu0
        %v439 = vadd.f32 0.0, %v438
        %440 = vmatmul.bf16.gmra.mxu0 %v271
        %v441 = vpop.f32.mrf.mxu0
        %v442 = vadd.f32 0.0, %v441
        %v443 = vpop.f32.mrf.mxu0
        %v444 = vadd.f32 0.0, %v443
        %445 = vmatmul.bf16.gmra.mxu0 %v272
        %v446 = vpop.f32.mrf.mxu0
        %v447 = vadd.f32 0.0, %v446
        %v448 = vpop.f32.mrf.mxu0
        %v449 = vadd.f32 0.0, %v448
        %450 = vmatmul.bf16.gmra.mxu0 %v273
        %v451 = vpop.f32.mrf.mxu0
        %v452 = vadd.f32 0.0, %v451
        %v453 = vpop.f32.mrf.mxu0
        %v454 = vadd.f32 0.0, %v453
        %455 = vmatmul.bf16.gmra.mxu0 %v274
        %v456 = vpop.f32.mrf.mxu0
        %v457 = vadd.f32 0.0, %v456
        %v458 = vpop.f32.mrf.mxu0
        %v459 = vadd.f32 0.0, %v458
        %460 = vmatmul.bf16.gmra.mxu0 %v275
        %v461 = vpop.f32.mrf.mxu0
        %v462 = vadd.f32 0.0, %v461
        %v463 = vpop.f32.mrf.mxu0
        %v464 = vadd.f32 0.0, %v463
        %465 = vmatmul.bf16.gmra.mxu0 %v276
        %v466 = vpop.f32.mrf.mxu0
        %v467 = vadd.f32 0.0, %v466
        %v468 = vpop.f32.mrf.mxu0
        %v469 = vadd.f32 0.0, %v468
        %470 = vdwg.mxu0
        %v471 = vld [vmem:[%s2] sm:$0x3]
        %v473 = vperm.slane %v471, 0
        %v474 = vperm.slane %v471, 1
        %v477 = vmul.f32 %v383, %v473
        %v478 = vmul.f32 %v432, %v474
        %v479 = vmul.f32 %v385, %v473
        %v480 = vmul.f32 %v434, %v474
        %v481 = vmul.f32 %v388, %v473
        %v482 = vmul.f32 %v437, %v474
        %v483 = vmul.f32 %v390, %v473
        %v484 = vmul.f32 %v439, %v474
        %v485 = vmul.f32 %v393, %v473
        %v486 = vmul.f32 %v442, %v474
        %v487 = vmul.f32 %v395, %v473
        %v488 = vmul.f32 %v444, %v474
        %v489 = vmul.f32 %v398, %v473
        %v490 = vmul.f32 %v447, %v474
        %v491 = vmul.f32 %v400, %v473
        %v492 = vmul.f32 %v449, %v474
        %v493 = vmul.f32 %v403, %v473
        %v494 = vmul.f32 %v452, %v474
        %v495 = vmul.f32 %v405, %v473
        %v496 = vmul.f32 %v454, %v474
        %v497 = vmul.f32 %v408, %v473
        %v498 = vmul.f32 %v457, %v474
        %v499 = vmul.f32 %v410, %v473
        %v500 = vmul.f32 %v459, %v474
        %v501 = vmul.f32 %v413, %v473
        %v502 = vmul.f32 %v462, %v474
        %v503 = vmul.f32 %v415, %v473
        %v504 = vmul.f32 %v464, %v474
        %v505 = vmul.f32 %v418, %v473
        %v506 = vmul.f32 %v467, %v474
        %v507 = vmul.f32 %v420, %v473
        %v508 = vmul.f32 %v469, %v474
        %v509 = vld [vmem:[%s3] sm:$0x3]
        %v511 = vperm.slane %v509, 0
        %v512 = vperm.slane %v509, 1
        %v515 = vadd.f32 %v477, %v511
        %v516 = vadd.f32 %v478, %v512
        %v517 = vadd.f32 %v479, %v511
        %v518 = vadd.f32 %v480, %v512
        %v519 = vadd.f32 %v481, %v511
        %v520 = vadd.f32 %v482, %v512
        %v521 = vadd.f32 %v483, %v511
        %v522 = vadd.f32 %v484, %v512
        %v523 = vadd.f32 %v485, %v511
        %v524 = vadd.f32 %v486, %v512
        %v525 = vadd.f32 %v487, %v511
        %v526 = vadd.f32 %v488, %v512
        %v527 = vadd.f32 %v489, %v511
        %v528 = vadd.f32 %v490, %v512
        %v529 = vadd.f32 %v491, %v511
        %v530 = vadd.f32 %v492, %v512
        %v531 = vadd.f32 %v493, %v511
        %v532 = vadd.f32 %v494, %v512
        %v533 = vadd.f32 %v495, %v511
        %v534 = vadd.f32 %v496, %v512
        %v535 = vadd.f32 %v497, %v511
        %v536 = vadd.f32 %v498, %v512
        %v537 = vadd.f32 %v499, %v511
        %v538 = vadd.f32 %v500, %v512
        %v539 = vadd.f32 %v501, %v511
        %v540 = vadd.f32 %v502, %v512
        %v541 = vadd.f32 %v503, %v511
        %v542 = vadd.f32 %v504, %v512
        %v543 = vadd.f32 %v505, %v511
        %v544 = vadd.f32 %v506, %v512
        %v545 = vadd.f32 %v507, %v511
        %v546 = vadd.f32 %v508, %v512
        %v547 = vmax.f32 %v515, 0.0
        %v548 = vmax.f32 %v516, 0.0
        %v549 = vmax.f32 %v517, 0.0
        %v550 = vmax.f32 %v518, 0.0
        %v551 = vmax.f32 %v519, 0.0
        %v552 = vmax.f32 %v520, 0.0
        %v553 = vmax.f32 %v521, 0.0
        %v554 = vmax.f32 %v522, 0.0
        %v555 = vmax.f32 %v523, 0.0
        %v556 = vmax.f32 %v524, 0.0
        %v557 = vmax.f32 %v525, 0.0
        %v558 = vmax.f32 %v526, 0.0
        %v559 = vmax.f32 %v527, 0.0
        %v560 = vmax.f32 %v528, 0.0
        %v561 = vmax.f32 %v529, 0.0
        %v562 = vmax.f32 %v530, 0.0
        %v563 = vmax.f32 %v531, 0.0
        %v564 = vmax.f32 %v532, 0.0
        %v565 = vmax.f32 %v533, 0.0
        %v566 = vmax.f32 %v534, 0.0
        %v567 = vmax.f32 %v535, 0.0
        %v568 = vmax.f32 %v536, 0.0
        %v569 = vmax.f32 %v537, 0.0
        %v570 = vmax.f32 %v538, 0.0
        %v571 = vmax.f32 %v539, 0.0
        %v572 = vmax.f32 %v540, 0.0
        %v573 = vmax.f32 %v541, 0.0
        %v574 = vmax.f32 %v542, 0.0
        %v575 = vmax.f32 %v543, 0.0
        %v576 = vmax.f32 %v544, 0.0
        %v577 = vmax.f32 %v545, 0.0
        %v578 = vmax.f32 %v546, 0.0
        %v579 = vpack.c.bf16 %v549, %v547
        %v580 = vpack.c.bf16 %v550, %v548
        %v581 = vpack.c.bf16 %v553, %v551
        %v582 = vpack.c.bf16 %v554, %v552
        %v583 = vpack.c.bf16 %v557, %v555
        %v584 = vpack.c.bf16 %v558, %v556
        %v585 = vpack.c.bf16 %v561, %v559
        %v586 = vpack.c.bf16 %v562, %v560
        %v587 = vpack.c.bf16 %v565, %v563
        %v588 = vpack.c.bf16 %v566, %v564
        %v589 = vpack.c.bf16 %v569, %v567
        %v590 = vpack.c.bf16 %v570, %v568
        %v591 = vpack.c.bf16 %v573, %v571
        %v592 = vpack.c.bf16 %v574, %v572
        %v593 = vpack.c.bf16 %v577, %v575
        %v594 = vpack.c.bf16 %v578, %v576
        %v595 = vld [vmem:[%s4] sm:$0xf]
        %v596 = vld [vmem:[%s4 + $0x4] sm:$0xf]
        %v597 = vld [vmem:[%s4 + $0x8] sm:$0xf]
        %v598 = vld [vmem:[%s4 + $0xc] sm:$0xf]
        %v599 = vld [vmem:[%s4 + $0x10] sm:$0xf]
        %v600 = vld [vmem:[%s4 + $0x14] sm:$0xf]
        %v601 = vld [vmem:[%s4 + $0x18] sm:$0xf]
        %v602 = vld [vmem:[%s4 + $0x1c] sm:$0xf]
        %v603 = vld [vmem:[%s4 + $0x20] sm:$0xf]
        %v604 = vld [vmem:[%s4 + $0x24] sm:$0xf]
        %v605 = vld [vmem:[%s4 + $0x28] sm:$0xf]
        %v606 = vld [vmem:[%s4 + $0x2c] sm:$0xf]
        %v607 = vld [vmem:[%s4 + $0x30] sm:$0xf]
        %v608 = vld [vmem:[%s4 + $0x34] sm:$0xf]
        %v609 = vld [vmem:[%s4 + $0x38] sm:$0xf]
        %v610 = vld [vmem:[%s4 + $0x3c] sm:$0xf]
        %v611 = vld [vmem:[%s4 + $0x40] sm:$0xf]
        %v612 = vld [vmem:[%s4 + $0x44] sm:$0xf]
        %v613 = vld [vmem:[%s4 + $0x48] sm:$0xf]
        %v614 = vld [vmem:[%s4 + $0x4c] sm:$0xf]
        %v615 = vld [vmem:[%s4 + $0x50] sm:$0xf]
        %v616 = vld [vmem:[%s4 + $0x54] sm:$0xf]
        %v617 = vld [vmem:[%s4 + $0x58] sm:$0xf]
        %v618 = vld [vmem:[%s4 + $0x5c] sm:$0xf]
        %v619 = vld [vmem:[%s4 + $0x60] sm:$0xf]
        %v620 = vld [vmem:[%s4 + $0x64] sm:$0xf]
        %v621 = vld [vmem:[%s4 + $0x68] sm:$0xf]
        %v622 = vld [vmem:[%s4 + $0x6c] sm:$0xf]
        %v623 = vld [vmem:[%s4 + $0x70] sm:$0xf]
        %v624 = vld [vmem:[%s4 + $0x74] sm:$0xf]
        %v625 = vld [vmem:[%s4 + $0x78] sm:$0xf]
        %v626 = vld [vmem:[%s4 + $0x7c] sm:$0xf]
        %v627 = vld [vmem:[%s5] sm:$0x1]
        %v629 = vperm.slane %v627, 0
        %v663 = vunpack.c.l.b16 %v595
        %v664 = vunpack.c.l.b16 %v596
        %v665 = vunpack.c.l.b16 %v597
        %v666 = vunpack.c.l.b16 %v598
        %v667 = vunpack.c.l.b16 %v599
        %v668 = vunpack.c.l.b16 %v600
        %v669 = vunpack.c.l.b16 %v601
        %v670 = vunpack.c.l.b16 %v602
        %v671 = vunpack.c.l.b16 %v603
        %v672 = vunpack.c.l.b16 %v604
        %v673 = vunpack.c.l.b16 %v605
        %v674 = vunpack.c.l.b16 %v606
        %v675 = vunpack.c.l.b16 %v607
        %v676 = vunpack.c.l.b16 %v608
        %v677 = vunpack.c.l.b16 %v609
        %v678 = vunpack.c.l.b16 %v610
        %v679 = vunpack.c.l.b16 %v611
        %v680 = vunpack.c.l.b16 %v612
        %v681 = vunpack.c.l.b16 %v613
        %v682 = vunpack.c.l.b16 %v614
        %v683 = vunpack.c.l.b16 %v615
        %v684 = vunpack.c.l.b16 %v616
        %v685 = vunpack.c.l.b16 %v617
        %v686 = vunpack.c.l.b16 %v618
        %v687 = vunpack.c.l.b16 %v619
        %v688 = vunpack.c.l.b16 %v620
        %v689 = vunpack.c.l.b16 %v621
        %v690 = vunpack.c.l.b16 %v622
        %v691 = vunpack.c.l.b16 %v623
        %v692 = vunpack.c.l.b16 %v624
        %v693 = vunpack.c.l.b16 %v625
        %v694 = vunpack.c.l.b16 %v626
        %v695 = vpack.c.b16 %v664, %v663
        %v696 = vpack.c.b16 %v666, %v665
        %v697 = vpack.c.b16 %v668, %v667
        %v698 = vpack.c.b16 %v670, %v669
        %v699 = vpack.c.b16 %v672, %v671
        %v700 = vpack.c.b16 %v674, %v673
        %v701 = vpack.c.b16 %v676, %v675
        %v702 = vpack.c.b16 %v678, %v677
        %v703 = vpack.c.b16 %v680, %v679
        %v704 = vpack.c.b16 %v682, %v681
        %v705 = vpack.c.b16 %v684, %v683
        %v706 = vpack.c.b16 %v686, %v685
        %v707 = vpack.c.b16 %v688, %v687
        %v708 = vpack.c.b16 %v690, %v689
        %v709 = vpack.c.b16 %v692, %v691
        %v710 = vpack.c.b16 %v694, %v693
        %727 = vmatpush.bf16.msra.mxu0 %v702
        %728 = vmatpush.bf16.msra.mxu0 %v701
        %729 = vmatpush.bf16.msra.mxu0 %v700
        %730 = vmatpush.bf16.msra.mxu0 %v699
        %731 = vmatpush.bf16.msra.mxu0 %v698
        %732 = vmatpush.bf16.msra.mxu0 %v697
        %733 = vmatpush.bf16.msra.mxu0 %v696
        %734 = vmatpush.bf16.msra.mxu0 %v695
        %735 = vmatmul.bf16.gmra.mxu0 %v579
        %v736 = vpop.f32.mrf.mxu0
        %v737 = vadd.f32 %v629, %v736
        %v738 = vpop.f32.mrf.mxu0
        %v739 = vadd.f32 %v629, %v738
        %740 = vmatmul.bf16.gmra.mxu0 %v581
        %v741 = vpop.f32.mrf.mxu0
        %v742 = vadd.f32 %v629, %v741
        %v743 = vpop.f32.mrf.mxu0
        %v744 = vadd.f32 %v629, %v743
        %745 = vmatmul.bf16.gmra.mxu0 %v583
        %v746 = vpop.f32.mrf.mxu0
        %v747 = vadd.f32 %v629, %v746
        %v748 = vpop.f32.mrf.mxu0
        %v749 = vadd.f32 %v629, %v748
        %750 = vmatmul.bf16.gmra.mxu0 %v585
        %v751 = vpop.f32.mrf.mxu0
        %v752 = vadd.f32 %v629, %v751
        %v753 = vpop.f32.mrf.mxu0
        %v754 = vadd.f32 %v629, %v753
        %755 = vmatmul.bf16.gmra.mxu0 %v587
        %v756 = vpop.f32.mrf.mxu0
        %v757 = vadd.f32 %v629, %v756
        %v758 = vpop.f32.mrf.mxu0
        %v759 = vadd.f32 %v629, %v758
        %760 = vmatmul.bf16.gmra.mxu0 %v589
        %v761 = vpop.f32.mrf.mxu0
        %v762 = vadd.f32 %v629, %v761
        %v763 = vpop.f32.mrf.mxu0
        %v764 = vadd.f32 %v629, %v763
        %765 = vmatmul.bf16.gmra.mxu0 %v591
        %v766 = vpop.f32.mrf.mxu0
        %v767 = vadd.f32 %v629, %v766
        %v768 = vpop.f32.mrf.mxu0
        %v769 = vadd.f32 %v629, %v768
        %770 = vmatmul.bf16.gmra.mxu0 %v593
        %v771 = vpop.f32.mrf.mxu0
        %v772 = vadd.f32 %v629, %v771
        %v773 = vpop.f32.mrf.mxu0
        %v774 = vadd.f32 %v629, %v773
        %775 = vdwg.mxu0
        %776 = vmatpush.bf16.msra.mxu0 %v710
        %777 = vmatpush.bf16.msra.mxu0 %v709
        %778 = vmatpush.bf16.msra.mxu0 %v708
        %779 = vmatpush.bf16.msra.mxu0 %v707
        %780 = vmatpush.bf16.msra.mxu0 %v706
        %781 = vmatpush.bf16.msra.mxu0 %v705
        %782 = vmatpush.bf16.msra.mxu0 %v704
        %783 = vmatpush.bf16.msra.mxu0 %v703
        %784 = vmatmul.bf16.gmra.mxu0 %v580
        %v785 = vpop.f32.mrf.mxu0
        %v786 = vadd.f32 %v737, %v785
        %v787 = vpop.f32.mrf.mxu0
        %v788 = vadd.f32 %v739, %v787
        %789 = vmatmul.bf16.gmra.mxu0 %v582
        %v790 = vpop.f32.mrf.mxu0
        %v791 = vadd.f32 %v742, %v790
        %v792 = vpop.f32.mrf.mxu0
        %v793 = vadd.f32 %v744, %v792
        %794 = vmatmul.bf16.gmra.mxu0 %v584
        %v795 = vpop.f32.mrf.mxu0
        %v796 = vadd.f32 %v747, %v795
        %v797 = vpop.f32.mrf.mxu0
        %v798 = vadd.f32 %v749, %v797
        %799 = vmatmul.bf16.gmra.mxu0 %v586
        %v800 = vpop.f32.mrf.mxu0
        %v801 = vadd.f32 %v752, %v800
        %v802 = vpop.f32.mrf.mxu0
        %v803 = vadd.f32 %v754, %v802
        %804 = vmatmul.bf16.gmra.mxu0 %v588
        %v805 = vpop.f32.mrf.mxu0
        %v806 = vadd.f32 %v757, %v805
        %v807 = vpop.f32.mrf.mxu0
        %v808 = vadd.f32 %v759, %v807
        %809 = vmatmul.bf16.gmra.mxu0 %v590
        %v810 = vpop.f32.mrf.mxu0
        %v811 = vadd.f32 %v762, %v810
        %v812 = vpop.f32.mrf.mxu0
        %v813 = vadd.f32 %v764, %v812
        %814 = vmatmul.bf16.gmra.mxu0 %v592
        %v815 = vpop.f32.mrf.mxu0
        %v816 = vadd.f32 %v767, %v815
        %v817 = vpop.f32.mrf.mxu0
        %v818 = vadd.f32 %v769, %v817
        %819 = vmatmul.bf16.gmra.mxu0 %v594
        %v820 = vpop.f32.mrf.mxu0
        %v821 = vadd.f32 %v772, %v820
        %v822 = vpop.f32.mrf.mxu0
        %v823 = vadd.f32 %v774, %v822
        %824 = vdwg.mxu0
        %825 = vst [vmem:[%s245] sm:$0xff] %v786
        %826 = vst [vmem:[%s245 + $0x8] sm:$0xff] %v788
        %827 = vst [vmem:[%s245 + $0x10] sm:$0xff] %v791
        %828 = vst [vmem:[%s245 + $0x18] sm:$0xff] %v793
        %829 = vst [vmem:[%s245 + $0x20] sm:$0xff] %v796
        %830 = vst [vmem:[%s245 + $0x28] sm:$0xff] %v798
        %831 = vst [vmem:[%s245 + $0x30] sm:$0xff] %v801
        %832 = vst [vmem:[%s245 + $0x38] sm:$0xff] %v803
        %833 = vst [vmem:[%s245 + $0x40] sm:$0xff] %v806
        %834 = vst [vmem:[%s245 + $0x48] sm:$0xff] %v808
        %835 = vst [vmem:[%s245 + $0x50] sm:$0xff] %v811
        %836 = vst [vmem:[%s245 + $0x58] sm:$0xff] %v813
        %837 = vst [vmem:[%s245 + $0x60] sm:$0xff] %v816
        %838 = vst [vmem:[%s245 + $0x68] sm:$0xff] %v818
        %839 = vst [vmem:[%s245 + $0x70] sm:$0xff] %v821
        %840 = vst [vmem:[%s245 + $0x78] sm:$0xff] %v823
        %s841 = sand.u32 %s159, 1
        %s842 = scalar_lea.sflag [#allocation3], %s841
        %s843 = sand.u32 %s159, 1
        %s844 = smul.addr %s843, 128
        %s845 = scalar_lea.vmem [#allocation2], %s844
        // Predicated region
        $region45: #{prediction_mlp.3} parent=43 // pred_check
          %p846 = pneg %p169
        $region46: #{prediction_mlp.3} parent=43 // pred_check_branch
          %848 = sbr.rel (%p846) target = $region48
        $region47: #{prediction_mlp.3} parent=43 // pred_region
          %s849 = smul.u32 16, %s20
          %851 = vsyncadd %s842, 0
          %s852 = smul.addr %s849, 8
          %s853 = scalar_lea.hbm %s6, %s852
          %s854 = sshll.u32 %s845, 4
          %s855 = int_to_ptr.vmem [resolvable:$true] %s854
          %s856 = sshll.u32 %s853, 4
          %s857 = int_to_ptr.hbm [resolvable:$true] %s856
          %862 = dma.vmem_to_hbm [thread:$0]  %s855, 2048, %s857, %s842, 128, 128, 8
        $region48: #{prediction_mlp.3} parent=43 // pred_fallthru
          _
      $region44: #{prediction_mlp.3} parent=5 // pred_fallthru
        _
      %p863 = scmp.le.s32.totalorder 2, %s15
      // Predicated region
      $region49: #{prediction_mlp.3} parent=5 // pred_check
        %p864 = pneg %p863
      $region50: #{prediction_mlp.3} parent=5 // pred_check_branch
        %866 = sbr.rel (%p864) target = $region52
      $region51: #{prediction_mlp.3} parent=5 // pred_region
        %s867 = ssub.s32 %s15, 2
        // Predicated region
        $region53: #{prediction_mlp.3} parent=51 // pred_check
          %p868 = pneg %p175
        $region54: #{prediction_mlp.3} parent=51 // pred_check_branch
          %870 = sbr.rel (%p868) target = $region56
        $region55: #{prediction_mlp.3} parent=51 // pred_region
          %s871 = sand.u32 %s160, 1
          %s872 = scalar_lea.sflag [#allocation3], %s871
          %s873 = sand.u32 %s160, 1
          %s874 = smul.addr %s873, 128
          %s875 = scalar_lea.vmem [#allocation2], %s874
          %877 = dma.done %s872, 2048
        $region56: #{prediction_mlp.3} parent=51 // pred_fallthru
          _
      $region52: #{prediction_mlp.3} parent=5 // pred_fallthru
        _
    $region6: #{prediction_mlp.3} parent=1 // loop_footer
      %s19 = sadd.s32 1, %s15
    $region7: #{prediction_mlp.3} parent=1 // loop_footer_branch
      %14 = sbr.rel target = $region3
    $region8: #{prediction_mlp.3} parent=1 // loop_exit
      _
    %878 = vsyncpa [#allocation3], 1
    %s879 = scalar_lea.sflag [#allocation3], 1
    %880 = vsyncpa %s879, 1

</llo_original>
